<compile_context>
chip_gen: v6e
topology: v6e:2x2x1
jax: 0.10.0
libtpu: 0.0.40
codegen_flags: <defaults>
</compile_context>

<pallas_src>
import functools

import jax
import jax.numpy as jnp
from jax import lax
from jax.experimental import pallas as pl
from jax.experimental.pallas import tpu as pltpu


# ----------------------------------------------------------------------------
# Per-generation config: dtypes, row tile, VMEM budget.
# ----------------------------------------------------------------------------
def _round_up(x, m):
    return ((x + m - 1) // m) * m


def _compute_config():
    io_dtype = jnp.float32        # dtype of intermediate activations in HBM
    mxu_dtype = jnp.bfloat16      # bf16 MXU inputs on EVERY generation (f32 accumulate)
    tm = 128                      # projection-kernel row tile
    vmem_limit = None
    try:
        kind = jax.devices()[0].device_kind.lower()
    except Exception:
        kind = ""
    if "v7" in kind:
        io_dtype, tm, vmem_limit = jnp.bfloat16, 512, 44 * 1024 * 1024   # 64 MiB physical
    elif "v6" in kind:
        io_dtype, tm, vmem_limit = jnp.bfloat16, 512, 96 * 1024 * 1024
    elif "v5" in kind:
        io_dtype, tm, vmem_limit = jnp.float32, 256, 64 * 1024 * 1024
    return io_dtype, mxu_dtype, tm, vmem_limit


def _compiler_params(dim_sems, vmem_limit):
    if vmem_limit is None:
        return pltpu.CompilerParams(dimension_semantics=dim_sems)
    return pltpu.CompilerParams(dimension_semantics=dim_sems,
                                vmem_limit_bytes=vmem_limit)


def _resident_spec(shape, index_map, single_buffer):
    """BlockSpec for a constant-index (weight-like) input: single-buffered."""
    if single_buffer:
        return pl.BlockSpec(shape, index_map, pipeline_mode=pl.Buffered(1))
    return pl.BlockSpec(shape, index_map)


def _gelu(x):
    # TODO(synk): PyTorch nn.GELU defaults to the erf form; tanh approx used here.
    return jax.nn.gelu(x, approximate=True)


# ----------------------------------------------------------------------------
# Kernel 1: fused linear  y = x @ w + b   (QKV projection / adapter KV projection)
# ----------------------------------------------------------------------------
def _linear_kernel(x_ref, w_ref, b_ref, o_ref, *, compute_dtype):
    x = x_ref[...].astype(compute_dtype)
    y = jnp.dot(x, w_ref[...], preferred_element_type=jnp.float32) + b_ref[...]
    o_ref[...] = y.astype(o_ref.dtype)


def pallas_linear(x, w_t, b2, *, out_dtype, compute_dtype, tm, vmem_limit,
                  single_buffer):
    """y = x @ w_t + b2.  x: (M, K); w_t: (K, N) bf16; b2: (1, N) f32.
    No jnp.pad copy: grid = cdiv(M, tm), Pallas masks the last row block."""
    M, K = x.shape
    N = w_t.shape[1]
    tm = min(tm, _round_up(M, 8))
    kern = functools.partial(_linear_kernel, compute_dtype=compute_dtype)
    return pl.pallas_call(
        kern,
        out_shape=jax.ShapeDtypeStruct((M, N), out_dtype),
        grid=(pl.cdiv(M, tm),),
        in_specs=[
            pl.BlockSpec((tm, K), lambda i: (i, 0)),
            _resident_spec((K, N), lambda i: (0, 0), single_buffer),
            _resident_spec((1, N), lambda i: (0, 0), single_buffer),
        ],
        out_specs=pl.BlockSpec((tm, N), lambda i: (i, 0)),
        compiler_params=_compiler_params(("parallel",), vmem_limit),
    )(x, w_t, b2)


# ----------------------------------------------------------------------------
# Kernel 2: per-batch fused  main attention + adapter attention + zipper +
#           residual + out_proj.
# ----------------------------------------------------------------------------
def _fused_attn_kernel(*refs, num_heads, head_dim, compute_dtype, has_bias):
    it = iter(refs)
    qkv_ref = next(it)
    kva_ref = next(it)
    bias_ref = next(it) if has_bias else None
    (wtia_ref, wtib_ref, btin_ref, wszi_ref, bszi_ref,
     wtoo_ref, btout_ref, wszo_ref, bszo_ref, wo_ref, bo_ref) = [next(it) for _ in range(11)]
    o_ref = next(it)
    main_sc = next(it)

    D = num_heads * head_dim
    cd = compute_dtype
    qkv = qkv_ref[0].astype(cd)       # (T, 3D) = [q*scale | k | v]
    kva = kva_ref[0].astype(cd)       # (S, 2D) = [k_adapter | v_adapter]
    if has_bias:
        bias = bias_ref[0]            # (T, T) f32 additive mask

    q = qkv[:, :D]
    k = qkv[:, D:2 * D]
    v = qkv[:, 2 * D:3 * D]
    ka = kva[:, :D]
    va = kva[:, D:2 * D]

    def softmax_rows(s):
        m = jnp.max(s, axis=-1, keepdims=True)
        p = jnp.exp(s - m)
        return p * pl.reciprocal(jnp.sum(p, axis=-1, keepdims=True), approx=True)

    main_heads = []
    adp_heads = []
    for h in range(num_heads):                     # static head loop
        lo = h * head_dim
        hi = lo + head_dim
        qh = q[:, lo:hi]
        # main attention head (q @ k^T with contraction on head_dim -> MXU)
        s = lax.dot_general(qh, k[:, lo:hi], (((1,), (1,)), ((), ())),
                            preferred_element_type=jnp.float32)
        if has_bias:
            s = s + bias
        p = softmax_rows(s)
        main_heads.append(jnp.dot(p.astype(cd), v[:, lo:hi],
                                  preferred_element_type=jnp.float32))
        # adapter attention head (no bias — matches the reference)
        sa = lax.dot_general(qh, ka[:, lo:hi], (((1,), (1,)), ((), ())),
                             preferred_element_type=jnp.float32)
        pa = softmax_rows(sa)
        adp_heads.append(jnp.dot(pa.astype(cd), va[:, lo:hi],
                                 preferred_element_type=jnp.float32))
    # TODO(synk): dropout on attention probabilities omitted (inference / p == 0).

    # One lane-dense (T, D) store per branch: no per-head masked vst.
    attn_main = jnp.concatenate(main_heads, axis=-1)          # (T, D) f32
    main_sc[...] = attn_main                                   # spill to VMEM scratch
    z_main = attn_main.astype(cd)
    z_adp = jnp.concatenate(adp_heads, axis=-1).astype(cd)     # (T, D)

    # ZipperModule (mixer-style): token mixes contract over the token (sublane)
    # axis so D stays on the lanes; the 2T-token concat input is folded in by
    # splitting the first token-mix weight into an adapter half and a main half.
    # TODO(synk): exact ZipperModule internals not given; mixer structure assumed.
    t = (jnp.dot(wtia_ref[...], z_adp, preferred_element_type=jnp.float32)
         + jnp.dot(wtib_ref[...], z_main, preferred_element_type=jnp.float32)
         + btin_ref[...])
    t = _gelu(t)
    t = jnp.dot(t.astype(cd), wszi_ref[...],
                preferred_element_type=jnp.float32) + bszi_ref[...]
    t = _gelu(t)
    t = jnp.dot(wtoo_ref[...], t.astype(cd),
                preferred_element_type=jnp.float32) + btout_ref[...]
    t = _gelu(t)
    t = jnp.dot(t.astype(cd), wszo_ref[...],
                preferred_element_type=jnp.float32) + bszo_ref[...]

    # fused residual (re-read main from scratch) + fused out_proj epilogue
    pre = main_sc[...] + t
    y = jnp.dot(pre.astype(cd), wo_ref[...],
                preferred_element_type=jnp.float32) + bo_ref[...]
    o_ref[0] = y.astype(o_ref.dtype)


def fused_attention_zipper_outproj(qkv, kva, bias, zp, num_heads, head_dim,
                                   compute_dtype, out_dtype, vmem_limit,
                                   single_buffer):
    B, T, threeD = qkv.shape
    D = num_heads * head_dim
    S = kva.shape[1]
    has_bias = bias is not None
    kern = functools.partial(_fused_attn_kernel, num_heads=num_heads,
                             head_dim=head_dim, compute_dtype=compute_dtype,
                             has_bias=has_bias)

    in_specs = [pl.BlockSpec((1, T, threeD), lambda b: (b, 0, 0)),
                pl.BlockSpec((1, S, 2 * D), lambda b: (b, 0, 0))]
    inputs = [qkv, kva]
    if has_bias:
        in_specs.append(pl.BlockSpec((1, T, T), lambda b: (b, 0, 0)))
        inputs.append(bias)
    for name in ("wtia", "wtib", "btin", "wszi", "bszi",
                 "wtoo", "btout", "wszo", "bszo", "wo", "bo"):
        in_specs.append(_resident_spec(zp[name].shape, lambda b: (0, 0),
                                       single_buffer))
        inputs.append(zp[name])

    return pl.pallas_call(
        kern,
        out_shape=jax.ShapeDtypeStruct((B, T, D), out_dtype),
        grid=(B,),
        in_specs=in_specs,
        out_specs=pl.BlockSpec((1, T, D), lambda b: (b, 0, 0)),
        scratch_shapes=[pltpu.VMEM((T, D), jnp.float32)],
        compiler_params=_compiler_params(("parallel",), vmem_limit),
    )(*inputs)


# ----------------------------------------------------------------------------
# One-time weight packing (hoisted off the per-forward critical path).
# ----------------------------------------------------------------------------
def prepare_params(params, seq_len, num_heads):
    _, mxu_dtype, _, _ = _compute_config()
    D = params["q_w"].shape[0]
    head_dim = D // num_heads
    scale = head_dim ** -0.5
    T = seq_len
    f32 = jnp.float32
    return {
        # fused QKV projection; q scale folded into weight + bias (exact)
        "w_qkv": jnp.concatenate([(params["q_w"] * scale).T, params["k_w"].T,
                                  params["v_w"].T], axis=1).astype(mxu_dtype),
        "b_qkv": jnp.concatenate([params["q_b"] * scale, params["k_b"],
                                  params["v_b"]]).reshape(1, 3 * D).astype(f32),
        # fused adapter K/V projection
        "w_kva": jnp.concatenate([params["ka_w"].T, params["va_w"].T],
                                 axis=1).astype(mxu_dtype),
        "b_kva": jnp.concatenate([params["ka_b"],
                                  params["va_b"]]).reshape(1, 2 * D).astype(f32),
        # zipper + out_proj, laid out for token-axis contraction (D on lanes)
        "zp": {
            "wtia": params["z_tok_in_w"][:, :T].astype(mxu_dtype),   # adapter half
            "wtib": params["z_tok_in_w"][:, T:].astype(mxu_dtype),   # main half
            "btin": params["z_tok_in_b"].reshape(T, 1).astype(f32),
            "wszi": params["z_sz_in_w"].T.astype(mxu_dtype),
            "bszi": params["z_sz_in_b"].reshape(1, D).astype(f32),
            "wtoo": params["z_tok_out_w"].astype(mxu_dtype),
            "btout": params["z_tok_out_b"].reshape(T, 1).astype(f32),
            "wszo": params["z_sz_out_w"].T.astype(mxu_dtype),
            "bszo": params["z_sz_out_b"].reshape(1, D).astype(f32),
            "wo": params["o_w"].T.astype(mxu_dtype),
            "bo": params["o_b"].reshape(1, D).astype(f32),
        },
    }


# ----------------------------------------------------------------------------
# Top-level forward.
# ----------------------------------------------------------------------------
def te_aug_adapter_clip_attention(packed, hidden_states, embeds,
                                  attention_mask=None, causal_attention_mask=None,
                                  *, num_heads, single_buffer=True):
    B, T, D = hidden_states.shape
    Hd = D // num_heads
    io_dtype, mxu_dtype, tm, vmem_limit = _compute_config()

    qkv = pallas_linear(hidden_states.reshape(B * T, D), packed["w_qkv"],
                        packed["b_qkv"], out_dtype=io_dtype,
                        compute_dtype=mxu_dtype, tm=tm, vmem_limit=vmem_limit,
                        single_buffer=single_buffer).reshape(B, T, 3 * D)

    S_a = embeds.shape[1]
    kva = pallas_linear(embeds.reshape(B * S_a, D), packed["w_kva"],
                        packed["b_kva"], out_dtype=io_dtype,
                        compute_dtype=mxu_dtype, tm=tm, vmem_limit=vmem_limit,
                        single_buffer=single_buffer).reshape(B, S_a, 2 * D)

    # additive attention bias: (B,T,T) per batch (no per-head replication);
    # dropped entirely (static) when no mask is given.
    if attention_mask is None and causal_attention_mask is None:
        bias = None
    else:
        bias = jnp.zeros((B, 1, T, T), jnp.float32)
        if causal_attention_mask is not None:
            bias = bias + causal_attention_mask.astype(jnp.float32)
        if attention_mask is not None:
            bias = bias + attention_mask.astype(jnp.float32)
        bias = bias.reshape(B, T, T)

    # fused: main attn + adapter attn + zipper + residual + out_proj
    out = fused_attention_zipper_outproj(
        qkv, kva, bias, packed["zp"], num_heads, Hd, mxu_dtype,
        out_dtype=hidden_states.dtype, vmem_limit=vmem_limit,
        single_buffer=single_buffer)
    return out   # attn_weights_reshaped is None (output_attentions=False)


# ----------------------------------------------------------------------------
# Deterministic synthetic parameters (shapes per module __init__).
# ----------------------------------------------------------------------------
def init_params(key, D, T):
    ks = jax.random.split(key, 16)
    n = lambda k, shape, s=0.05: (jax.random.normal(k, shape, jnp.float32) * s)
    p = {
        "q_w": n(ks[0], (D, D)), "q_b": n(ks[1], (D,)),
        "k_w": n(ks[2], (D, D)), "k_b": n(ks[3], (D,)),
        "v_w": n(ks[4], (D, D)), "v_b": n(ks[5], (D,)),
        "o_w": n(ks[6], (D, D)), "o_b": n(ks[7], (D,)),
        # zipper: in_tokens=2T, hidden_tokens=T, out_tokens=T, all sizes = D
        "z_tok_in_w": n(ks[8], (T, 2 * T)), "z_tok_in_b": n(ks[9], (T,)),
        "z_sz_in_w": n(ks[10], (D, D)),     "z_sz_in_b": n(ks[11], (D,)),
        "z_tok_out_w": n(ks[12], (T, T)),   "z_tok_out_b": n(ks[13], (T,)),
        "z_sz_out_w": n(ks[14], (D, D)),    "z_sz_out_b": n(ks[15], (D,)),
    }
    # adapter projections initialized from k/v proj scaled, as in __init__
    p["ka_w"] = p["k_w"] * 0.01
    p["ka_b"] = p["k_b"] * 0.001
    p["va_w"] = p["v_w"] * 0.01
    p["va_b"] = p["v_b"] * 0.001
    return p


if __name__ == "__main__":
    key = jax.random.PRNGKey(0)
    B, T, D, H = 2, 8, 32, 4   # small stand-ins for CLIP's (B, 77, 768, 12)
    S_a = 8                    # adapter conditional-embed token count

    kp, kh_, ke = jax.random.split(key, 3)
    raw_params = init_params(kp, D, T)
    hidden_states = jax.random.normal(kh_, (B, T, D), jnp.float32)
    cond_embeds = jax.random.normal(ke, (B, S_a, D), jnp.float32)

    # CLIP-style causal mask (B, 1, T, T)
    neg = jnp.finfo(jnp.float32).min
    causal = jnp.triu(jnp.full((T, T), neg, jnp.float32), k=1)[None, None]
    causal = jnp.broadcast_to(causal, (B, 1, T, T))

    # one-time weight packing (hoisted out of the per-call forward)
    packed = prepare_params(raw_params, seq_len=T, num_heads=H)

    def run(single_buffer):
        fwd = jax.jit(functools.partial(te_aug_adapter_clip_attention,
                                        num_heads=H, single_buffer=single_buffer))
        out = fwd(packed, hidden_states, cond_embeds,
                  attention_mask=None, causal_attention_mask=causal)
        jax.block_until_ready(out)
        return out

    try:
        out = run(True)
    except Exception:
        # Fallback if this jax build rejects pipeline_mode=pl.Buffered(1).
        out = run(False)

    assert out.shape == (B, T, D)
    print("KERNEL_OK")
</pallas_src>

<mosaic_0001>
module attributes {stable_mosaic.version = 11 : i64} {
  func.func @_linear_kernel(%arg0: i32, %arg1: memref<16x32xf32, #tpu.memory_space<vmem>>, %arg2: memref<32x64xbf16, #tpu.memory_space<vmem>>, %arg3: memref<1x64xf32, #tpu.memory_space<vmem>>, %arg4: memref<16x64xf32, #tpu.memory_space<vmem>>) attributes {dimension_semantics = [#tpu.dimension_semantics<parallel>], iteration_bounds = array<i64: 1>, scalar_prefetch = 0 : i64, scratch_operands = 0 : i64, tpu.core_type = #tpu.core_type<tc>, window_params = [{transform_indices = @transform_0, window_bounds = array<i64: 16, 32>}, {pipeline_mode = #tpu.pipeline_mode<synchronous>, transform_indices = @transform_1, window_bounds = array<i64: 32, 64>}, {pipeline_mode = #tpu.pipeline_mode<synchronous>, transform_indices = @transform_2, window_bounds = array<i64: 1, 64>}, {transform_indices = @transform_3, window_bounds = array<i64: 16, 64>}]} {
    %c0 = arith.constant 0 : index
    %c0_0 = arith.constant 0 : index
    %0 = vector.load %arg1[%c0, %c0_0] : memref<16x32xf32, #tpu.memory_space<vmem>>, vector<16x32xf32>
    %1 = arith.truncf %0 : vector<16x32xf32> to vector<16x32xbf16>
    %c0_1 = arith.constant 0 : index
    %c0_2 = arith.constant 0 : index
    %2 = vector.load %arg2[%c0_1, %c0_2] : memref<32x64xbf16, #tpu.memory_space<vmem>>, vector<32x64xbf16>
    %cst = arith.constant dense<0.000000e+00> : vector<16x64xf32>
    %3 = tpu.matmul %1, %2, %cst {dimension_numbers = #tpu.dot_dimension_numbers<[1], [0], [0], [1], [0, 0, 1, 1], [], []>} : vector<16x32xbf16>, vector<32x64xbf16>, vector<16x64xf32> -> vector<16x64xf32>
    %c0_3 = arith.constant 0 : index
    %c0_4 = arith.constant 0 : index
    %4 = vector.load %arg3[%c0_3, %c0_4] : memref<1x64xf32, #tpu.memory_space<vmem>>, vector<1x64xf32>
    %5 = vector.broadcast %4 : vector<1x64xf32> to vector<16x64xf32>
    %6 = arith.addf %3, %5 : vector<16x64xf32>
    %c0_5 = arith.constant 0 : index
    %c0_6 = arith.constant 0 : index
    %7 = vector.load %arg4[%c0_5, %c0_6] : memref<16x64xf32, #tpu.memory_space<vmem>>, vector<16x64xf32>
    tpu.vector_store %arg4[%c0_5, %c0_6], %6 {strides = array<i32>} : memref<16x64xf32, #tpu.memory_space<vmem>>, vector<16x64xf32>,
    return
  }
  func.func @transform_0(%arg0: i32) -> (i32, i32) {
    %c0_i32 = arith.constant 0 : i32
    %c0_i32_0 = arith.constant 0 : i32
    return %arg0, %c0_i32 : i32, i32
  }
  func.func @transform_1(%arg0: i32) -> (i32, i32) {
    %c0_i32 = arith.constant 0 : i32
    %c0_i32_0 = arith.constant 0 : i32
    %c0_i32_1 = arith.constant 0 : i32
    return %c0_i32, %c0_i32_0 : i32, i32
  }
  func.func @transform_2(%arg0: i32) -> (i32, i32) {
    %c0_i32 = arith.constant 0 : i32
    %c0_i32_0 = arith.constant 0 : i32
    %c0_i32_1 = arith.constant 0 : i32
    return %c0_i32, %c0_i32_0 : i32, i32
  }
  func.func @transform_3(%arg0: i32) -> (i32, i32) {
    %c0_i32 = arith.constant 0 : i32
    %c0_i32_0 = arith.constant 0 : i32
    return %arg0, %c0_i32 : i32, i32
  }
}

module attributes {stable_mosaic.version = 11 : i64} {
  func.func @_linear_kernel(%arg0: i32, %arg1: memref<16x32xf32, #tpu.memory_space<vmem>>, %arg2: memref<32x96xbf16, #tpu.memory_space<vmem>>, %arg3: memref<1x96xf32, #tpu.memory_space<vmem>>, %arg4: memref<16x96xf32, #tpu.memory_space<vmem>>) attributes {dimension_semantics = [#tpu.dimension_semantics<parallel>], iteration_bounds = array<i64: 1>, scalar_prefetch = 0 : i64, scratch_operands = 0 : i64, tpu.core_type = #tpu.core_type<tc>, window_params = [{transform_indices = @transform_0, window_bounds = array<i64: 16, 32>}, {pipeline_mode = #tpu.pipeline_mode<synchronous>, transform_indices = @transform_1, window_bounds = array<i64: 32, 96>}, {pipeline_mode = #tpu.pipeline_mode<synchronous>, transform_indices = @transform_2, window_bounds = array<i64: 1, 96>}, {transform_indices = @transform_3, window_bounds = array<i64: 16, 96>}]} {
    %c0 = arith.constant 0 : index
    %c0_0 = arith.constant 0 : index
    %0 = vector.load %arg1[%c0, %c0_0] : memref<16x32xf32, #tpu.memory_space<vmem>>, vector<16x32xf32>
    %1 = arith.truncf %0 : vector<16x32xf32> to vector<16x32xbf16>
    %c0_1 = arith.constant 0 : index
    %c0_2 = arith.constant 0 : index
    %2 = vector.load %arg2[%c0_1, %c0_2] : memref<32x96xbf16, #tpu.memory_space<vmem>>, vector<32x96xbf16>
    %cst = arith.constant dense<0.000000e+00> : vector<16x96xf32>
    %3 = tpu.matmul %1, %2, %cst {dimension_numbers = #tpu.dot_dimension_numbers<[1], [0], [0], [1], [0, 0, 1, 1], [], []>} : vector<16x32xbf16>, vector<32x96xbf16>, vector<16x96xf32> -> vector<16x96xf32>
    %c0_3 = arith.constant 0 : index
    %c0_4 = arith.constant 0 : index
    %4 = vector.load %arg3[%c0_3, %c0_4] : memref<1x96xf32, #tpu.memory_space<vmem>>, vector<1x96xf32>
    %5 = vector.broadcast %4 : vector<1x96xf32> to vector<16x96xf32>
    %6 = arith.addf %3, %5 : vector<16x96xf32>
    %c0_5 = arith.constant 0 : index
    %c0_6 = arith.constant 0 : index
    %7 = vector.load %arg4[%c0_5, %c0_6] : memref<16x96xf32, #tpu.memory_space<vmem>>, vector<16x96xf32>
    tpu.vector_store %arg4[%c0_5, %c0_6], %6 {strides = array<i32>} : memref<16x96xf32, #tpu.memory_space<vmem>>, vector<16x96xf32>,
    return
  }
  func.func @transform_0(%arg0: i32) -> (i32, i32) {
    %c0_i32 = arith.constant 0 : i32
    %c0_i32_0 = arith.constant 0 : i32
    return %arg0, %c0_i32 : i32, i32
  }
  func.func @transform_1(%arg0: i32) -> (i32, i32) {
    %c0_i32 = arith.constant 0 : i32
    %c0_i32_0 = arith.constant 0 : i32
    %c0_i32_1 = arith.constant 0 : i32
    return %c0_i32, %c0_i32_0 : i32, i32
  }
  func.func @transform_2(%arg0: i32) -> (i32, i32) {
    %c0_i32 = arith.constant 0 : i32
    %c0_i32_0 = arith.constant 0 : i32
    %c0_i32_1 = arith.constant 0 : i32
    return %c0_i32, %c0_i32_0 : i32, i32
  }
  func.func @transform_3(%arg0: i32) -> (i32, i32) {
    %c0_i32 = arith.constant 0 : i32
    %c0_i32_0 = arith.constant 0 : i32
    return %arg0, %c0_i32 : i32, i32
  }
}

module attributes {stable_mosaic.version = 11 : i64} {
  func.func @_fused_attn_kernel(%arg0: i32, %arg1: memref<1x8x96xf32, #tpu.memory_space<vmem>>, %arg2: memref<1x8x64xf32, #tpu.memory_space<vmem>>, %arg3: memref<1x8x8xf32, #tpu.memory_space<vmem>>, %arg4: memref<8x8xbf16, #tpu.memory_space<vmem>>, %arg5: memref<8x8xbf16, #tpu.memory_space<vmem>>, %arg6: memref<8x1xf32, #tpu.memory_space<vmem>>, %arg7: memref<32x32xbf16, #tpu.memory_space<vmem>>, %arg8: memref<1x32xf32, #tpu.memory_space<vmem>>, %arg9: memref<8x8xbf16, #tpu.memory_space<vmem>>, %arg10: memref<8x1xf32, #tpu.memory_space<vmem>>, %arg11: memref<32x32xbf16, #tpu.memory_space<vmem>>, %arg12: memref<1x32xf32, #tpu.memory_space<vmem>>, %arg13: memref<32x32xbf16, #tpu.memory_space<vmem>>, %arg14: memref<1x32xf32, #tpu.memory_space<vmem>>, %arg15: memref<1x8x32xf32, #tpu.memory_space<vmem>>, %arg16: memref<8x32xf32, #tpu.memory_space<vmem>>) attributes {dimension_semantics = [#tpu.dimension_semantics<parallel>], iteration_bounds = array<i64: 2>, scalar_prefetch = 0 : i64, scratch_operands = 1 : i64, tpu.core_type = #tpu.core_type<tc>, window_params = [{transform_indices = @transform_0, window_bounds = array<i64: 1, 8, 96>}, {transform_indices = @transform_1, window_bounds = array<i64: 1, 8, 64>}, {transform_indices = @transform_2, window_bounds = array<i64: 1, 8, 8>}, {pipeline_mode = #tpu.pipeline_mode<synchronous>, transform_indices = @transform_3, window_bounds = array<i64: 8, 8>}, {pipeline_mode = #tpu.pipeline_mode<synchronous>, transform_indices = @transform_4, window_bounds = array<i64: 8, 8>}, {pipeline_mode = #tpu.pipeline_mode<synchronous>, transform_indices = @transform_5, window_bounds = array<i64: 8, 1>}, {pipeline_mode = #tpu.pipeline_mode<synchronous>, transform_indices = @transform_6, window_bounds = array<i64: 32, 32>}, {pipeline_mode = #tpu.pipeline_mode<synchronous>, transform_indices = @transform_7, window_bounds = array<i64: 1, 32>}, {pipeline_mode = #tpu.pipeline_mode<synchronous>, transform_indices = @transform_8, window_bounds = array<i64: 8, 8>}, {pipeline_mode = #tpu.pipeline_mode<synchronous>, transform_indices = @transform_9, window_bounds = array<i64: 8, 1>}, {pipeline_mode = #tpu.pipeline_mode<synchronous>, transform_indices = @transform_10, window_bounds = array<i64: 32, 32>}, {pipeline_mode = #tpu.pipeline_mode<synchronous>, transform_indices = @transform_11, window_bounds = array<i64: 1, 32>}, {pipeline_mode = #tpu.pipeline_mode<synchronous>, transform_indices = @transform_12, window_bounds = array<i64: 32, 32>}, {pipeline_mode = #tpu.pipeline_mode<synchronous>, transform_indices = @transform_13, window_bounds = array<i64: 1, 32>}, {transform_indices = @transform_14, window_bounds = array<i64: 1, 8, 32>}]} {
    %c0 = arith.constant 0 : index
    %c0_0 = arith.constant 0 : index
    %c0_1 = arith.constant 0 : index
    %0 = vector.load %arg1[%c0, %c0_0, %c0_1] : memref<1x8x96xf32, #tpu.memory_space<vmem>>, vector<1x8x96xf32>
    %1 = vector.shape_cast %0 : vector<1x8x96xf32> to vector<8x96xf32>
    %2 = arith.truncf %1 : vector<8x96xf32> to vector<8x96xbf16>
    %c0_2 = arith.constant 0 : index
    %c0_3 = arith.constant 0 : index
    %c0_4 = arith.constant 0 : index
    %3 = vector.load %arg2[%c0_2, %c0_3, %c0_4] : memref<1x8x64xf32, #tpu.memory_space<vmem>>, vector<1x8x64xf32>
    %4 = vector.shape_cast %3 : vector<1x8x64xf32> to vector<8x64xf32>
    %5 = arith.truncf %4 : vector<8x64xf32> to vector<8x64xbf16>
    %c0_5 = arith.constant 0 : index
    %c0_6 = arith.constant 0 : index
    %c0_7 = arith.constant 0 : index
    %6 = vector.load %arg3[%c0_5, %c0_6, %c0_7] : memref<1x8x8xf32, #tpu.memory_space<vmem>>, vector<1x8x8xf32>
    %7 = vector.shape_cast %6 : vector<1x8x8xf32> to vector<8x8xf32>
    %8 = vector.extract_strided_slice %2 {offsets = [0, 0], sizes = [8, 32], strides = [1, 1]} : vector<8x96xbf16> to vector<8x32xbf16>
    %9 = vector.extract_strided_slice %2 {offsets = [0, 32], sizes = [8, 32], strides = [1, 1]} : vector<8x96xbf16> to vector<8x32xbf16>
    %10 = vector.extract_strided_slice %2 {offsets = [0, 64], sizes = [8, 32], strides = [1, 1]} : vector<8x96xbf16> to vector<8x32xbf16>
    %11 = vector.extract_strided_slice %5 {offsets = [0, 0], sizes = [8, 32], strides = [1, 1]} : vector<8x64xbf16> to vector<8x32xbf16>
    %12 = vector.extract_strided_slice %5 {offsets = [0, 32], sizes = [8, 32], strides = [1, 1]} : vector<8x64xbf16> to vector<8x32xbf16>
    %13 = vector.extract_strided_slice %8 {offsets = [0, 0], sizes = [8, 8], strides = [1, 1]} : vector<8x32xbf16> to vector<8x8xbf16>
    %14 = vector.extract_strided_slice %9 {offsets = [0, 0], sizes = [8, 8], strides = [1, 1]} : vector<8x32xbf16> to vector<8x8xbf16>
    %cst = arith.constant dense<0.000000e+00> : vector<8x8xf32>
    %15 = tpu.matmul %13, %14, %cst {dimension_numbers = #tpu.dot_dimension_numbers<[1], [1], [0], [0], [0, 0, 1, 0], [], []>} : vector<8x8xbf16>, vector<8x8xbf16>, vector<8x8xf32> -> vector<8x8xf32>
    %16 = arith.addf %15, %7 : vector<8x8xf32>
    %cst_8 = arith.constant dense<0xFF800000> : vector<8xf32>
    %17 = vector.multi_reduction <maximumf>, %16, %cst_8 [1] : vector<8x8xf32> to vector<8xf32>
    %18 = vector.shape_cast %17 : vector<8xf32> to vector<8x1xf32>
    %19 = vector.broadcast %18 : vector<8x1xf32> to vector<8x8xf32>
    %20 = arith.subf %16, %19 : vector<8x8xf32>
    %21 = math.exp %20 : vector<8x8xf32>
    %cst_9 = arith.constant dense<0.000000e+00> : vector<8xf32>
    %22 = vector.multi_reduction <add>, %21, %cst_9 [1] : vector<8x8xf32> to vector<8xf32>
    %23 = vector.shape_cast %22 : vector<8xf32> to vector<8x1xf32>
    %24 = tpu.reciprocal %23 {approx = true} : vector<8x1xf32> -> vector<8x1xf32>
    %25 = vector.broadcast %24 : vector<8x1xf32> to vector<8x8xf32>
    %26 = arith.mulf %21, %25 : vector<8x8xf32>
    %27 = arith.truncf %26 : vector<8x8xf32> to vector<8x8xbf16>
    %28 = vector.extract_strided_slice %10 {offsets = [0, 0], sizes = [8, 8], strides = [1, 1]} : vector<8x32xbf16> to vector<8x8xbf16>
    %cst_10 = arith.constant dense<0.000000e+00> : vector<8x8xf32>
    %29 = tpu.matmul %27, %28, %cst_10 {dimension_numbers = #tpu.dot_dimension_numbers<[1], [0], [0], [1], [0, 0, 1, 1], [], []>} : vector<8x8xbf16>, vector<8x8xbf16>, vector<8x8xf32> -> vector<8x8xf32>
    %30 = vector.extract_strided_slice %11 {offsets = [0, 0], sizes = [8, 8], strides = [1, 1]} : vector<8x32xbf16> to vector<8x8xbf16>
    %cst_11 = arith.constant dense<0.000000e+00> : vector<8x8xf32>
    %31 = tpu.matmul %13, %30, %cst_11 {dimension_numbers = #tpu.dot_dimension_numbers<[1], [1], [0], [0], [0, 0, 1, 0], [], []>} : vector<8x8xbf16>, vector<8x8xbf16>, vector<8x8xf32> -> vector<8x8xf32>
    %cst_12 = arith.constant dense<0xFF800000> : vector<8xf32>
    %32 = vector.multi_reduction <maximumf>, %31, %cst_12 [1] : vector<8x8xf32> to vector<8xf32>
    %33 = vector.shape_cast %32 : vector<8xf32> to vector<8x1xf32>
    %34 = vector.broadcast %33 : vector<8x1xf32> to vector<8x8xf32>
    %35 = arith.subf %31, %34 : vector<8x8xf32>
    %36 = math.exp %35 : vector<8x8xf32>
    %cst_13 = arith.constant dense<0.000000e+00> : vector<8xf32>
    %37 = vector.multi_reduction <add>, %36, %cst_13 [1] : vector<8x8xf32> to vector<8xf32>
    %38 = vector.shape_cast %37 : vector<8xf32> to vector<8x1xf32>
    %39 = tpu.reciprocal %38 {approx = true} : vector<8x1xf32> -> vector<8x1xf32>
    %40 = vector.broadcast %39 : vector<8x1xf32> to vector<8x8xf32>
    %41 = arith.mulf %36, %40 : vector<8x8xf32>
    %42 = arith.truncf %41 : vector<8x8xf32> to vector<8x8xbf16>
    %43 = vector.extract_strided_slice %12 {offsets = [0, 0], sizes = [8, 8], strides = [1, 1]} : vector<8x32xbf16> to vector<8x8xbf16>
    %cst_14 = arith.constant dense<0.000000e+00> : vector<8x8xf32>
    %44 = tpu.matmul %42, %43, %cst_14 {dimension_numbers = #tpu.dot_dimension_numbers<[1], [0], [0], [1], [0, 0, 1, 1], [], []>} : vector<8x8xbf16>, vector<8x8xbf16>, vector<8x8xf32> -> vector<8x8xf32>
    %45 = vector.extract_strided_slice %8 {offsets = [0, 8], sizes = [8, 8], strides = [1, 1]} : vector<8x32xbf16> to vector<8x8xbf16>
    %46 = vector.extract_strided_slice %9 {offsets = [0, 8], sizes = [8, 8], strides = [1, 1]} : vector<8x32xbf16> to vector<8x8xbf16>
    %cst_15 = arith.constant dense<0.000000e+00> : vector<8x8xf32>
    %47 = tpu.matmul %45, %46, %cst_15 {dimension_numbers = #tpu.dot_dimension_numbers<[1], [1], [0], [0], [0, 0, 1, 0], [], []>} : vector<8x8xbf16>, vector<8x8xbf16>, vector<8x8xf32> -> vector<8x8xf32>
    %48 = arith.addf %47, %7 : vector<8x8xf32>
    %cst_16 = arith.constant dense<0xFF800000> : vector<8xf32>
    %49 = vector.multi_reduction <maximumf>, %48, %cst_16 [1] : vector<8x8xf32> to vector<8xf32>
    %50 = vector.shape_cast %49 : vector<8xf32> to vector<8x1xf32>
    %51 = vector.broadcast %50 : vector<8x1xf32> to vector<8x8xf32>
    %52 = arith.subf %48, %51 : vector<8x8xf32>
    %53 = math.exp %52 : vector<8x8xf32>
    %cst_17 = arith.constant dense<0.000000e+00> : vector<8xf32>
    %54 = vector.multi_reduction <add>, %53, %cst_17 [1] : vector<8x8xf32> to vector<8xf32>
    %55 = vector.shape_cast %54 : vector<8xf32> to vector<8x1xf32>
    %56 = tpu.reciprocal %55 {approx = true} : vector<8x1xf32> -> vector<8x1xf32>
    %57 = vector.broadcast %56 : vector<8x1xf32> to vector<8x8xf32>
    %58 = arith.mulf %53, %57 : vector<8x8xf32>
    %59 = arith.truncf %58 : vector<8x8xf32> to vector<8x8xbf16>
    %60 = vector.extract_strided_slice %10 {offsets = [0, 8], sizes = [8, 8], strides = [1, 1]} : vector<8x32xbf16> to vector<8x8xbf16>
    %cst_18 = arith.constant dense<0.000000e+00> : vector<8x8xf32>
    %61 = tpu.matmul %59, %60, %cst_18 {dimension_numbers = #tpu.dot_dimension_numbers<[1], [0], [0], [1], [0, 0, 1, 1], [], []>} : vector<8x8xbf16>, vector<8x8xbf16>, vector<8x8xf32> -> vector<8x8xf32>
    %62 = vector.extract_strided_slice %11 {offsets = [0, 8], sizes = [8, 8], strides = [1, 1]} : vector<8x32xbf16> to vector<8x8xbf16>
    %cst_19 = arith.constant dense<0.000000e+00> : vector<8x8xf32>
    %63 = tpu.matmul %45, %62, %cst_19 {dimension_numbers = #tpu.dot_dimension_numbers<[1], [1], [0], [0], [0, 0, 1, 0], [], []>} : vector<8x8xbf16>, vector<8x8xbf16>, vector<8x8xf32> -> vector<8x8xf32>
    %cst_20 = arith.constant dense<0xFF800000> : vector<8xf32>
    %64 = vector.multi_reduction <maximumf>, %63, %cst_20 [1] : vector<8x8xf32> to vector<8xf32>
    %65 = vector.shape_cast %64 : vector<8xf32> to vector<8x1xf32>
    %66 = vector.broadcast %65 : vector<8x1xf32> to vector<8x8xf32>
    %67 = arith.subf %63, %66 : vector<8x8xf32>
    %68 = math.exp %67 : vector<8x8xf32>
    %cst_21 = arith.constant dense<0.000000e+00> : vector<8xf32>
    %69 = vector.multi_reduction <add>, %68, %cst_21 [1] : vector<8x8xf32> to vector<8xf32>
    %70 = vector.shape_cast %69 : vector<8xf32> to vector<8x1xf32>
    %71 = tpu.reciprocal %70 {approx = true} : vector<8x1xf32> -> vector<8x1xf32>
    %72 = vector.broadcast %71 : vector<8x1xf32> to vector<8x8xf32>
    %73 = arith.mulf %68, %72 : vector<8x8xf32>
    %74 = arith.truncf %73 : vector<8x8xf32> to vector<8x8xbf16>
    %75 = vector.extract_strided_slice %12 {offsets = [0, 8], sizes = [8, 8], strides = [1, 1]} : vector<8x32xbf16> to vector<8x8xbf16>
    %cst_22 = arith.constant dense<0.000000e+00> : vector<8x8xf32>
    %76 = tpu.matmul %74, %75, %cst_22 {dimension_numbers = #tpu.dot_dimension_numbers<[1], [0], [0], [1], [0, 0, 1, 1], [], []>} : vector<8x8xbf16>, vector<8x8xbf16>, vector<8x8xf32> -> vector<8x8xf32>
    %77 = vector.extract_strided_slice %8 {offsets = [0, 16], sizes = [8, 8], strides = [1, 1]} : vector<8x32xbf16> to vector<8x8xbf16>
    %78 = vector.extract_strided_slice %9 {offsets = [0, 16], sizes = [8, 8], strides = [1, 1]} : vector<8x32xbf16> to vector<8x8xbf16>
    %cst_23 = arith.constant dense<0.000000e+00> : vector<8x8xf32>
    %79 = tpu.matmul %77, %78, %cst_23 {dimension_numbers = #tpu.dot_dimension_numbers<[1], [1], [0], [0], [0, 0, 1, 0], [], []>} : vector<8x8xbf16>, vector<8x8xbf16>, vector<8x8xf32> -> vector<8x8xf32>
    %80 = arith.addf %79, %7 : vector<8x8xf32>
    %cst_24 = arith.constant dense<0xFF800000> : vector<8xf32>
    %81 = vector.multi_reduction <maximumf>, %80, %cst_24 [1] : vector<8x8xf32> to vector<8xf32>
    %82 = vector.shape_cast %81 : vector<8xf32> to vector<8x1xf32>
    %83 = vector.broadcast %82 : vector<8x1xf32> to vector<8x8xf32>
    %84 = arith.subf %80, %83 : vector<8x8xf32>
    %85 = math.exp %84 : vector<8x8xf32>
    %cst_25 = arith.constant dense<0.000000e+00> : vector<8xf32>
    %86 = vector.multi_reduction <add>, %85, %cst_25 [1] : vector<8x8xf32> to vector<8xf32>
    %87 = vector.shape_cast %86 : vector<8xf32> to vector<8x1xf32>
    %88 = tpu.reciprocal %87 {approx = true} : vector<8x1xf32> -> vector<8x1xf32>
    %89 = vector.broadcast %88 : vector<8x1xf32> to vector<8x8xf32>
    %90 = arith.mulf %85, %89 : vector<8x8xf32>
    %91 = arith.truncf %90 : vector<8x8xf32> to vector<8x8xbf16>
    %92 = vector.extract_strided_slice %10 {offsets = [0, 16], sizes = [8, 8], strides = [1, 1]} : vector<8x32xbf16> to vector<8x8xbf16>
    %cst_26 = arith.constant dense<0.000000e+00> : vector<8x8xf32>
    %93 = tpu.matmul %91, %92, %cst_26 {dimension_numbers = #tpu.dot_dimension_numbers<[1], [0], [0], [1], [0, 0, 1, 1], [], []>} : vector<8x8xbf16>, vector<8x8xbf16>, vector<8x8xf32> -> vector<8x8xf32>
    %94 = vector.extract_strided_slice %11 {offsets = [0, 16], sizes = [8, 8], strides = [1, 1]} : vector<8x32xbf16> to vector<8x8xbf16>
    %cst_27 = arith.constant dense<0.000000e+00> : vector<8x8xf32>
    %95 = tpu.matmul %77, %94, %cst_27 {dimension_numbers = #tpu.dot_dimension_numbers<[1], [1], [0], [0], [0, 0, 1, 0], [], []>} : vector<8x8xbf16>, vector<8x8xbf16>, vector<8x8xf32> -> vector<8x8xf32>
    %cst_28 = arith.constant dense<0xFF800000> : vector<8xf32>
    %96 = vector.multi_reduction <maximumf>, %95, %cst_28 [1] : vector<8x8xf32> to vector<8xf32>
    %97 = vector.shape_cast %96 : vector<8xf32> to vector<8x1xf32>
    %98 = vector.broadcast %97 : vector<8x1xf32> to vector<8x8xf32>
    %99 = arith.subf %95, %98 : vector<8x8xf32>
    %100 = math.exp %99 : vector<8x8xf32>
    %cst_29 = arith.constant dense<0.000000e+00> : vector<8xf32>
    %101 = vector.multi_reduction <add>, %100, %cst_29 [1] : vector<8x8xf32> to vector<8xf32>
    %102 = vector.shape_cast %101 : vector<8xf32> to vector<8x1xf32>
    %103 = tpu.reciprocal %102 {approx = true} : vector<8x1xf32> -> vector<8x1xf32>
    %104 = vector.broadcast %103 : vector<8x1xf32> to vector<8x8xf32>
    %105 = arith.mulf %100, %104 : vector<8x8xf32>
    %106 = arith.truncf %105 : vector<8x8xf32> to vector<8x8xbf16>
    %107 = vector.extract_strided_slice %12 {offsets = [0, 16], sizes = [8, 8], strides = [1, 1]} : vector<8x32xbf16> to vector<8x8xbf16>
    %cst_30 = arith.constant dense<0.000000e+00> : vector<8x8xf32>
    %108 = tpu.matmul %106, %107, %cst_30 {dimension_numbers = #tpu.dot_dimension_numbers<[1], [0], [0], [1], [0, 0, 1, 1], [], []>} : vector<8x8xbf16>, vector<8x8xbf16>, vector<8x8xf32> -> vector<8x8xf32>
    %109 = vector.extract_strided_slice %8 {offsets = [0, 24], sizes = [8, 8], strides = [1, 1]} : vector<8x32xbf16> to vector<8x8xbf16>
    %110 = vector.extract_strided_slice %9 {offsets = [0, 24], sizes = [8, 8], strides = [1, 1]} : vector<8x32xbf16> to vector<8x8xbf16>
    %cst_31 = arith.constant dense<0.000000e+00> : vector<8x8xf32>
    %111 = tpu.matmul %109, %110, %cst_31 {dimension_numbers = #tpu.dot_dimension_numbers<[1], [1], [0], [0], [0, 0, 1, 0], [], []>} : vector<8x8xbf16>, vector<8x8xbf16>, vector<8x8xf32> -> vector<8x8xf32>
    %112 = arith.addf %111, %7 : vector<8x8xf32>
    %cst_32 = arith.constant dense<0xFF800000> : vector<8xf32>
    %113 = vector.multi_reduction <maximumf>, %112, %cst_32 [1] : vector<8x8xf32> to vector<8xf32>
    %114 = vector.shape_cast %113 : vector<8xf32> to vector<8x1xf32>
    %115 = vector.broadcast %114 : vector<8x1xf32> to vector<8x8xf32>
    %116 = arith.subf %112, %115 : vector<8x8xf32>
    %117 = math.exp %116 : vector<8x8xf32>
    %cst_33 = arith.constant dense<0.000000e+00> : vector<8xf32>
    %118 = vector.multi_reduction <add>, %117, %cst_33 [1] : vector<8x8xf32> to vector<8xf32>
    %119 = vector.shape_cast %118 : vector<8xf32> to vector<8x1xf32>
    %120 = tpu.reciprocal %119 {approx = true} : vector<8x1xf32> -> vector<8x1xf32>
    %121 = vector.broadcast %120 : vector<8x1xf32> to vector<8x8xf32>
    %122 = arith.mulf %117, %121 : vector<8x8xf32>
    %123 = arith.truncf %122 : vector<8x8xf32> to vector<8x8xbf16>
    %124 = vector.extract_strided_slice %10 {offsets = [0, 24], sizes = [8, 8], strides = [1, 1]} : vector<8x32xbf16> to vector<8x8xbf16>
    %cst_34 = arith.constant dense<0.000000e+00> : vector<8x8xf32>
    %125 = tpu.matmul %123, %124, %cst_34 {dimension_numbers = #tpu.dot_dimension_numbers<[1], [0], [0], [1], [0, 0, 1, 1], [], []>} : vector<8x8xbf16>, vector<8x8xbf16>, vector<8x8xf32> -> vector<8x8xf32>
    %126 = vector.extract_strided_slice %11 {offsets = [0, 24], sizes = [8, 8], strides = [1, 1]} : vector<8x32xbf16> to vector<8x8xbf16>
    %cst_35 = arith.constant dense<0.000000e+00> : vector<8x8xf32>
    %127 = tpu.matmul %109, %126, %cst_35 {dimension_numbers = #tpu.dot_dimension_numbers<[1], [1], [0], [0], [0, 0, 1, 0], [], []>} : vector<8x8xbf16>, vector<8x8xbf16>, vector<8x8xf32> -> vector<8x8xf32>
    %cst_36 = arith.constant dense<0xFF800000> : vector<8xf32>
    %128 = vector.multi_reduction <maximumf>, %127, %cst_36 [1] : vector<8x8xf32> to vector<8xf32>
    %129 = vector.shape_cast %128 : vector<8xf32> to vector<8x1xf32>
    %130 = vector.broadcast %129 : vector<8x1xf32> to vector<8x8xf32>
    %131 = arith.subf %127, %130 : vector<8x8xf32>
    %132 = math.exp %131 : vector<8x8xf32>
    %cst_37 = arith.constant dense<0.000000e+00> : vector<8xf32>
    %133 = vector.multi_reduction <add>, %132, %cst_37 [1] : vector<8x8xf32> to vector<8xf32>
    %134 = vector.shape_cast %133 : vector<8xf32> to vector<8x1xf32>
    %135 = tpu.reciprocal %134 {approx = true} : vector<8x1xf32> -> vector<8x1xf32>
    %136 = vector.broadcast %135 : vector<8x1xf32> to vector<8x8xf32>
    %137 = arith.mulf %132, %136 : vector<8x8xf32>
    %138 = arith.truncf %137 : vector<8x8xf32> to vector<8x8xbf16>
    %139 = vector.extract_strided_slice %12 {offsets = [0, 24], sizes = [8, 8], strides = [1, 1]} : vector<8x32xbf16> to vector<8x8xbf16>
    %cst_38 = arith.constant dense<0.000000e+00> : vector<8x8xf32>
    %140 = tpu.matmul %138, %139, %cst_38 {dimension_numbers = #tpu.dot_dimension_numbers<[1], [0], [0], [1], [0, 0, 1, 1], [], []>} : vector<8x8xbf16>, vector<8x8xbf16>, vector<8x8xf32> -> vector<8x8xf32>
    %141 = tpu.concatenate %29, %61, %93, %125 in 1 : vector<8x8xf32>, vector<8x8xf32>, vector<8x8xf32>, vector<8x8xf32> -> vector<8x32xf32>
    %c0_39 = arith.constant 0 : index
    %c0_40 = arith.constant 0 : index
    %142 = vector.load %arg16[%c0_39, %c0_40] : memref<8x32xf32, #tpu.memory_space<vmem>>, vector<8x32xf32>
    tpu.vector_store %arg16[%c0_39, %c0_40], %141 {strides = array<i32>} : memref<8x32xf32, #tpu.memory_space<vmem>>, vector<8x32xf32>,
    %143 = arith.truncf %141 : vector<8x32xf32> to vector<8x32xbf16>
    %144 = tpu.concatenate %44, %76, %108, %140 in 1 : vector<8x8xf32>, vector<8x8xf32>, vector<8x8xf32>, vector<8x8xf32> -> vector<8x32xf32>
    %145 = arith.truncf %144 : vector<8x32xf32> to vector<8x32xbf16>
    %c0_41 = arith.constant 0 : index
    %c0_42 = arith.constant 0 : index
    %146 = vector.load %arg4[%c0_41, %c0_42] : memref<8x8xbf16, #tpu.memory_space<vmem>>, vector<8x8xbf16>
    %cst_43 = arith.constant dense<0.000000e+00> : vector<8x32xf32>
    %147 = tpu.matmul %146, %145, %cst_43 {dimension_numbers = #tpu.dot_dimension_numbers<[1], [0], [0], [1], [0, 0, 1, 1], [], []>} : vector<8x8xbf16>, vector<8x32xbf16>, vector<8x32xf32> -> vector<8x32xf32>
    %c0_44 = arith.constant 0 : index
    %c0_45 = arith.constant 0 : index
    %148 = vector.load %arg5[%c0_44, %c0_45] : memref<8x8xbf16, #tpu.memory_space<vmem>>, vector<8x8xbf16>
    %cst_46 = arith.constant dense<0.000000e+00> : vector<8x32xf32>
    %149 = tpu.matmul %148, %143, %cst_46 {dimension_numbers = #tpu.dot_dimension_numbers<[1], [0], [0], [1], [0, 0, 1, 1], [], []>} : vector<8x8xbf16>, vector<8x32xbf16>, vector<8x32xf32> -> vector<8x32xf32>
    %150 = arith.addf %147, %149 : vector<8x32xf32>
    %c0_47 = arith.constant 0 : index
    %c0_48 = arith.constant 0 : index
    %151 = vector.load %arg6[%c0_47, %c0_48] : memref<8x1xf32, #tpu.memory_space<vmem>>, vector<8x1xf32>
    %152 = vector.broadcast %151 : vector<8x1xf32> to vector<8x32xf32>
    %153 = arith.addf %150, %152 : vector<8x32xf32>
    %154 = arith.mulf %153, %153 : vector<8x32xf32>
    %155 = arith.mulf %153, %154 : vector<8x32xf32>
    %cst_49 = arith.constant 4.471500e-02 : f32
    %156 = vector.broadcast %cst_49 : f32 to vector<8x32xf32>
    %157 = arith.mulf %156, %155 : vector<8x32xf32>
    %158 = arith.addf %153, %157 : vector<8x32xf32>
    %cst_50 = arith.constant 0.797884583 : f32
    %159 = vector.broadcast %cst_50 : f32 to vector<8x32xf32>
    %160 = arith.mulf %159, %158 : vector<8x32xf32>
    %161 = math.tanh %160 : vector<8x32xf32>
    %cst_51 = arith.constant 1.000000e+00 : f32
    %162 = vector.broadcast %cst_51 : f32 to vector<8x32xf32>
    %163 = arith.addf %162, %161 : vector<8x32xf32>
    %cst_52 = arith.constant 5.000000e-01 : f32
    %164 = vector.broadcast %cst_52 : f32 to vector<8x32xf32>
    %165 = arith.mulf %164, %163 : vector<8x32xf32>
    %166 = arith.mulf %153, %165 : vector<8x32xf32>
    %167 = arith.truncf %166 : vector<8x32xf32> to vector<8x32xbf16>
    %c0_53 = arith.constant 0 : index
    %c0_54 = arith.constant 0 : index
    %168 = vector.load %arg7[%c0_53, %c0_54] : memref<32x32xbf16, #tpu.memory_space<vmem>>, vector<32x32xbf16>
    %cst_55 = arith.constant dense<0.000000e+00> : vector<8x32xf32>
    %169 = tpu.matmul %167, %168, %cst_55 {dimension_numbers = #tpu.dot_dimension_numbers<[1], [0], [0], [1], [0, 0, 1, 1], [], []>} : vector<8x32xbf16>, vector<32x32xbf16>, vector<8x32xf32> -> vector<8x32xf32>
    %c0_56 = arith.constant 0 : index
    %c0_57 = arith.constant 0 : index
    %170 = vector.load %arg8[%c0_56, %c0_57] : memref<1x32xf32, #tpu.memory_space<vmem>>, vector<1x32xf32>
    %171 = vector.broadcast %170 : vector<1x32xf32> to vector<8x32xf32>
    %172 = arith.addf %169, %171 : vector<8x32xf32>
    %173 = arith.mulf %172, %172 : vector<8x32xf32>
    %174 = arith.mulf %172, %173 : vector<8x32xf32>
    %cst_58 = arith.constant 4.471500e-02 : f32
    %175 = vector.broadcast %cst_58 : f32 to vector<8x32xf32>
    %176 = arith.mulf %175, %174 : vector<8x32xf32>
    %177 = arith.addf %172, %176 : vector<8x32xf32>
    %cst_59 = arith.constant 0.797884583 : f32
    %178 = vector.broadcast %cst_59 : f32 to vector<8x32xf32>
    %179 = arith.mulf %178, %177 : vector<8x32xf32>
    %180 = math.tanh %179 : vector<8x32xf32>
    %cst_60 = arith.constant 1.000000e+00 : f32
    %181 = vector.broadcast %cst_60 : f32 to vector<8x32xf32>
    %182 = arith.addf %181, %180 : vector<8x32xf32>
    %cst_61 = arith.constant 5.000000e-01 : f32
    %183 = vector.broadcast %cst_61 : f32 to vector<8x32xf32>
    %184 = arith.mulf %183, %182 : vector<8x32xf32>
    %185 = arith.mulf %172, %184 : vector<8x32xf32>
    %c0_62 = arith.constant 0 : index
    %c0_63 = arith.constant 0 : index
    %186 = vector.load %arg9[%c0_62, %c0_63] : memref<8x8xbf16, #tpu.memory_space<vmem>>, vector<8x8xbf16>
    %187 = arith.truncf %185 : vector<8x32xf32> to vector<8x32xbf16>
    %cst_64 = arith.constant dense<0.000000e+00> : vector<8x32xf32>
    %188 = tpu.matmul %186, %187, %cst_64 {dimension_numbers = #tpu.dot_dimension_numbers<[1], [0], [0], [1], [0, 0, 1, 1], [], []>} : vector<8x8xbf16>, vector<8x32xbf16>, vector<8x32xf32> -> vector<8x32xf32>
    %c0_65 = arith.constant 0 : index
    %c0_66 = arith.constant 0 : index
    %189 = vector.load %arg10[%c0_65, %c0_66] : memref<8x1xf32, #tpu.memory_space<vmem>>, vector<8x1xf32>
    %190 = vector.broadcast %189 : vector<8x1xf32> to vector<8x32xf32>
    %191 = arith.addf %188, %190 : vector<8x32xf32>
    %192 = arith.mulf %191, %191 : vector<8x32xf32>
    %193 = arith.mulf %191, %192 : vector<8x32xf32>
    %cst_67 = arith.constant 4.471500e-02 : f32
    %194 = vector.broadcast %cst_67 : f32 to vector<8x32xf32>
    %195 = arith.mulf %194, %193 : vector<8x32xf32>
    %196 = arith.addf %191, %195 : vector<8x32xf32>
    %cst_68 = arith.constant 0.797884583 : f32
    %197 = vector.broadcast %cst_68 : f32 to vector<8x32xf32>
    %198 = arith.mulf %197, %196 : vector<8x32xf32>
    %199 = math.tanh %198 : vector<8x32xf32>
    %cst_69 = arith.constant 1.000000e+00 : f32
    %200 = vector.broadcast %cst_69 : f32 to vector<8x32xf32>
    %201 = arith.addf %200, %199 : vector<8x32xf32>
    %cst_70 = arith.constant 5.000000e-01 : f32
    %202 = vector.broadcast %cst_70 : f32 to vector<8x32xf32>
    %203 = arith.mulf %202, %201 : vector<8x32xf32>
    %204 = arith.mulf %191, %203 : vector<8x32xf32>
    %205 = arith.truncf %204 : vector<8x32xf32> to vector<8x32xbf16>
    %c0_71 = arith.constant 0 : index
    %c0_72 = arith.constant 0 : index
    %206 = vector.load %arg11[%c0_71, %c0_72] : memref<32x32xbf16, #tpu.memory_space<vmem>>, vector<32x32xbf16>
    %cst_73 = arith.constant dense<0.000000e+00> : vector<8x32xf32>
    %207 = tpu.matmul %205, %206, %cst_73 {dimension_numbers = #tpu.dot_dimension_numbers<[1], [0], [0], [1], [0, 0, 1, 1], [], []>} : vector<8x32xbf16>, vector<32x32xbf16>, vector<8x32xf32> -> vector<8x32xf32>
    %c0_74 = arith.constant 0 : index
    %c0_75 = arith.constant 0 : index
    %208 = vector.load %arg12[%c0_74, %c0_75] : memref<1x32xf32, #tpu.memory_space<vmem>>, vector<1x32xf32>
    %209 = vector.broadcast %208 : vector<1x32xf32> to vector<8x32xf32>
    %210 = arith.addf %207, %209 : vector<8x32xf32>
    %c0_76 = arith.constant 0 : index
    %c0_77 = arith.constant 0 : index
    %211 = vector.load %arg16[%c0_76, %c0_77] : memref<8x32xf32, #tpu.memory_space<vmem>>, vector<8x32xf32>
    %212 = arith.addf %211, %210 : vector<8x32xf32>
    %213 = arith.truncf %212 : vector<8x32xf32> to vector<8x32xbf16>
    %c0_78 = arith.constant 0 : index
    %c0_79 = arith.constant 0 : index
    %214 = vector.load %arg13[%c0_78, %c0_79] : memref<32x32xbf16, #tpu.memory_space<vmem>>, vector<32x32xbf16>
    %cst_80 = arith.constant dense<0.000000e+00> : vector<8x32xf32>
    %215 = tpu.matmul %213, %214, %cst_80 {dimension_numbers = #tpu.dot_dimension_numbers<[1], [0], [0], [1], [0, 0, 1, 1], [], []>} : vector<8x32xbf16>, vector<32x32xbf16>, vector<8x32xf32> -> vector<8x32xf32>
    %c0_81 = arith.constant 0 : index
    %c0_82 = arith.constant 0 : index
    %216 = vector.load %arg14[%c0_81, %c0_82] : memref<1x32xf32, #tpu.memory_space<vmem>>, vector<1x32xf32>
    %217 = vector.broadcast %216 : vector<1x32xf32> to vector<8x32xf32>
    %218 = arith.addf %215, %217 : vector<8x32xf32>
    %c0_83 = arith.constant 0 : index
    %c0_84 = arith.constant 0 : index
    %c0_85 = arith.constant 0 : index
    %219 = vector.load %arg15[%c0_83, %c0_84, %c0_85] : memref<1x8x32xf32, #tpu.memory_space<vmem>>, vector<1x8x32xf32>
    %220 = vector.shape_cast %219 : vector<1x8x32xf32> to vector<8x32xf32>
    %221 = vector.shape_cast %218 : vector<8x32xf32> to vector<1x8x32xf32>
    tpu.vector_store %arg15[%c0_83, %c0_84, %c0_85], %221 {strides = array<i32>} : memref<1x8x32xf32, #tpu.memory_space<vmem>>, vector<1x8x32xf32>,
    return
  }
  func.func @transform_0(%arg0: i32) -> (i32, i32, i32) {
    %c0_i32 = arith.constant 0 : i32
    %c0_i32_0 = arith.constant 0 : i32
    %c0_i32_1 = arith.constant 0 : i32
    return %arg0, %c0_i32, %c0_i32_0 : i32, i32, i32
  }
  func.func @transform_1(%arg0: i32) -> (i32, i32, i32) {
    %c0_i32 = arith.constant 0 : i32
    %c0_i32_0 = arith.constant 0 : i32
    %c0_i32_1 = arith.constant 0 : i32
    return %arg0, %c0_i32, %c0_i32_0 : i32, i32, i32
  }
  func.func @transform_2(%arg0: i32) -> (i32, i32, i32) {
    %c0_i32 = arith.constant 0 : i32
    %c0_i32_0 = arith.constant 0 : i32
    %c0_i32_1 = arith.constant 0 : i32
    return %arg0, %c0_i32, %c0_i32_0 : i32, i32, i32
  }
  func.func @transform_3(%arg0: i32) -> (i32, i32) {
    %c0_i32 = arith.constant 0 : i32
    %c0_i32_0 = arith.constant 0 : i32
    %c0_i32_1 = arith.constant 0 : i32
    return %c0_i32, %c0_i32_0 : i32, i32
  }
  func.func @transform_4(%arg0: i32) -> (i32, i32) {
    %c0_i32 = arith.constant 0 : i32
    %c0_i32_0 = arith.constant 0 : i32
    %c0_i32_1 = arith.constant 0 : i32
    return %c0_i32, %c0_i32_0 : i32, i32
  }
  func.func @transform_5(%arg0: i32) -> (i32, i32) {
    %c0_i32 = arith.constant 0 : i32
    %c0_i32_0 = arith.constant 0 : i32
    %c0_i32_1 = arith.constant 0 : i32
    return %c0_i32, %c0_i32_0 : i32, i32
  }
  func.func @transform_6(%arg0: i32) -> (i32, i32) {
    %c0_i32 = arith.constant 0 : i32
    %c0_i32_0 = arith.constant 0 : i32
    %c0_i32_1 = arith.constant 0 : i32
    return %c0_i32, %c0_i32_0 : i32, i32
  }
  func.func @transform_7(%arg0: i32) -> (i32, i32) {
    %c0_i32 = arith.constant 0 : i32
    %c0_i32_0 = arith.constant 0 : i32
    %c0_i32_1 = arith.constant 0 : i32
    return %c0_i32, %c0_i32_0 : i32, i32
  }
  func.func @transform_8(%arg0: i32) -> (i32, i32) {
    %c0_i32 = arith.constant 0 : i32
    %c0_i32_0 = arith.constant 0 : i32
    %c0_i32_1 = arith.constant 0 : i32
    return %c0_i32, %c0_i32_0 : i32, i32
  }
  func.func @transform_9(%arg0: i32) -> (i32, i32) {
    %c0_i32 = arith.constant 0 : i32
    %c0_i32_0 = arith.constant 0 : i32
    %c0_i32_1 = arith.constant 0 : i32
    return %c0_i32, %c0_i32_0 : i32, i32
  }
  func.func @transform_10(%arg0: i32) -> (i32, i32) {
    %c0_i32 = arith.constant 0 : i32
    %c0_i32_0 = arith.constant 0 : i32
    %c0_i32_1 = arith.constant 0 : i32
    return %c0_i32, %c0_i32_0 : i32, i32
  }
  func.func @transform_11(%arg0: i32) -> (i32, i32) {
    %c0_i32 = arith.constant 0 : i32
    %c0_i32_0 = arith.constant 0 : i32
    %c0_i32_1 = arith.constant 0 : i32
    return %c0_i32, %c0_i32_0 : i32, i32
  }
  func.func @transform_12(%arg0: i32) -> (i32, i32) {
    %c0_i32 = arith.constant 0 : i32
    %c0_i32_0 = arith.constant 0 : i32
    %c0_i32_1 = arith.constant 0 : i32
    return %c0_i32, %c0_i32_0 : i32, i32
  }
  func.func @transform_13(%arg0: i32) -> (i32, i32) {
    %c0_i32 = arith.constant 0 : i32
    %c0_i32_0 = arith.constant 0 : i32
    %c0_i32_1 = arith.constant 0 : i32
    return %c0_i32, %c0_i32_0 : i32, i32
  }
  func.func @transform_14(%arg0: i32) -> (i32, i32, i32) {
    %c0_i32 = arith.constant 0 : i32
    %c0_i32_0 = arith.constant 0 : i32
    %c0_i32_1 = arith.constant 0 : i32
    return %arg0, %c0_i32, %c0_i32_0 : i32, i32, i32
  }
}

module attributes {stable_mosaic.version = 11 : i64} {
  func.func @_linear_kernel(%arg0: i32, %arg1: memref<16x32xf32, #tpu.memory_space<vmem>>, %arg2: memref<32x64xbf16, #tpu.memory_space<vmem>>, %arg3: memref<1x64xf32, #tpu.memory_space<vmem>>, %arg4: memref<16x64xf32, #tpu.memory_space<vmem>>) attributes {dimension_semantics = [#tpu.dimension_semantics<parallel>], iteration_bounds = array<i64: 1>, scalar_prefetch = 0 : i64, scratch_operands = 0 : i64, tpu.core_type = #tpu.core_type<tc>, window_params = [{transform_indices = @transform_0, window_bounds = array<i64: 16, 32>}, {pipeline_mode = #tpu.pipeline_mode<synchronous>, transform_indices = @transform_1, window_bounds = array<i64: 32, 64>}, {pipeline_mode = #tpu.pipeline_mode<synchronous>, transform_indices = @transform_2, window_bounds = array<i64: 1, 64>}, {transform_indices = @transform_3, window_bounds = array<i64: 16, 64>}]} {
    %c0 = arith.constant 0 : index
    %c0_0 = arith.constant 0 : index
    %0 = vector.load %arg1[%c0, %c0_0] : memref<16x32xf32, #tpu.memory_space<vmem>>, vector<16x32xf32>
    %1 = arith.truncf %0 : vector<16x32xf32> to vector<16x32xbf16>
    %c0_1 = arith.constant 0 : index
    %c0_2 = arith.constant 0 : index
    %2 = vector.load %arg2[%c0_1, %c0_2] : memref<32x64xbf16, #tpu.memory_space<vmem>>, vector<32x64xbf16>
    %cst = arith.constant dense<0.000000e+00> : vector<16x64xf32>
    %3 = tpu.matmul %1, %2, %cst {dimension_numbers = #tpu.dot_dimension_numbers<[1], [0], [0], [1], [0, 0, 1, 1], [], []>} : vector<16x32xbf16>, vector<32x64xbf16>, vector<16x64xf32> -> vector<16x64xf32>
    %c0_3 = arith.constant 0 : index
    %c0_4 = arith.constant 0 : index
    %4 = vector.load %arg3[%c0_3, %c0_4] : memref<1x64xf32, #tpu.memory_space<vmem>>, vector<1x64xf32>
    %5 = vector.broadcast %4 : vector<1x64xf32> to vector<16x64xf32>
    %6 = arith.addf %3, %5 : vector<16x64xf32>
    %c0_5 = arith.constant 0 : index
    %c0_6 = arith.constant 0 : index
    %7 = vector.load %arg4[%c0_5, %c0_6] : memref<16x64xf32, #tpu.memory_space<vmem>>, vector<16x64xf32>
    tpu.vector_store %arg4[%c0_5, %c0_6], %6 {strides = array<i32>} : memref<16x64xf32, #tpu.memory_space<vmem>>, vector<16x64xf32>,
    return
  }
  func.func @transform_0(%arg0: i32) -> (i32, i32) {
    %c0_i32 = arith.constant 0 : i32
    %c0_i32_0 = arith.constant 0 : i32
    return %arg0, %c0_i32 : i32, i32
  }
  func.func @transform_1(%arg0: i32) -> (i32, i32) {
    %c0_i32 = arith.constant 0 : i32
    %c0_i32_0 = arith.constant 0 : i32
    %c0_i32_1 = arith.constant 0 : i32
    return %c0_i32, %c0_i32_0 : i32, i32
  }
  func.func @transform_2(%arg0: i32) -> (i32, i32) {
    %c0_i32 = arith.constant 0 : i32
    %c0_i32_0 = arith.constant 0 : i32
    %c0_i32_1 = arith.constant 0 : i32
    return %c0_i32, %c0_i32_0 : i32, i32
  }
  func.func @transform_3(%arg0: i32) -> (i32, i32) {
    %c0_i32 = arith.constant 0 : i32
    %c0_i32_0 = arith.constant 0 : i32
    return %arg0, %c0_i32 : i32, i32
  }
}

module attributes {stable_mosaic.version = 11 : i64} {
  func.func @_linear_kernel(%arg0: i32, %arg1: memref<16x32xf32, #tpu.memory_space<vmem>>, %arg2: memref<32x96xbf16, #tpu.memory_space<vmem>>, %arg3: memref<1x96xf32, #tpu.memory_space<vmem>>, %arg4: memref<16x96xf32, #tpu.memory_space<vmem>>) attributes {dimension_semantics = [#tpu.dimension_semantics<parallel>], iteration_bounds = array<i64: 1>, scalar_prefetch = 0 : i64, scratch_operands = 0 : i64, tpu.core_type = #tpu.core_type<tc>, window_params = [{transform_indices = @transform_0, window_bounds = array<i64: 16, 32>}, {pipeline_mode = #tpu.pipeline_mode<synchronous>, transform_indices = @transform_1, window_bounds = array<i64: 32, 96>}, {pipeline_mode = #tpu.pipeline_mode<synchronous>, transform_indices = @transform_2, window_bounds = array<i64: 1, 96>}, {transform_indices = @transform_3, window_bounds = array<i64: 16, 96>}]} {
    %c0 = arith.constant 0 : index
    %c0_0 = arith.constant 0 : index
    %0 = vector.load %arg1[%c0, %c0_0] : memref<16x32xf32, #tpu.memory_space<vmem>>, vector<16x32xf32>
    %1 = arith.truncf %0 : vector<16x32xf32> to vector<16x32xbf16>
    %c0_1 = arith.constant 0 : index
    %c0_2 = arith.constant 0 : index
    %2 = vector.load %arg2[%c0_1, %c0_2] : memref<32x96xbf16, #tpu.memory_space<vmem>>, vector<32x96xbf16>
    %cst = arith.constant dense<0.000000e+00> : vector<16x96xf32>
    %3 = tpu.matmul %1, %2, %cst {dimension_numbers = #tpu.dot_dimension_numbers<[1], [0], [0], [1], [0, 0, 1, 1], [], []>} : vector<16x32xbf16>, vector<32x96xbf16>, vector<16x96xf32> -> vector<16x96xf32>
    %c0_3 = arith.constant 0 : index
    %c0_4 = arith.constant 0 : index
    %4 = vector.load %arg3[%c0_3, %c0_4] : memref<1x96xf32, #tpu.memory_space<vmem>>, vector<1x96xf32>
    %5 = vector.broadcast %4 : vector<1x96xf32> to vector<16x96xf32>
    %6 = arith.addf %3, %5 : vector<16x96xf32>
    %c0_5 = arith.constant 0 : index
    %c0_6 = arith.constant 0 : index
    %7 = vector.load %arg4[%c0_5, %c0_6] : memref<16x96xf32, #tpu.memory_space<vmem>>, vector<16x96xf32>
    tpu.vector_store %arg4[%c0_5, %c0_6], %6 {strides = array<i32>} : memref<16x96xf32, #tpu.memory_space<vmem>>, vector<16x96xf32>,
    return
  }
  func.func @transform_0(%arg0: i32) -> (i32, i32) {
    %c0_i32 = arith.constant 0 : i32
    %c0_i32_0 = arith.constant 0 : i32
    return %arg0, %c0_i32 : i32, i32
  }
  func.func @transform_1(%arg0: i32) -> (i32, i32) {
    %c0_i32 = arith.constant 0 : i32
    %c0_i32_0 = arith.constant 0 : i32
    %c0_i32_1 = arith.constant 0 : i32
    return %c0_i32, %c0_i32_0 : i32, i32
  }
  func.func @transform_2(%arg0: i32) -> (i32, i32) {
    %c0_i32 = arith.constant 0 : i32
    %c0_i32_0 = arith.constant 0 : i32
    %c0_i32_1 = arith.constant 0 : i32
    return %c0_i32, %c0_i32_0 : i32, i32
  }
  func.func @transform_3(%arg0: i32) -> (i32, i32) {
    %c0_i32 = arith.constant 0 : i32
    %c0_i32_0 = arith.constant 0 : i32
    return %arg0, %c0_i32 : i32, i32
  }
}

module attributes {stable_mosaic.version = 11 : i64} {
  func.func @_fused_attn_kernel(%arg0: i32, %arg1: memref<1x8x96xf32, #tpu.memory_space<vmem>>, %arg2: memref<1x8x64xf32, #tpu.memory_space<vmem>>, %arg3: memref<1x8x8xf32, #tpu.memory_space<vmem>>, %arg4: memref<8x8xbf16, #tpu.memory_space<vmem>>, %arg5: memref<8x8xbf16, #tpu.memory_space<vmem>>, %arg6: memref<8x1xf32, #tpu.memory_space<vmem>>, %arg7: memref<32x32xbf16, #tpu.memory_space<vmem>>, %arg8: memref<1x32xf32, #tpu.memory_space<vmem>>, %arg9: memref<8x8xbf16, #tpu.memory_space<vmem>>, %arg10: memref<8x1xf32, #tpu.memory_space<vmem>>, %arg11: memref<32x32xbf16, #tpu.memory_space<vmem>>, %arg12: memref<1x32xf32, #tpu.memory_space<vmem>>, %arg13: memref<32x32xbf16, #tpu.memory_space<vmem>>, %arg14: memref<1x32xf32, #tpu.memory_space<vmem>>, %arg15: memref<1x8x32xf32, #tpu.memory_space<vmem>>, %arg16: memref<8x32xf32, #tpu.memory_space<vmem>>) attributes {dimension_semantics = [#tpu.dimension_semantics<parallel>], iteration_bounds = array<i64: 2>, scalar_prefetch = 0 : i64, scratch_operands = 1 : i64, tpu.core_type = #tpu.core_type<tc>, window_params = [{transform_indices = @transform_0, window_bounds = array<i64: 1, 8, 96>}, {transform_indices = @transform_1, window_bounds = array<i64: 1, 8, 64>}, {transform_indices = @transform_2, window_bounds = array<i64: 1, 8, 8>}, {pipeline_mode = #tpu.pipeline_mode<synchronous>, transform_indices = @transform_3, window_bounds = array<i64: 8, 8>}, {pipeline_mode = #tpu.pipeline_mode<synchronous>, transform_indices = @transform_4, window_bounds = array<i64: 8, 8>}, {pipeline_mode = #tpu.pipeline_mode<synchronous>, transform_indices = @transform_5, window_bounds = array<i64: 8, 1>}, {pipeline_mode = #tpu.pipeline_mode<synchronous>, transform_indices = @transform_6, window_bounds = array<i64: 32, 32>}, {pipeline_mode = #tpu.pipeline_mode<synchronous>, transform_indices = @transform_7, window_bounds = array<i64: 1, 32>}, {pipeline_mode = #tpu.pipeline_mode<synchronous>, transform_indices = @transform_8, window_bounds = array<i64: 8, 8>}, {pipeline_mode = #tpu.pipeline_mode<synchronous>, transform_indices = @transform_9, window_bounds = array<i64: 8, 1>}, {pipeline_mode = #tpu.pipeline_mode<synchronous>, transform_indices = @transform_10, window_bounds = array<i64: 32, 32>}, {pipeline_mode = #tpu.pipeline_mode<synchronous>, transform_indices = @transform_11, window_bounds = array<i64: 1, 32>}, {pipeline_mode = #tpu.pipeline_mode<synchronous>, transform_indices = @transform_12, window_bounds = array<i64: 32, 32>}, {pipeline_mode = #tpu.pipeline_mode<synchronous>, transform_indices = @transform_13, window_bounds = array<i64: 1, 32>}, {transform_indices = @transform_14, window_bounds = array<i64: 1, 8, 32>}]} {
    %c0 = arith.constant 0 : index
    %c0_0 = arith.constant 0 : index
    %c0_1 = arith.constant 0 : index
    %0 = vector.load %arg1[%c0, %c0_0, %c0_1] : memref<1x8x96xf32, #tpu.memory_space<vmem>>, vector<1x8x96xf32>
    %1 = vector.shape_cast %0 : vector<1x8x96xf32> to vector<8x96xf32>
    %2 = arith.truncf %1 : vector<8x96xf32> to vector<8x96xbf16>
    %c0_2 = arith.constant 0 : index
    %c0_3 = arith.constant 0 : index
    %c0_4 = arith.constant 0 : index
    %3 = vector.load %arg2[%c0_2, %c0_3, %c0_4] : memref<1x8x64xf32, #tpu.memory_space<vmem>>, vector<1x8x64xf32>
    %4 = vector.shape_cast %3 : vector<1x8x64xf32> to vector<8x64xf32>
    %5 = arith.truncf %4 : vector<8x64xf32> to vector<8x64xbf16>
    %c0_5 = arith.constant 0 : index
    %c0_6 = arith.constant 0 : index
    %c0_7 = arith.constant 0 : index
    %6 = vector.load %arg3[%c0_5, %c0_6, %c0_7] : memref<1x8x8xf32, #tpu.memory_space<vmem>>, vector<1x8x8xf32>
    %7 = vector.shape_cast %6 : vector<1x8x8xf32> to vector<8x8xf32>
    %8 = vector.extract_strided_slice %2 {offsets = [0, 0], sizes = [8, 32], strides = [1, 1]} : vector<8x96xbf16> to vector<8x32xbf16>
    %9 = vector.extract_strided_slice %2 {offsets = [0, 32], sizes = [8, 32], strides = [1, 1]} : vector<8x96xbf16> to vector<8x32xbf16>
    %10 = vector.extract_strided_slice %2 {offsets = [0, 64], sizes = [8, 32], strides = [1, 1]} : vector<8x96xbf16> to vector<8x32xbf16>
    %11 = vector.extract_strided_slice %5 {offsets = [0, 0], sizes = [8, 32], strides = [1, 1]} : vector<8x64xbf16> to vector<8x32xbf16>
    %12 = vector.extract_strided_slice %5 {offsets = [0, 32], sizes = [8, 32], strides = [1, 1]} : vector<8x64xbf16> to vector<8x32xbf16>
    %13 = vector.extract_strided_slice %8 {offsets = [0, 0], sizes = [8, 8], strides = [1, 1]} : vector<8x32xbf16> to vector<8x8xbf16>
    %14 = vector.extract_strided_slice %9 {offsets = [0, 0], sizes = [8, 8], strides = [1, 1]} : vector<8x32xbf16> to vector<8x8xbf16>
    %cst = arith.constant dense<0.000000e+00> : vector<8x8xf32>
    %15 = tpu.matmul %13, %14, %cst {dimension_numbers = #tpu.dot_dimension_numbers<[1], [1], [0], [0], [0, 0, 1, 0], [], []>} : vector<8x8xbf16>, vector<8x8xbf16>, vector<8x8xf32> -> vector<8x8xf32>
    %16 = arith.addf %15, %7 : vector<8x8xf32>
    %cst_8 = arith.constant dense<0xFF800000> : vector<8xf32>
    %17 = vector.multi_reduction <maximumf>, %16, %cst_8 [1] : vector<8x8xf32> to vector<8xf32>
    %18 = vector.shape_cast %17 : vector<8xf32> to vector<8x1xf32>
    %19 = vector.broadcast %18 : vector<8x1xf32> to vector<8x8xf32>
    %20 = arith.subf %16, %19 : vector<8x8xf32>
    %21 = math.exp %20 : vector<8x8xf32>
    %cst_9 = arith.constant dense<0.000000e+00> : vector<8xf32>
    %22 = vector.multi_reduction <add>, %21, %cst_9 [1] : vector<8x8xf32> to vector<8xf32>
    %23 = vector.shape_cast %22 : vector<8xf32> to vector<8x1xf32>
    %24 = tpu.reciprocal %23 {approx = true} : vector<8x1xf32> -> vector<8x1xf32>
    %25 = vector.broadcast %24 : vector<8x1xf32> to vector<8x8xf32>
    %26 = arith.mulf %21, %25 : vector<8x8xf32>
    %27 = arith.truncf %26 : vector<8x8xf32> to vector<8x8xbf16>
    %28 = vector.extract_strided_slice %10 {offsets = [0, 0], sizes = [8, 8], strides = [1, 1]} : vector<8x32xbf16> to vector<8x8xbf16>
    %cst_10 = arith.constant dense<0.000000e+00> : vector<8x8xf32>
    %29 = tpu.matmul %27, %28, %cst_10 {dimension_numbers = #tpu.dot_dimension_numbers<[1], [0], [0], [1], [0, 0, 1, 1], [], []>} : vector<8x8xbf16>, vector<8x8xbf16>, vector<8x8xf32> -> vector<8x8xf32>
    %30 = vector.extract_strided_slice %11 {offsets = [0, 0], sizes = [8, 8], strides = [1, 1]} : vector<8x32xbf16> to vector<8x8xbf16>
    %cst_11 = arith.constant dense<0.000000e+00> : vector<8x8xf32>
    %31 = tpu.matmul %13, %30, %cst_11 {dimension_numbers = #tpu.dot_dimension_numbers<[1], [1], [0], [0], [0, 0, 1, 0], [], []>} : vector<8x8xbf16>, vector<8x8xbf16>, vector<8x8xf32> -> vector<8x8xf32>
    %cst_12 = arith.constant dense<0xFF800000> : vector<8xf32>
    %32 = vector.multi_reduction <maximumf>, %31, %cst_12 [1] : vector<8x8xf32> to vector<8xf32>
    %33 = vector.shape_cast %32 : vector<8xf32> to vector<8x1xf32>
    %34 = vector.broadcast %33 : vector<8x1xf32> to vector<8x8xf32>
    %35 = arith.subf %31, %34 : vector<8x8xf32>
    %36 = math.exp %35 : vector<8x8xf32>
    %cst_13 = arith.constant dense<0.000000e+00> : vector<8xf32>
    %37 = vector.multi_reduction <add>, %36, %cst_13 [1] : vector<8x8xf32> to vector<8xf32>
    %38 = vector.shape_cast %37 : vector<8xf32> to vector<8x1xf32>
    %39 = tpu.reciprocal %38 {approx = true} : vector<8x1xf32> -> vector<8x1xf32>
    %40 = vector.broadcast %39 : vector<8x1xf32> to vector<8x8xf32>
    %41 = arith.mulf %36, %40 : vector<8x8xf32>
    %42 = arith.truncf %41 : vector<8x8xf32> to vector<8x8xbf16>
    %43 = vector.extract_strided_slice %12 {offsets = [0, 0], sizes = [8, 8], strides = [1, 1]} : vector<8x32xbf16> to vector<8x8xbf16>
    %cst_14 = arith.constant dense<0.000000e+00> : vector<8x8xf32>
    %44 = tpu.matmul %42, %43, %cst_14 {dimension_numbers = #tpu.dot_dimension_numbers<[1], [0], [0], [1], [0, 0, 1, 1], [], []>} : vector<8x8xbf16>, vector<8x8xbf16>, vector<8x8xf32> -> vector<8x8xf32>
    %45 = vector.extract_strided_slice %8 {offsets = [0, 8], sizes = [8, 8], strides = [1, 1]} : vector<8x32xbf16> to vector<8x8xbf16>
    %46 = vector.extract_strided_slice %9 {offsets = [0, 8], sizes = [8, 8], strides = [1, 1]} : vector<8x32xbf16> to vector<8x8xbf16>
    %cst_15 = arith.constant dense<0.000000e+00> : vector<8x8xf32>
    %47 = tpu.matmul %45, %46, %cst_15 {dimension_numbers = #tpu.dot_dimension_numbers<[1], [1], [0], [0], [0, 0, 1, 0], [], []>} : vector<8x8xbf16>, vector<8x8xbf16>, vector<8x8xf32> -> vector<8x8xf32>
    %48 = arith.addf %47, %7 : vector<8x8xf32>
    %cst_16 = arith.constant dense<0xFF800000> : vector<8xf32>
    %49 = vector.multi_reduction <maximumf>, %48, %cst_16 [1] : vector<8x8xf32> to vector<8xf32>
    %50 = vector.shape_cast %49 : vector<8xf32> to vector<8x1xf32>
    %51 = vector.broadcast %50 : vector<8x1xf32> to vector<8x8xf32>
    %52 = arith.subf %48, %51 : vector<8x8xf32>
    %53 = math.exp %52 : vector<8x8xf32>
    %cst_17 = arith.constant dense<0.000000e+00> : vector<8xf32>
    %54 = vector.multi_reduction <add>, %53, %cst_17 [1] : vector<8x8xf32> to vector<8xf32>
    %55 = vector.shape_cast %54 : vector<8xf32> to vector<8x1xf32>
    %56 = tpu.reciprocal %55 {approx = true} : vector<8x1xf32> -> vector<8x1xf32>
    %57 = vector.broadcast %56 : vector<8x1xf32> to vector<8x8xf32>
    %58 = arith.mulf %53, %57 : vector<8x8xf32>
    %59 = arith.truncf %58 : vector<8x8xf32> to vector<8x8xbf16>
    %60 = vector.extract_strided_slice %10 {offsets = [0, 8], sizes = [8, 8], strides = [1, 1]} : vector<8x32xbf16> to vector<8x8xbf16>
    %cst_18 = arith.constant dense<0.000000e+00> : vector<8x8xf32>
    %61 = tpu.matmul %59, %60, %cst_18 {dimension_numbers = #tpu.dot_dimension_numbers<[1], [0], [0], [1], [0, 0, 1, 1], [], []>} : vector<8x8xbf16>, vector<8x8xbf16>, vector<8x8xf32> -> vector<8x8xf32>
    %62 = vector.extract_strided_slice %11 {offsets = [0, 8], sizes = [8, 8], strides = [1, 1]} : vector<8x32xbf16> to vector<8x8xbf16>
    %cst_19 = arith.constant dense<0.000000e+00> : vector<8x8xf32>
    %63 = tpu.matmul %45, %62, %cst_19 {dimension_numbers = #tpu.dot_dimension_numbers<[1], [1], [0], [0], [0, 0, 1, 0], [], []>} : vector<8x8xbf16>, vector<8x8xbf16>, vector<8x8xf32> -> vector<8x8xf32>
    %cst_20 = arith.constant dense<0xFF800000> : vector<8xf32>
    %64 = vector.multi_reduction <maximumf>, %63, %cst_20 [1] : vector<8x8xf32> to vector<8xf32>
    %65 = vector.shape_cast %64 : vector<8xf32> to vector<8x1xf32>
    %66 = vector.broadcast %65 : vector<8x1xf32> to vector<8x8xf32>
    %67 = arith.subf %63, %66 : vector<8x8xf32>
    %68 = math.exp %67 : vector<8x8xf32>
    %cst_21 = arith.constant dense<0.000000e+00> : vector<8xf32>
    %69 = vector.multi_reduction <add>, %68, %cst_21 [1] : vector<8x8xf32> to vector<8xf32>
    %70 = vector.shape_cast %69 : vector<8xf32> to vector<8x1xf32>
    %71 = tpu.reciprocal %70 {approx = true} : vector<8x1xf32> -> vector<8x1xf32>
    %72 = vector.broadcast %71 : vector<8x1xf32> to vector<8x8xf32>
    %73 = arith.mulf %68, %72 : vector<8x8xf32>
    %74 = arith.truncf %73 : vector<8x8xf32> to vector<8x8xbf16>
    %75 = vector.extract_strided_slice %12 {offsets = [0, 8], sizes = [8, 8], strides = [1, 1]} : vector<8x32xbf16> to vector<8x8xbf16>
    %cst_22 = arith.constant dense<0.000000e+00> : vector<8x8xf32>
    %76 = tpu.matmul %74, %75, %cst_22 {dimension_numbers = #tpu.dot_dimension_numbers<[1], [0], [0], [1], [0, 0, 1, 1], [], []>} : vector<8x8xbf16>, vector<8x8xbf16>, vector<8x8xf32> -> vector<8x8xf32>
    %77 = vector.extract_strided_slice %8 {offsets = [0, 16], sizes = [8, 8], strides = [1, 1]} : vector<8x32xbf16> to vector<8x8xbf16>
    %78 = vector.extract_strided_slice %9 {offsets = [0, 16], sizes = [8, 8], strides = [1, 1]} : vector<8x32xbf16> to vector<8x8xbf16>
    %cst_23 = arith.constant dense<0.000000e+00> : vector<8x8xf32>
    %79 = tpu.matmul %77, %78, %cst_23 {dimension_numbers = #tpu.dot_dimension_numbers<[1], [1], [0], [0], [0, 0, 1, 0], [], []>} : vector<8x8xbf16>, vector<8x8xbf16>, vector<8x8xf32> -> vector<8x8xf32>
    %80 = arith.addf %79, %7 : vector<8x8xf32>
    %cst_24 = arith.constant dense<0xFF800000> : vector<8xf32>
    %81 = vector.multi_reduction <maximumf>, %80, %cst_24 [1] : vector<8x8xf32> to vector<8xf32>
    %82 = vector.shape_cast %81 : vector<8xf32> to vector<8x1xf32>
    %83 = vector.broadcast %82 : vector<8x1xf32> to vector<8x8xf32>
    %84 = arith.subf %80, %83 : vector<8x8xf32>
    %85 = math.exp %84 : vector<8x8xf32>
    %cst_25 = arith.constant dense<0.000000e+00> : vector<8xf32>
    %86 = vector.multi_reduction <add>, %85, %cst_25 [1] : vector<8x8xf32> to vector<8xf32>
    %87 = vector.shape_cast %86 : vector<8xf32> to vector<8x1xf32>
    %88 = tpu.reciprocal %87 {approx = true} : vector<8x1xf32> -> vector<8x1xf32>
    %89 = vector.broadcast %88 : vector<8x1xf32> to vector<8x8xf32>
    %90 = arith.mulf %85, %89 : vector<8x8xf32>
    %91 = arith.truncf %90 : vector<8x8xf32> to vector<8x8xbf16>
    %92 = vector.extract_strided_slice %10 {offsets = [0, 16], sizes = [8, 8], strides = [1, 1]} : vector<8x32xbf16> to vector<8x8xbf16>
    %cst_26 = arith.constant dense<0.000000e+00> : vector<8x8xf32>
    %93 = tpu.matmul %91, %92, %cst_26 {dimension_numbers = #tpu.dot_dimension_numbers<[1], [0], [0], [1], [0, 0, 1, 1], [], []>} : vector<8x8xbf16>, vector<8x8xbf16>, vector<8x8xf32> -> vector<8x8xf32>
    %94 = vector.extract_strided_slice %11 {offsets = [0, 16], sizes = [8, 8], strides = [1, 1]} : vector<8x32xbf16> to vector<8x8xbf16>
    %cst_27 = arith.constant dense<0.000000e+00> : vector<8x8xf32>
    %95 = tpu.matmul %77, %94, %cst_27 {dimension_numbers = #tpu.dot_dimension_numbers<[1], [1], [0], [0], [0, 0, 1, 0], [], []>} : vector<8x8xbf16>, vector<8x8xbf16>, vector<8x8xf32> -> vector<8x8xf32>
    %cst_28 = arith.constant dense<0xFF800000> : vector<8xf32>
    %96 = vector.multi_reduction <maximumf>, %95, %cst_28 [1] : vector<8x8xf32> to vector<8xf32>
    %97 = vector.shape_cast %96 : vector<8xf32> to vector<8x1xf32>
    %98 = vector.broadcast %97 : vector<8x1xf32> to vector<8x8xf32>
    %99 = arith.subf %95, %98 : vector<8x8xf32>
    %100 = math.exp %99 : vector<8x8xf32>
    %cst_29 = arith.constant dense<0.000000e+00> : vector<8xf32>
    %101 = vector.multi_reduction <add>, %100, %cst_29 [1] : vector<8x8xf32> to vector<8xf32>
    %102 = vector.shape_cast %101 : vector<8xf32> to vector<8x1xf32>
    %103 = tpu.reciprocal %102 {approx = true} : vector<8x1xf32> -> vector<8x1xf32>
    %104 = vector.broadcast %103 : vector<8x1xf32> to vector<8x8xf32>
    %105 = arith.mulf %100, %104 : vector<8x8xf32>
    %106 = arith.truncf %105 : vector<8x8xf32> to vector<8x8xbf16>
    %107 = vector.extract_strided_slice %12 {offsets = [0, 16], sizes = [8, 8], strides = [1, 1]} : vector<8x32xbf16> to vector<8x8xbf16>
    %cst_30 = arith.constant dense<0.000000e+00> : vector<8x8xf32>
    %108 = tpu.matmul %106, %107, %cst_30 {dimension_numbers = #tpu.dot_dimension_numbers<[1], [0], [0], [1], [0, 0, 1, 1], [], []>} : vector<8x8xbf16>, vector<8x8xbf16>, vector<8x8xf32> -> vector<8x8xf32>
    %109 = vector.extract_strided_slice %8 {offsets = [0, 24], sizes = [8, 8], strides = [1, 1]} : vector<8x32xbf16> to vector<8x8xbf16>
    %110 = vector.extract_strided_slice %9 {offsets = [0, 24], sizes = [8, 8], strides = [1, 1]} : vector<8x32xbf16> to vector<8x8xbf16>
    %cst_31 = arith.constant dense<0.000000e+00> : vector<8x8xf32>
    %111 = tpu.matmul %109, %110, %cst_31 {dimension_numbers = #tpu.dot_dimension_numbers<[1], [1], [0], [0], [0, 0, 1, 0], [], []>} : vector<8x8xbf16>, vector<8x8xbf16>, vector<8x8xf32> -> vector<8x8xf32>
    %112 = arith.addf %111, %7 : vector<8x8xf32>
    %cst_32 = arith.constant dense<0xFF800000> : vector<8xf32>
    %113 = vector.multi_reduction <maximumf>, %112, %cst_32 [1] : vector<8x8xf32> to vector<8xf32>
    %114 = vector.shape_cast %113 : vector<8xf32> to vector<8x1xf32>
    %115 = vector.broadcast %114 : vector<8x1xf32> to vector<8x8xf32>
    %116 = arith.subf %112, %115 : vector<8x8xf32>
    %117 = math.exp %116 : vector<8x8xf32>
    %cst_33 = arith.constant dense<0.000000e+00> : vector<8xf32>
    %118 = vector.multi_reduction <add>, %117, %cst_33 [1] : vector<8x8xf32> to vector<8xf32>
    %119 = vector.shape_cast %118 : vector<8xf32> to vector<8x1xf32>
    %120 = tpu.reciprocal %119 {approx = true} : vector<8x1xf32> -> vector<8x1xf32>
    %121 = vector.broadcast %120 : vector<8x1xf32> to vector<8x8xf32>
    %122 = arith.mulf %117, %121 : vector<8x8xf32>
    %123 = arith.truncf %122 : vector<8x8xf32> to vector<8x8xbf16>
    %124 = vector.extract_strided_slice %10 {offsets = [0, 24], sizes = [8, 8], strides = [1, 1]} : vector<8x32xbf16> to vector<8x8xbf16>
    %cst_34 = arith.constant dense<0.000000e+00> : vector<8x8xf32>
    %125 = tpu.matmul %123, %124, %cst_34 {dimension_numbers = #tpu.dot_dimension_numbers<[1], [0], [0], [1], [0, 0, 1, 1], [], []>} : vector<8x8xbf16>, vector<8x8xbf16>, vector<8x8xf32> -> vector<8x8xf32>
    %126 = vector.extract_strided_slice %11 {offsets = [0, 24], sizes = [8, 8], strides = [1, 1]} : vector<8x32xbf16> to vector<8x8xbf16>
    %cst_35 = arith.constant dense<0.000000e+00> : vector<8x8xf32>
    %127 = tpu.matmul %109, %126, %cst_35 {dimension_numbers = #tpu.dot_dimension_numbers<[1], [1], [0], [0], [0, 0, 1, 0], [], []>} : vector<8x8xbf16>, vector<8x8xbf16>, vector<8x8xf32> -> vector<8x8xf32>
    %cst_36 = arith.constant dense<0xFF800000> : vector<8xf32>
    %128 = vector.multi_reduction <maximumf>, %127, %cst_36 [1] : vector<8x8xf32> to vector<8xf32>
    %129 = vector.shape_cast %128 : vector<8xf32> to vector<8x1xf32>
    %130 = vector.broadcast %129 : vector<8x1xf32> to vector<8x8xf32>
    %131 = arith.subf %127, %130 : vector<8x8xf32>
    %132 = math.exp %131 : vector<8x8xf32>
    %cst_37 = arith.constant dense<0.000000e+00> : vector<8xf32>
    %133 = vector.multi_reduction <add>, %132, %cst_37 [1] : vector<8x8xf32> to vector<8xf32>
    %134 = vector.shape_cast %133 : vector<8xf32> to vector<8x1xf32>
    %135 = tpu.reciprocal %134 {approx = true} : vector<8x1xf32> -> vector<8x1xf32>
    %136 = vector.broadcast %135 : vector<8x1xf32> to vector<8x8xf32>
    %137 = arith.mulf %132, %136 : vector<8x8xf32>
    %138 = arith.truncf %137 : vector<8x8xf32> to vector<8x8xbf16>
    %139 = vector.extract_strided_slice %12 {offsets = [0, 24], sizes = [8, 8], strides = [1, 1]} : vector<8x32xbf16> to vector<8x8xbf16>
    %cst_38 = arith.constant dense<0.000000e+00> : vector<8x8xf32>
    %140 = tpu.matmul %138, %139, %cst_38 {dimension_numbers = #tpu.dot_dimension_numbers<[1], [0], [0], [1], [0, 0, 1, 1], [], []>} : vector<8x8xbf16>, vector<8x8xbf16>, vector<8x8xf32> -> vector<8x8xf32>
    %141 = tpu.concatenate %29, %61, %93, %125 in 1 : vector<8x8xf32>, vector<8x8xf32>, vector<8x8xf32>, vector<8x8xf32> -> vector<8x32xf32>
    %c0_39 = arith.constant 0 : index
    %c0_40 = arith.constant 0 : index
    %142 = vector.load %arg16[%c0_39, %c0_40] : memref<8x32xf32, #tpu.memory_space<vmem>>, vector<8x32xf32>
    tpu.vector_store %arg16[%c0_39, %c0_40], %141 {strides = array<i32>} : memref<8x32xf32, #tpu.memory_space<vmem>>, vector<8x32xf32>,
    %143 = arith.truncf %141 : vector<8x32xf32> to vector<8x32xbf16>
    %144 = tpu.concatenate %44, %76, %108, %140 in 1 : vector<8x8xf32>, vector<8x8xf32>, vector<8x8xf32>, vector<8x8xf32> -> vector<8x32xf32>
    %145 = arith.truncf %144 : vector<8x32xf32> to vector<8x32xbf16>
    %c0_41 = arith.constant 0 : index
    %c0_42 = arith.constant 0 : index
    %146 = vector.load %arg4[%c0_41, %c0_42] : memref<8x8xbf16, #tpu.memory_space<vmem>>, vector<8x8xbf16>
    %cst_43 = arith.constant dense<0.000000e+00> : vector<8x32xf32>
    %147 = tpu.matmul %146, %145, %cst_43 {dimension_numbers = #tpu.dot_dimension_numbers<[1], [0], [0], [1], [0, 0, 1, 1], [], []>} : vector<8x8xbf16>, vector<8x32xbf16>, vector<8x32xf32> -> vector<8x32xf32>
    %c0_44 = arith.constant 0 : index
    %c0_45 = arith.constant 0 : index
    %148 = vector.load %arg5[%c0_44, %c0_45] : memref<8x8xbf16, #tpu.memory_space<vmem>>, vector<8x8xbf16>
    %cst_46 = arith.constant dense<0.000000e+00> : vector<8x32xf32>
    %149 = tpu.matmul %148, %143, %cst_46 {dimension_numbers = #tpu.dot_dimension_numbers<[1], [0], [0], [1], [0, 0, 1, 1], [], []>} : vector<8x8xbf16>, vector<8x32xbf16>, vector<8x32xf32> -> vector<8x32xf32>
    %150 = arith.addf %147, %149 : vector<8x32xf32>
    %c0_47 = arith.constant 0 : index
    %c0_48 = arith.constant 0 : index
    %151 = vector.load %arg6[%c0_47, %c0_48] : memref<8x1xf32, #tpu.memory_space<vmem>>, vector<8x1xf32>
    %152 = vector.broadcast %151 : vector<8x1xf32> to vector<8x32xf32>
    %153 = arith.addf %150, %152 : vector<8x32xf32>
    %154 = arith.mulf %153, %153 : vector<8x32xf32>
    %155 = arith.mulf %153, %154 : vector<8x32xf32>
    %cst_49 = arith.constant 4.471500e-02 : f32
    %156 = vector.broadcast %cst_49 : f32 to vector<8x32xf32>
    %157 = arith.mulf %156, %155 : vector<8x32xf32>
    %158 = arith.addf %153, %157 : vector<8x32xf32>
    %cst_50 = arith.constant 0.797884583 : f32
    %159 = vector.broadcast %cst_50 : f32 to vector<8x32xf32>
    %160 = arith.mulf %159, %158 : vector<8x32xf32>
    %161 = math.tanh %160 : vector<8x32xf32>
    %cst_51 = arith.constant 1.000000e+00 : f32
    %162 = vector.broadcast %cst_51 : f32 to vector<8x32xf32>
    %163 = arith.addf %162, %161 : vector<8x32xf32>
    %cst_52 = arith.constant 5.000000e-01 : f32
    %164 = vector.broadcast %cst_52 : f32 to vector<8x32xf32>
    %165 = arith.mulf %164, %163 : vector<8x32xf32>
    %166 = arith.mulf %153, %165 : vector<8x32xf32>
    %167 = arith.truncf %166 : vector<8x32xf32> to vector<8x32xbf16>
    %c0_53 = arith.constant 0 : index
    %c0_54 = arith.constant 0 : index
    %168 = vector.load %arg7[%c0_53, %c0_54] : memref<32x32xbf16, #tpu.memory_space<vmem>>, vector<32x32xbf16>
    %cst_55 = arith.constant dense<0.000000e+00> : vector<8x32xf32>
    %169 = tpu.matmul %167, %168, %cst_55 {dimension_numbers = #tpu.dot_dimension_numbers<[1], [0], [0], [1], [0, 0, 1, 1], [], []>} : vector<8x32xbf16>, vector<32x32xbf16>, vector<8x32xf32> -> vector<8x32xf32>
    %c0_56 = arith.constant 0 : index
    %c0_57 = arith.constant 0 : index
    %170 = vector.load %arg8[%c0_56, %c0_57] : memref<1x32xf32, #tpu.memory_space<vmem>>, vector<1x32xf32>
    %171 = vector.broadcast %170 : vector<1x32xf32> to vector<8x32xf32>
    %172 = arith.addf %169, %171 : vector<8x32xf32>
    %173 = arith.mulf %172, %172 : vector<8x32xf32>
    %174 = arith.mulf %172, %173 : vector<8x32xf32>
    %cst_58 = arith.constant 4.471500e-02 : f32
    %175 = vector.broadcast %cst_58 : f32 to vector<8x32xf32>
    %176 = arith.mulf %175, %174 : vector<8x32xf32>
    %177 = arith.addf %172, %176 : vector<8x32xf32>
    %cst_59 = arith.constant 0.797884583 : f32
    %178 = vector.broadcast %cst_59 : f32 to vector<8x32xf32>
    %179 = arith.mulf %178, %177 : vector<8x32xf32>
    %180 = math.tanh %179 : vector<8x32xf32>
    %cst_60 = arith.constant 1.000000e+00 : f32
    %181 = vector.broadcast %cst_60 : f32 to vector<8x32xf32>
    %182 = arith.addf %181, %180 : vector<8x32xf32>
    %cst_61 = arith.constant 5.000000e-01 : f32
    %183 = vector.broadcast %cst_61 : f32 to vector<8x32xf32>
    %184 = arith.mulf %183, %182 : vector<8x32xf32>
    %185 = arith.mulf %172, %184 : vector<8x32xf32>
    %c0_62 = arith.constant 0 : index
    %c0_63 = arith.constant 0 : index
    %186 = vector.load %arg9[%c0_62, %c0_63] : memref<8x8xbf16, #tpu.memory_space<vmem>>, vector<8x8xbf16>
    %187 = arith.truncf %185 : vector<8x32xf32> to vector<8x32xbf16>
    %cst_64 = arith.constant dense<0.000000e+00> : vector<8x32xf32>
    %188 = tpu.matmul %186, %187, %cst_64 {dimension_numbers = #tpu.dot_dimension_numbers<[1], [0], [0], [1], [0, 0, 1, 1], [], []>} : vector<8x8xbf16>, vector<8x32xbf16>, vector<8x32xf32> -> vector<8x32xf32>
    %c0_65 = arith.constant 0 : index
    %c0_66 = arith.constant 0 : index
    %189 = vector.load %arg10[%c0_65, %c0_66] : memref<8x1xf32, #tpu.memory_space<vmem>>, vector<8x1xf32>
    %190 = vector.broadcast %189 : vector<8x1xf32> to vector<8x32xf32>
    %191 = arith.addf %188, %190 : vector<8x32xf32>
    %192 = arith.mulf %191, %191 : vector<8x32xf32>
    %193 = arith.mulf %191, %192 : vector<8x32xf32>
    %cst_67 = arith.constant 4.471500e-02 : f32
    %194 = vector.broadcast %cst_67 : f32 to vector<8x32xf32>
    %195 = arith.mulf %194, %193 : vector<8x32xf32>
    %196 = arith.addf %191, %195 : vector<8x32xf32>
    %cst_68 = arith.constant 0.797884583 : f32
    %197 = vector.broadcast %cst_68 : f32 to vector<8x32xf32>
    %198 = arith.mulf %197, %196 : vector<8x32xf32>
    %199 = math.tanh %198 : vector<8x32xf32>
    %cst_69 = arith.constant 1.000000e+00 : f32
    %200 = vector.broadcast %cst_69 : f32 to vector<8x32xf32>
    %201 = arith.addf %200, %199 : vector<8x32xf32>
    %cst_70 = arith.constant 5.000000e-01 : f32
    %202 = vector.broadcast %cst_70 : f32 to vector<8x32xf32>
    %203 = arith.mulf %202, %201 : vector<8x32xf32>
    %204 = arith.mulf %191, %203 : vector<8x32xf32>
    %205 = arith.truncf %204 : vector<8x32xf32> to vector<8x32xbf16>
    %c0_71 = arith.constant 0 : index
    %c0_72 = arith.constant 0 : index
    %206 = vector.load %arg11[%c0_71, %c0_72] : memref<32x32xbf16, #tpu.memory_space<vmem>>, vector<32x32xbf16>
    %cst_73 = arith.constant dense<0.000000e+00> : vector<8x32xf32>
    %207 = tpu.matmul %205, %206, %cst_73 {dimension_numbers = #tpu.dot_dimension_numbers<[1], [0], [0], [1], [0, 0, 1, 1], [], []>} : vector<8x32xbf16>, vector<32x32xbf16>, vector<8x32xf32> -> vector<8x32xf32>
    %c0_74 = arith.constant 0 : index
    %c0_75 = arith.constant 0 : index
    %208 = vector.load %arg12[%c0_74, %c0_75] : memref<1x32xf32, #tpu.memory_space<vmem>>, vector<1x32xf32>
    %209 = vector.broadcast %208 : vector<1x32xf32> to vector<8x32xf32>
    %210 = arith.addf %207, %209 : vector<8x32xf32>
    %c0_76 = arith.constant 0 : index
    %c0_77 = arith.constant 0 : index
    %211 = vector.load %arg16[%c0_76, %c0_77] : memref<8x32xf32, #tpu.memory_space<vmem>>, vector<8x32xf32>
    %212 = arith.addf %211, %210 : vector<8x32xf32>
    %213 = arith.truncf %212 : vector<8x32xf32> to vector<8x32xbf16>
    %c0_78 = arith.constant 0 : index
    %c0_79 = arith.constant 0 : index
    %214 = vector.load %arg13[%c0_78, %c0_79] : memref<32x32xbf16, #tpu.memory_space<vmem>>, vector<32x32xbf16>
    %cst_80 = arith.constant dense<0.000000e+00> : vector<8x32xf32>
    %215 = tpu.matmul %213, %214, %cst_80 {dimension_numbers = #tpu.dot_dimension_numbers<[1], [0], [0], [1], [0, 0, 1, 1], [], []>} : vector<8x32xbf16>, vector<32x32xbf16>, vector<8x32xf32> -> vector<8x32xf32>
    %c0_81 = arith.constant 0 : index
    %c0_82 = arith.constant 0 : index
    %216 = vector.load %arg14[%c0_81, %c0_82] : memref<1x32xf32, #tpu.memory_space<vmem>>, vector<1x32xf32>
    %217 = vector.broadcast %216 : vector<1x32xf32> to vector<8x32xf32>
    %218 = arith.addf %215, %217 : vector<8x32xf32>
    %c0_83 = arith.constant 0 : index
    %c0_84 = arith.constant 0 : index
    %c0_85 = arith.constant 0 : index
    %219 = vector.load %arg15[%c0_83, %c0_84, %c0_85] : memref<1x8x32xf32, #tpu.memory_space<vmem>>, vector<1x8x32xf32>
    %220 = vector.shape_cast %219 : vector<1x8x32xf32> to vector<8x32xf32>
    %221 = vector.shape_cast %218 : vector<8x32xf32> to vector<1x8x32xf32>
    tpu.vector_store %arg15[%c0_83, %c0_84, %c0_85], %221 {strides = array<i32>} : memref<1x8x32xf32, #tpu.memory_space<vmem>>, vector<1x8x32xf32>,
    return
  }
  func.func @transform_0(%arg0: i32) -> (i32, i32, i32) {
    %c0_i32 = arith.constant 0 : i32
    %c0_i32_0 = arith.constant 0 : i32
    %c0_i32_1 = arith.constant 0 : i32
    return %arg0, %c0_i32, %c0_i32_0 : i32, i32, i32
  }
  func.func @transform_1(%arg0: i32) -> (i32, i32, i32) {
    %c0_i32 = arith.constant 0 : i32
    %c0_i32_0 = arith.constant 0 : i32
    %c0_i32_1 = arith.constant 0 : i32
    return %arg0, %c0_i32, %c0_i32_0 : i32, i32, i32
  }
  func.func @transform_2(%arg0: i32) -> (i32, i32, i32) {
    %c0_i32 = arith.constant 0 : i32
    %c0_i32_0 = arith.constant 0 : i32
    %c0_i32_1 = arith.constant 0 : i32
    return %arg0, %c0_i32, %c0_i32_0 : i32, i32, i32
  }
  func.func @transform_3(%arg0: i32) -> (i32, i32) {
    %c0_i32 = arith.constant 0 : i32
    %c0_i32_0 = arith.constant 0 : i32
    %c0_i32_1 = arith.constant 0 : i32
    return %c0_i32, %c0_i32_0 : i32, i32
  }
  func.func @transform_4(%arg0: i32) -> (i32, i32) {
    %c0_i32 = arith.constant 0 : i32
    %c0_i32_0 = arith.constant 0 : i32
    %c0_i32_1 = arith.constant 0 : i32
    return %c0_i32, %c0_i32_0 : i32, i32
  }
  func.func @transform_5(%arg0: i32) -> (i32, i32) {
    %c0_i32 = arith.constant 0 : i32
    %c0_i32_0 = arith.constant 0 : i32
    %c0_i32_1 = arith.constant 0 : i32
    return %c0_i32, %c0_i32_0 : i32, i32
  }
  func.func @transform_6(%arg0: i32) -> (i32, i32) {
    %c0_i32 = arith.constant 0 : i32
    %c0_i32_0 = arith.constant 0 : i32
    %c0_i32_1 = arith.constant 0 : i32
    return %c0_i32, %c0_i32_0 : i32, i32
  }
  func.func @transform_7(%arg0: i32) -> (i32, i32) {
    %c0_i32 = arith.constant 0 : i32
    %c0_i32_0 = arith.constant 0 : i32
    %c0_i32_1 = arith.constant 0 : i32
    return %c0_i32, %c0_i32_0 : i32, i32
  }
  func.func @transform_8(%arg0: i32) -> (i32, i32) {
    %c0_i32 = arith.constant 0 : i32
    %c0_i32_0 = arith.constant 0 : i32
    %c0_i32_1 = arith.constant 0 : i32
    return %c0_i32, %c0_i32_0 : i32, i32
  }
  func.func @transform_9(%arg0: i32) -> (i32, i32) {
    %c0_i32 = arith.constant 0 : i32
    %c0_i32_0 = arith.constant 0 : i32
    %c0_i32_1 = arith.constant 0 : i32
    return %c0_i32, %c0_i32_0 : i32, i32
  }
  func.func @transform_10(%arg0: i32) -> (i32, i32) {
    %c0_i32 = arith.constant 0 : i32
    %c0_i32_0 = arith.constant 0 : i32
    %c0_i32_1 = arith.constant 0 : i32
    return %c0_i32, %c0_i32_0 : i32, i32
  }
  func.func @transform_11(%arg0: i32) -> (i32, i32) {
    %c0_i32 = arith.constant 0 : i32
    %c0_i32_0 = arith.constant 0 : i32
    %c0_i32_1 = arith.constant 0 : i32
    return %c0_i32, %c0_i32_0 : i32, i32
  }
  func.func @transform_12(%arg0: i32) -> (i32, i32) {
    %c0_i32 = arith.constant 0 : i32
    %c0_i32_0 = arith.constant 0 : i32
    %c0_i32_1 = arith.constant 0 : i32
    return %c0_i32, %c0_i32_0 : i32, i32
  }
  func.func @transform_13(%arg0: i32) -> (i32, i32) {
    %c0_i32 = arith.constant 0 : i32
    %c0_i32_0 = arith.constant 0 : i32
    %c0_i32_1 = arith.constant 0 : i32
    return %c0_i32, %c0_i32_0 : i32, i32
  }
  func.func @transform_14(%arg0: i32) -> (i32, i32, i32) {
    %c0_i32 = arith.constant 0 : i32
    %c0_i32_0 = arith.constant 0 : i32
    %c0_i32_1 = arith.constant 0 : i32
    return %arg0, %c0_i32, %c0_i32_0 : i32, i32, i32
  }
}

</mosaic_0001>

<llo_original>
// kernel: te_aug_adapter_clip_attention.3
$region0: #{te_aug_adapter_clip_attention.3}
  #allocation0 [shape = 'u32[]', space=smem, size = 0x4, offset = 0x4, fixed_abs, tag = 'smem constant byte address 0x4 - core index']
  #allocation1 [shape = 'u32[144,128]{1,0:T(1,128)}', space=vmem, size = 0x12000, scoped, tag = 'internal scratch']
  %s0 = inlined_call_operand.vmem [shape: f32[16,32], index: 0, kind: input, shape index: {}]
  %s1 = inlined_call_operand.vmem [shape: bf16[32,96], index: 1, kind: input, shape index: {}]
  %s2 = inlined_call_operand.hbm [shape: f32[1,96], index: 2, kind: input, shape index: {}]
  %s3 = inlined_call_operand.vmem [shape: f32[16,96], index: 3, kind: output, shape index: {}]
  %s4 = sld [smem:[#allocation0]]
  $region26: #{te_aug_adapter_clip_attention.3} parent=0
    _
  %s6 = ssub.s32 1, %s4
  %s7 = scalar_select 0, %s6, %s4
  $region1: #{te_aug_adapter_clip_attention.3} parent=0
    #allocation2 [shape = 'u8[512]{0}', space=vmem, size = 0x400, scoped, tag = 'input window, operand 2, single buffered']
    #allocation3 [shape = 's32[1]{0}', space=sflag, size = 0x4, scoped, tag = 'scoped memory for te_aug_adapter_clip_attention.3']
    %8 = vsyncpa [#allocation3], 0
    // Predicated region
    $region2: #{te_aug_adapter_clip_attention.3} parent=1 // pred_check
      _
    $region3: #{te_aug_adapter_clip_attention.3} parent=1 // pred_check_branch
      %10 = sbr.rel (0) target = $region5
    $region4: #{te_aug_adapter_clip_attention.3} parent=1 // pred_region
      _
    $region5: #{te_aug_adapter_clip_attention.3} parent=1 // pred_fallthru
      _
    // Predicated region
    $region6: #{te_aug_adapter_clip_attention.3} parent=1 // pred_check
      _
    $region7: #{te_aug_adapter_clip_attention.3} parent=1 // pred_check_branch
      %12 = sbr.rel (0) target = $region9
    $region8: #{te_aug_adapter_clip_attention.3} parent=1 // pred_region
      _
    $region9: #{te_aug_adapter_clip_attention.3} parent=1 // pred_fallthru
      _
    // Predicated region
    $region10: #{te_aug_adapter_clip_attention.3} parent=1 // pred_check
      _
    $region11: #{te_aug_adapter_clip_attention.3} parent=1 // pred_check_branch
      %14 = sbr.rel (0) target = $region13
    $region12: #{te_aug_adapter_clip_attention.3} parent=1 // pred_region
      %s16 = ssub.s32 16, 16
      %17 = vsyncadd [#allocation3], %s16
      %s19 = sshll.u32 [#allocation2], 4
      %s20 = int_to_ptr.vmem [resolvable:$true] %s19
      %22 = dma.hbm_to_vmem [thread:$0]  %s2, 16, %s20, [#allocation3]
    $region13: #{te_aug_adapter_clip_attention.3} parent=1 // pred_fallthru
      _
    // Predicated region
    $region14: #{te_aug_adapter_clip_attention.3} parent=1 // pred_check
      _
    $region15: #{te_aug_adapter_clip_attention.3} parent=1 // pred_check_branch
      %24 = sbr.rel (0) target = $region17
    $region16: #{te_aug_adapter_clip_attention.3} parent=1 // pred_region
      %25 = dma.done [#allocation3], 16
    $region17: #{te_aug_adapter_clip_attention.3} parent=1 // pred_fallthru
      _
    %v27 = vld [vmem:[%s0] sm:$0xff]
    %v28 = vld [vmem:[%s0 + $0x8] sm:$0xff]
    %v29 = vpack.c.bf16 %v28, %v27
    %v30 = vld [vmem:[%s1] sm:$0xf]
    %v31 = vld [vmem:[%s1 + $0x4] sm:$0xf]
    %v32 = vld [vmem:[%s1 + $0x8] sm:$0xf]
    %v33 = vld [vmem:[%s1 + $0xc] sm:$0xf]
    %v34 = vld [vmem:[#allocation2] sm:$0x1]
    %v36 = vlaneseq
    %v37 = vshrl.u32 %v36, 7
    %v38 = vsub.s32 0, %v37
    %v39 = vrot.slane %v34, %v38
    %v45 = vunpack.c.l.b16 %v30
    %v46 = vunpack.c.l.b16 %v31
    %v47 = vunpack.c.l.b16 %v32
    %v48 = vunpack.c.l.b16 %v33
    %v49 = vpack.c.b16 %v46, %v45
    %v50 = vpack.c.b16 %v48, %v47
    %vm53 = vcmask 261120
    %v55 = vsel %vm53, %v29, 0
    %57 = vmatprep.subr.bf16.mxu0 0
    %58 = vmatpush1.bf16.msra.mxu0 0
    %59 = vmatprep.subr.bf16.mxu0 0
    %60 = vmatpush1.bf16.msra.mxu0 0
    %61 = vmatprep.subr.bf16.mxu0 0
    %62 = vmatpush1.bf16.msra.mxu0 0
    %63 = vmatprep.subr.bf16.mxu0 0
    %64 = vmatpush1.bf16.msra.mxu0 0
    %65 = vmatprep.subr.bf16.mxu0 0
    %66 = vmatpush1.bf16.msra.mxu0 0
    %67 = vmatprep.subr.bf16.mxu0 0
    %68 = vmatpush1.bf16.msra.mxu0 0
    %69 = vmatprep.subr.bf16.mxu0 0
    %70 = vmatpush1.bf16.msra.mxu0 %v50
    %71 = vmatprep.subr.bf16.mxu0 0
    %72 = vmatpush1.bf16.msra.mxu0 %v49
    %73 = vmatprep.subr.bf16.mxu0 0
    %74 = vmatpush2.bf16.msra.mxu0 0
    %75 = vmatprep.subr.bf16.mxu0 0
    %76 = vmatpush2.bf16.msra.mxu0 0
    %77 = vmatprep.subr.bf16.mxu0 0
    %78 = vmatpush2.bf16.msra.mxu0 0
    %79 = vmatprep.subr.bf16.mxu0 0
    %80 = vmatpush2.bf16.msra.mxu0 0
    %81 = vmatprep.subr.bf16.mxu0 0
    %82 = vmatpush2.bf16.msra.mxu0 0
    %83 = vmatprep.subr.bf16.mxu0 0
    %84 = vmatpush2.bf16.msra.mxu0 0
    %85 = vmatprep.subr.bf16.mxu0 0
    %86 = vmatpush2.bf16.msra.mxu0 0
    %87 = vmatprep.subr.bf16.mxu0 0
    %88 = vmatpush2.bf16.msra.mxu0 0
    %89 = vmatprep.mubr.bf16.mxu0 0
    %90 = vmatmul.mubr.bf16.gmra.mxu0 %v55
    %v91 = vpop.f32.mrf.mxu0
    %v92 = vadd.f32 %v39, %v91
    %v93 = vpop.f32.mrf.mxu0
    %v94 = vpop.f32.mrf.mxu0
    %v95 = vadd.f32 %v39, %v94
    %v96 = vpop.f32.mrf.mxu0
    %97 = vdwg.mxu0
    %vm98 = vcmask 785408
    %99 = vst.msk [vmem:[%s3] sm:$0xff] %vm98, %v92
    %100 = vst.msk [vmem:[%s3 + $0x8] sm:$0xff] %vm98, %v95
    // Predicated region
    $region18: #{te_aug_adapter_clip_attention.3} parent=1 // pred_check
      _
    $region19: #{te_aug_adapter_clip_attention.3} parent=1 // pred_check_branch
      %102 = sbr.rel (0) target = $region21
    $region20: #{te_aug_adapter_clip_attention.3} parent=1 // pred_region
      _
    $region21: #{te_aug_adapter_clip_attention.3} parent=1 // pred_fallthru
      _
    // Predicated region
    $region22: #{te_aug_adapter_clip_attention.3} parent=1 // pred_check
      _
    $region23: #{te_aug_adapter_clip_attention.3} parent=1 // pred_check_branch
      %104 = sbr.rel (0) target = $region25
    $region24: #{te_aug_adapter_clip_attention.3} parent=1 // pred_region
      _
    $region25: #{te_aug_adapter_clip_attention.3} parent=1 // pred_fallthru
      _
    %105 = vsyncpa [#allocation3], 1

// kernel: te_aug_adapter_clip_attention.4
$region0: #{te_aug_adapter_clip_attention.4}
  #allocation0 [shape = 'u32[]', space=smem, size = 0x4, offset = 0x4, fixed_abs, tag = 'smem constant byte address 0x4 - core index']
  #allocation1 [shape = 'u32[144,128]{1,0:T(1,128)}', space=vmem, size = 0x12000, scoped, tag = 'internal scratch']
  %s0 = inlined_call_operand.vmem [shape: f32[16,32], index: 0, kind: input, shape index: {}]
  %s1 = inlined_call_operand.vmem [shape: bf16[32,64], index: 1, kind: input, shape index: {}]
  %s2 = inlined_call_operand.hbm [shape: f32[1,64], index: 2, kind: input, shape index: {}]
  %s3 = inlined_call_operand.vmem [shape: f32[16,64], index: 3, kind: output, shape index: {}]
  %s4 = sld [smem:[#allocation0]]
  $region26: #{te_aug_adapter_clip_attention.4} parent=0
    _
  %s6 = ssub.s32 1, %s4
  %s7 = scalar_select 0, %s6, %s4
  $region1: #{te_aug_adapter_clip_attention.4} parent=0
    #allocation2 [shape = 'u8[512]{0}', space=vmem, size = 0x400, scoped, tag = 'input window, operand 2, single buffered']
    #allocation3 [shape = 's32[1]{0}', space=sflag, size = 0x4, scoped, tag = 'scoped memory for te_aug_adapter_clip_attention.4']
    %8 = vsyncpa [#allocation3], 0
    // Predicated region
    $region2: #{te_aug_adapter_clip_attention.4} parent=1 // pred_check
      _
    $region3: #{te_aug_adapter_clip_attention.4} parent=1 // pred_check_branch
      %10 = sbr.rel (0) target = $region5
    $region4: #{te_aug_adapter_clip_attention.4} parent=1 // pred_region
      _
    $region5: #{te_aug_adapter_clip_attention.4} parent=1 // pred_fallthru
      _
    // Predicated region
    $region6: #{te_aug_adapter_clip_attention.4} parent=1 // pred_check
      _
    $region7: #{te_aug_adapter_clip_attention.4} parent=1 // pred_check_branch
      %12 = sbr.rel (0) target = $region9
    $region8: #{te_aug_adapter_clip_attention.4} parent=1 // pred_region
      _
    $region9: #{te_aug_adapter_clip_attention.4} parent=1 // pred_fallthru
      _
    // Predicated region
    $region10: #{te_aug_adapter_clip_attention.4} parent=1 // pred_check
      _
    $region11: #{te_aug_adapter_clip_attention.4} parent=1 // pred_check_branch
      %14 = sbr.rel (0) target = $region13
    $region12: #{te_aug_adapter_clip_attention.4} parent=1 // pred_region
      %s16 = ssub.s32 16, 16
      %17 = vsyncadd [#allocation3], %s16
      %s19 = sshll.u32 [#allocation2], 4
      %s20 = int_to_ptr.vmem [resolvable:$true] %s19
      %22 = dma.hbm_to_vmem [thread:$0]  %s2, 16, %s20, [#allocation3]
    $region13: #{te_aug_adapter_clip_attention.4} parent=1 // pred_fallthru
      _
    // Predicated region
    $region14: #{te_aug_adapter_clip_attention.4} parent=1 // pred_check
      _
    $region15: #{te_aug_adapter_clip_attention.4} parent=1 // pred_check_branch
      %24 = sbr.rel (0) target = $region17
    $region16: #{te_aug_adapter_clip_attention.4} parent=1 // pred_region
      %25 = dma.done [#allocation3], 16
    $region17: #{te_aug_adapter_clip_attention.4} parent=1 // pred_fallthru
      _
    %v27 = vld [vmem:[%s0] sm:$0xff]
    %v28 = vld [vmem:[%s0 + $0x8] sm:$0xff]
    %v29 = vpack.c.bf16 %v28, %v27
    %v30 = vld [vmem:[%s1] sm:$0xf]
    %v31 = vld [vmem:[%s1 + $0x4] sm:$0xf]
    %v32 = vld [vmem:[%s1 + $0x8] sm:$0xf]
    %v33 = vld [vmem:[%s1 + $0xc] sm:$0xf]
    %v34 = vld [vmem:[#allocation2] sm:$0x1]
    %v36 = vlaneseq
    %v37 = vshrl.u32 %v36, 7
    %v38 = vsub.s32 0, %v37
    %v39 = vrot.slane %v34, %v38
    %v45 = vunpack.c.l.b16 %v30
    %v46 = vunpack.c.l.b16 %v31
    %v47 = vunpack.c.l.b16 %v32
    %v48 = vunpack.c.l.b16 %v33
    %v49 = vpack.c.b16 %v46, %v45
    %v50 = vpack.c.b16 %v48, %v47
    %vm53 = vcmask 261120
    %v55 = vsel %vm53, %v29, 0
    %57 = vmatprep.subr.bf16.mxu0 0
    %58 = vmatpush1.bf16.msra.mxu0 0
    %59 = vmatprep.subr.bf16.mxu0 0
    %60 = vmatpush1.bf16.msra.mxu0 0
    %61 = vmatprep.subr.bf16.mxu0 0
    %62 = vmatpush1.bf16.msra.mxu0 0
    %63 = vmatprep.subr.bf16.mxu0 0
    %64 = vmatpush1.bf16.msra.mxu0 0
    %65 = vmatprep.subr.bf16.mxu0 0
    %66 = vmatpush1.bf16.msra.mxu0 0
    %67 = vmatprep.subr.bf16.mxu0 0
    %68 = vmatpush1.bf16.msra.mxu0 0
    %69 = vmatprep.subr.bf16.mxu0 0
    %70 = vmatpush1.bf16.msra.mxu0 %v50
    %71 = vmatprep.subr.bf16.mxu0 0
    %72 = vmatpush1.bf16.msra.mxu0 %v49
    %73 = vmatprep.subr.bf16.mxu0 0
    %74 = vmatpush2.bf16.msra.mxu0 0
    %75 = vmatprep.subr.bf16.mxu0 0
    %76 = vmatpush2.bf16.msra.mxu0 0
    %77 = vmatprep.subr.bf16.mxu0 0
    %78 = vmatpush2.bf16.msra.mxu0 0
    %79 = vmatprep.subr.bf16.mxu0 0
    %80 = vmatpush2.bf16.msra.mxu0 0
    %81 = vmatprep.subr.bf16.mxu0 0
    %82 = vmatpush2.bf16.msra.mxu0 0
    %83 = vmatprep.subr.bf16.mxu0 0
    %84 = vmatpush2.bf16.msra.mxu0 0
    %85 = vmatprep.subr.bf16.mxu0 0
    %86 = vmatpush2.bf16.msra.mxu0 0
    %87 = vmatprep.subr.bf16.mxu0 0
    %88 = vmatpush2.bf16.msra.mxu0 0
    %89 = vmatprep.mubr.bf16.mxu0 0
    %90 = vmatmul.mubr.bf16.gmra.mxu0 %v55
    %v91 = vpop.f32.mrf.mxu0
    %v92 = vadd.f32 %v39, %v91
    %v93 = vpop.f32.mrf.mxu0
    %v94 = vpop.f32.mrf.mxu0
    %v95 = vadd.f32 %v39, %v94
    %v96 = vpop.f32.mrf.mxu0
    %97 = vdwg.mxu0
    %vm98 = vcmask 523264
    %99 = vst.msk [vmem:[%s3] sm:$0xff] %vm98, %v92
    %100 = vst.msk [vmem:[%s3 + $0x8] sm:$0xff] %vm98, %v95
    // Predicated region
    $region18: #{te_aug_adapter_clip_attention.4} parent=1 // pred_check
      _
    $region19: #{te_aug_adapter_clip_attention.4} parent=1 // pred_check_branch
      %102 = sbr.rel (0) target = $region21
    $region20: #{te_aug_adapter_clip_attention.4} parent=1 // pred_region
      _
    $region21: #{te_aug_adapter_clip_attention.4} parent=1 // pred_fallthru
      _
    // Predicated region
    $region22: #{te_aug_adapter_clip_attention.4} parent=1 // pred_check
      _
    $region23: #{te_aug_adapter_clip_attention.4} parent=1 // pred_check_branch
      %104 = sbr.rel (0) target = $region25
    $region24: #{te_aug_adapter_clip_attention.4} parent=1 // pred_region
      _
    $region25: #{te_aug_adapter_clip_attention.4} parent=1 // pred_fallthru
      _
    %105 = vsyncpa [#allocation3], 1

// kernel: te_aug_adapter_clip_attention.5
$region0: #{te_aug_adapter_clip_attention.5}
  #allocation0 [shape = 'u32[]', space=smem, size = 0x4, offset = 0x4, fixed_abs, tag = 'smem constant byte address 0x4 - core index']
  #allocation1 [shape = 'u32[144,128]{1,0:T(1,128)}', space=vmem, size = 0x12000, scoped, tag = 'internal scratch']
  #allocation2 [shape = 'f32[8,32]{1,0:T(8,128)}', space=vmem, size = 0x1000, scoped, tag = 'scratch operand']
  %s0 = inlined_call_operand.vmem [shape: f32[2,8,96], index: 0, kind: input, shape index: {}]
  %s1 = inlined_call_operand.vmem [shape: f32[2,8,64], index: 1, kind: input, shape index: {}]
  %s2 = inlined_call_operand.vmem [shape: f32[2,8,8], index: 2, kind: input, shape index: {}]
  %s3 = inlined_call_operand.vmem [shape: bf16[8,8], index: 3, kind: input, shape index: {}]
  %s4 = inlined_call_operand.vmem [shape: bf16[8,8], index: 4, kind: input, shape index: {}]
  %s5 = inlined_call_operand.vmem [shape: f32[8,1], index: 5, kind: input, shape index: {}]
  %s6 = inlined_call_operand.vmem [shape: bf16[32,32], index: 6, kind: input, shape index: {}]
  %s7 = inlined_call_operand.vmem [shape: f32[1,32], index: 7, kind: input, shape index: {}]
  %s8 = inlined_call_operand.vmem [shape: bf16[8,8], index: 8, kind: input, shape index: {}]
  %s9 = inlined_call_operand.vmem [shape: f32[8,1], index: 9, kind: input, shape index: {}]
  %s10 = inlined_call_operand.vmem [shape: bf16[32,32], index: 10, kind: input, shape index: {}]
  %s11 = inlined_call_operand.hbm [shape: f32[1,32], index: 11, kind: input, shape index: {}]
  %s12 = inlined_call_operand.vmem [shape: bf16[32,32], index: 12, kind: input, shape index: {}]
  %s13 = inlined_call_operand.hbm [shape: f32[1,32], index: 13, kind: input, shape index: {}]
  %s14 = inlined_call_operand.hbm [shape: f32[2,8,32], index: 14, kind: output, shape index: {}]
  %s15 = sld [smem:[#allocation0]]
  $region97: #{te_aug_adapter_clip_attention.5} parent=0
    _
  %s17 = ssub.s32 1, %s15
  %s18 = scalar_select 0, %s17, %s15
  $region1: #{te_aug_adapter_clip_attention.5} parent=0
    #allocation3 [shape = 'u8[512]{0}', space=vmem, size = 0x400, scoped, tag = 'input window, operand 11, single buffered']
    #allocation4 [shape = 's32[2]{0}', space=sflag, size = 0x8, scoped, tag = 'scoped memory for te_aug_adapter_clip_attention.5']
    #allocation5 [shape = 's32[2]{0}', space=sflag, size = 0x8, scoped, tag = 'scoped memory for te_aug_adapter_clip_attention.5']
    #allocation6 [shape = 'u8[512]{0}', space=vmem, size = 0x400, scoped, tag = 'input window, operand 13, single buffered']
    #allocation7 [shape = 's32[1]{0}', space=sflag, size = 0x4, scoped, tag = 'scoped memory for te_aug_adapter_clip_attention.5']
    #allocation8 [shape = 'u8[8192]{0}', space=vmem, size = 0x2000, scoped, tag = 'output window, operand 0']
    %19 = vsyncpa [#allocation4], 0
    %20 = vsyncpa [#allocation7], 0
    %21 = vsyncpa [#allocation5], 0
    %s22 = scalar_lea.sflag [#allocation5], 1
    %23 = vsyncpa %s22, 0
    loop: start=0, step=1, limit=4
    $region2: #{te_aug_adapter_clip_attention.5} parent=1 // loop_pre_header
      _
    $region3: #{te_aug_adapter_clip_attention.5} parent=1 // loop_header
      %s25 = sphi 0, %s29
      %p26 = scmp.ge.s32.totalorder %s25, 4
      %s35 = sphi 0, %s37
      %s38 = sphi 0, %s35
      %s39 = sphi 0, %s38
      %s55 = sphi 0, %s39
      %s61 = sphi 0, %s63
      %s64 = sphi 0, %s61
      %s65 = sphi 0, %s64
      %s81 = sphi 0, %s65
      %s87 = sphi 0, %s89
      %s90 = sphi 0, %s87
      %s91 = sphi 0, %s90
      %s107 = sphi 0, %s91
      %s111 = sphi 0, %s111
      %s113 = sphi 0, %s111
      %s114 = sphi 0, %s113
      %s128 = sphi 0, %s114
      %s132 = sphi 0, %s132
      %s134 = sphi 0, %s132
      %s135 = sphi 0, %s134
      %s149 = sphi 0, %s135
      %s153 = sphi 0, %s153
      %s155 = sphi 0, %s153
      %s156 = sphi 0, %s155
      %s170 = sphi 0, %s156
      %s174 = sphi 0, %s174
      %s176 = sphi 0, %s174
      %s177 = sphi 0, %s176
      %s191 = sphi 0, %s177
      %s195 = sphi 0, %s195
      %s197 = sphi 0, %s195
      %s198 = sphi 0, %s197
      %s212 = sphi 0, %s198
      %s216 = sphi 0, %s216
      %s218 = sphi 0, %s216
      %s219 = sphi 0, %s218
      %s233 = sphi 0, %s219
      %s237 = sphi 0, %s237
      %s239 = sphi 0, %s237
      %s240 = sphi 0, %s239
      %s254 = sphi 0, %s240
      %s258 = sphi 0, %s258
      %s260 = sphi 0, %s258
      %s261 = sphi 0, %s260
      %s275 = sphi 0, %s261
      %s279 = sphi 0, %s279
      %s281 = sphi 0, %s279
      %s282 = sphi 0, %s281
      %s296 = sphi 0, %s282
      %s300 = sphi 0, %s300
      %s302 = sphi 0, %s300
      %s303 = sphi 0, %s302
      %s317 = sphi 0, %s303
      %s321 = sphi 0, %s321
      %s323 = sphi 0, %s321
      %s324 = sphi 0, %s323
      %s338 = sphi 0, %s324
      %s344 = sphi 0, %s346
      %s347 = sphi 0, %s344
      %s348 = sphi 0, %s347
      %s364 = sphi 0, %s348
    $region4: #{te_aug_adapter_clip_attention.5} parent=1 // loop_header_branch
      %28 = sbr.rel (%p26) target = $region8
    $region5: #{te_aug_adapter_clip_attention.5} parent=1 // loop_body
      %s30 = ssub.s32 %s25, 1
      %s31 = ssub.s32 %s25, 2
      %s32 = sadd.s32 %s25, 1
      %s33 = ssub.s32 %s25, %s32
      %p34 = scmp.eq.s32.totalorder %s33, 0
      %s36 = sadd.s32 %s35, 1
      %s37 = scalar_select %p34, %s35, %s36
      %p40 = pneg %p34
      %p41 = scmp.eq.s32.totalorder %s25, 1
      %p42 = por %p40, %p41
      %p43 = scmp.ne.s32.totalorder %s35, %s38
      %p44 = scmp.eq.s32.totalorder %s25, 0
      %p45 = por %p43, %p44
      %p46 = scmp.ne.s32.totalorder %s35, %s38
      %p47 = scmp.eq.s32.totalorder %s30, 1
      %p48 = por %p46, %p47
      %p49 = scmp.ne.s32.totalorder %s38, %s39
      %p50 = scmp.eq.s32.totalorder %s30, 0
      %p51 = por %p49, %p50
      %p52 = scmp.ne.s32.totalorder %s38, %s39
      %p53 = scmp.eq.s32.totalorder %s31, 1
      %p54 = por %p52, %p53
      %p56 = scmp.ne.s32.totalorder %s39, %s55
      %p57 = scmp.eq.s32.totalorder %s31, 0
      %p58 = por %p56, %p57
      %s59 = ssub.s32 %s25, %s32
      %p60 = scmp.eq.s32.totalorder %s59, 0
      %s62 = sadd.s32 %s61, 1
      %s63 = scalar_select %p60, %s61, %s62
      %p66 = pneg %p60
      %p67 = scmp.eq.s32.totalorder %s25, 1
      %p68 = por %p66, %p67
      %p69 = scmp.ne.s32.totalorder %s61, %s64
      %p70 = scmp.eq.s32.totalorder %s25, 0
      %p71 = por %p69, %p70
      %p72 = scmp.ne.s32.totalorder %s61, %s64
      %p73 = scmp.eq.s32.totalorder %s30, 1
      %p74 = por %p72, %p73
      %p75 = scmp.ne.s32.totalorder %s64, %s65
      %p76 = scmp.eq.s32.totalorder %s30, 0
      %p77 = por %p75, %p76
      %p78 = scmp.ne.s32.totalorder %s64, %s65
      %p79 = scmp.eq.s32.totalorder %s31, 1
      %p80 = por %p78, %p79
      %p82 = scmp.ne.s32.totalorder %s65, %s81
      %p83 = scmp.eq.s32.totalorder %s31, 0
      %p84 = por %p82, %p83
      %s85 = ssub.s32 %s25, %s32
      %p86 = scmp.eq.s32.totalorder %s85, 0
      %s88 = sadd.s32 %s87, 1
      %s89 = scalar_select %p86, %s87, %s88
      %p92 = pneg %p86
      %p93 = scmp.eq.s32.totalorder %s25, 1
      %p94 = por %p92, %p93
      %p95 = scmp.ne.s32.totalorder %s87, %s90
      %p96 = scmp.eq.s32.totalorder %s25, 0
      %p97 = por %p95, %p96
      %p98 = scmp.ne.s32.totalorder %s87, %s90
      %p99 = scmp.eq.s32.totalorder %s30, 1
      %p100 = por %p98, %p99
      %p101 = scmp.ne.s32.totalorder %s90, %s91
      %p102 = scmp.eq.s32.totalorder %s30, 0
      %p103 = por %p101, %p102
      %p104 = scmp.ne.s32.totalorder %s90, %s91
      %p105 = scmp.eq.s32.totalorder %s31, 1
      %p106 = por %p104, %p105
      %p108 = scmp.ne.s32.totalorder %s91, %s107
      %p109 = scmp.eq.s32.totalorder %s31, 0
      %p110 = por %p108, %p109
      %s112 = sadd.s32 %s111, 1
      %p115 = scmp.eq.s32.totalorder %s25, 1
      %p116 = scmp.ne.s32.totalorder %s111, %s113
      %p117 = scmp.eq.s32.totalorder %s25, 0
      %p118 = por %p116, %p117
      %p119 = scmp.ne.s32.totalorder %s111, %s113
      %p120 = scmp.eq.s32.totalorder %s30, 1
      %p121 = por %p119, %p120
      %p122 = scmp.ne.s32.totalorder %s113, %s114
      %p123 = scmp.eq.s32.totalorder %s30, 0
      %p124 = por %p122, %p123
      %p125 = scmp.ne.s32.totalorder %s113, %s114
      %p126 = scmp.eq.s32.totalorder %s31, 1
      %p127 = por %p125, %p126
      %p129 = scmp.ne.s32.totalorder %s114, %s128
      %p130 = scmp.eq.s32.totalorder %s31, 0
      %p131 = por %p129, %p130
      %s133 = sadd.s32 %s132, 1
      %p136 = scmp.eq.s32.totalorder %s25, 1
      %p137 = scmp.ne.s32.totalorder %s132, %s134
      %p138 = scmp.eq.s32.totalorder %s25, 0
      %p139 = por %p137, %p138
      %p140 = scmp.ne.s32.totalorder %s132, %s134
      %p141 = scmp.eq.s32.totalorder %s30, 1
      %p142 = por %p140, %p141
      %p143 = scmp.ne.s32.totalorder %s134, %s135
      %p144 = scmp.eq.s32.totalorder %s30, 0
      %p145 = por %p143, %p144
      %p146 = scmp.ne.s32.totalorder %s134, %s135
      %p147 = scmp.eq.s32.totalorder %s31, 1
      %p148 = por %p146, %p147
      %p150 = scmp.ne.s32.totalorder %s135, %s149
      %p151 = scmp.eq.s32.totalorder %s31, 0
      %p152 = por %p150, %p151
      %s154 = sadd.s32 %s153, 1
      %p157 = scmp.eq.s32.totalorder %s25, 1
      %p158 = scmp.ne.s32.totalorder %s153, %s155
      %p159 = scmp.eq.s32.totalorder %s25, 0
      %p160 = por %p158, %p159
      %p161 = scmp.ne.s32.totalorder %s153, %s155
      %p162 = scmp.eq.s32.totalorder %s30, 1
      %p163 = por %p161, %p162
      %p164 = scmp.ne.s32.totalorder %s155, %s156
      %p165 = scmp.eq.s32.totalorder %s30, 0
      %p166 = por %p164, %p165
      %p167 = scmp.ne.s32.totalorder %s155, %s156
      %p168 = scmp.eq.s32.totalorder %s31, 1
      %p169 = por %p167, %p168
      %p171 = scmp.ne.s32.totalorder %s156, %s170
      %p172 = scmp.eq.s32.totalorder %s31, 0
      %p173 = por %p171, %p172
      %s175 = sadd.s32 %s174, 1
      %p178 = scmp.eq.s32.totalorder %s25, 1
      %p179 = scmp.ne.s32.totalorder %s174, %s176
      %p180 = scmp.eq.s32.totalorder %s25, 0
      %p181 = por %p179, %p180
      %p182 = scmp.ne.s32.totalorder %s174, %s176
      %p183 = scmp.eq.s32.totalorder %s30, 1
      %p184 = por %p182, %p183
      %p185 = scmp.ne.s32.totalorder %s176, %s177
      %p186 = scmp.eq.s32.totalorder %s30, 0
      %p187 = por %p185, %p186
      %p188 = scmp.ne.s32.totalorder %s176, %s177
      %p189 = scmp.eq.s32.totalorder %s31, 1
      %p190 = por %p188, %p189
      %p192 = scmp.ne.s32.totalorder %s177, %s191
      %p193 = scmp.eq.s32.totalorder %s31, 0
      %p194 = por %p192, %p193
      %s196 = sadd.s32 %s195, 1
      %p199 = scmp.eq.s32.totalorder %s25, 1
      %p200 = scmp.ne.s32.totalorder %s195, %s197
      %p201 = scmp.eq.s32.totalorder %s25, 0
      %p202 = por %p200, %p201
      %p203 = scmp.ne.s32.totalorder %s195, %s197
      %p204 = scmp.eq.s32.totalorder %s30, 1
      %p205 = por %p203, %p204
      %p206 = scmp.ne.s32.totalorder %s197, %s198
      %p207 = scmp.eq.s32.totalorder %s30, 0
      %p208 = por %p206, %p207
      %p209 = scmp.ne.s32.totalorder %s197, %s198
      %p210 = scmp.eq.s32.totalorder %s31, 1
      %p211 = por %p209, %p210
      %p213 = scmp.ne.s32.totalorder %s198, %s212
      %p214 = scmp.eq.s32.totalorder %s31, 0
      %p215 = por %p213, %p214
      %s217 = sadd.s32 %s216, 1
      %p220 = scmp.eq.s32.totalorder %s25, 1
      %p221 = scmp.ne.s32.totalorder %s216, %s218
      %p222 = scmp.eq.s32.totalorder %s25, 0
      %p223 = por %p221, %p222
      %p224 = scmp.ne.s32.totalorder %s216, %s218
      %p225 = scmp.eq.s32.totalorder %s30, 1
      %p226 = por %p224, %p225
      %p227 = scmp.ne.s32.totalorder %s218, %s219
      %p228 = scmp.eq.s32.totalorder %s30, 0
      %p229 = por %p227, %p228
      %p230 = scmp.ne.s32.totalorder %s218, %s219
      %p231 = scmp.eq.s32.totalorder %s31, 1
      %p232 = por %p230, %p231
      %p234 = scmp.ne.s32.totalorder %s219, %s233
      %p235 = scmp.eq.s32.totalorder %s31, 0
      %p236 = por %p234, %p235
      %s238 = sadd.s32 %s237, 1
      %p241 = scmp.eq.s32.totalorder %s25, 1
      %p242 = scmp.ne.s32.totalorder %s237, %s239
      %p243 = scmp.eq.s32.totalorder %s25, 0
      %p244 = por %p242, %p243
      %p245 = scmp.ne.s32.totalorder %s237, %s239
      %p246 = scmp.eq.s32.totalorder %s30, 1
      %p247 = por %p245, %p246
      %p248 = scmp.ne.s32.totalorder %s239, %s240
      %p249 = scmp.eq.s32.totalorder %s30, 0
      %p250 = por %p248, %p249
      %p251 = scmp.ne.s32.totalorder %s239, %s240
      %p252 = scmp.eq.s32.totalorder %s31, 1
      %p253 = por %p251, %p252
      %p255 = scmp.ne.s32.totalorder %s240, %s254
      %p256 = scmp.eq.s32.totalorder %s31, 0
      %p257 = por %p255, %p256
      %s259 = sadd.s32 %s258, 1
      %p262 = scmp.eq.s32.totalorder %s25, 1
      %p263 = scmp.ne.s32.totalorder %s258, %s260
      %p264 = scmp.eq.s32.totalorder %s25, 0
      %p265 = por %p263, %p264
      %p266 = scmp.ne.s32.totalorder %s258, %s260
      %p267 = scmp.eq.s32.totalorder %s30, 1
      %p268 = por %p266, %p267
      %p269 = scmp.ne.s32.totalorder %s260, %s261
      %p270 = scmp.eq.s32.totalorder %s30, 0
      %p271 = por %p269, %p270
      %p272 = scmp.ne.s32.totalorder %s260, %s261
      %p273 = scmp.eq.s32.totalorder %s31, 1
      %p274 = por %p272, %p273
      %p276 = scmp.ne.s32.totalorder %s261, %s275
      %p277 = scmp.eq.s32.totalorder %s31, 0
      %p278 = por %p276, %p277
      %s280 = sadd.s32 %s279, 1
      %p283 = scmp.eq.s32.totalorder %s25, 1
      %p284 = scmp.ne.s32.totalorder %s279, %s281
      %p285 = scmp.eq.s32.totalorder %s25, 0
      %p286 = por %p284, %p285
      %p287 = scmp.ne.s32.totalorder %s279, %s281
      %p288 = scmp.eq.s32.totalorder %s30, 1
      %p289 = por %p287, %p288
      %p290 = scmp.ne.s32.totalorder %s281, %s282
      %p291 = scmp.eq.s32.totalorder %s30, 0
      %p292 = por %p290, %p291
      %p293 = scmp.ne.s32.totalorder %s281, %s282
      %p294 = scmp.eq.s32.totalorder %s31, 1
      %p295 = por %p293, %p294
      %p297 = scmp.ne.s32.totalorder %s282, %s296
      %p298 = scmp.eq.s32.totalorder %s31, 0
      %p299 = por %p297, %p298
      %s301 = sadd.s32 %s300, 1
      %p304 = scmp.eq.s32.totalorder %s25, 1
      %p305 = scmp.ne.s32.totalorder %s300, %s302
      %p306 = scmp.eq.s32.totalorder %s25, 0
      %p307 = por %p305, %p306
      %p308 = scmp.ne.s32.totalorder %s300, %s302
      %p309 = scmp.eq.s32.totalorder %s30, 1
      %p310 = por %p308, %p309
      %p311 = scmp.ne.s32.totalorder %s302, %s303
      %p312 = scmp.eq.s32.totalorder %s30, 0
      %p313 = por %p311, %p312
      %p314 = scmp.ne.s32.totalorder %s302, %s303
      %p315 = scmp.eq.s32.totalorder %s31, 1
      %p316 = por %p314, %p315
      %p318 = scmp.ne.s32.totalorder %s303, %s317
      %p319 = scmp.eq.s32.totalorder %s31, 0
      %p320 = por %p318, %p319
      %s322 = sadd.s32 %s321, 1
      %p325 = scmp.eq.s32.totalorder %s25, 1
      %p326 = scmp.ne.s32.totalorder %s321, %s323
      %p327 = scmp.eq.s32.totalorder %s25, 0
      %p328 = por %p326, %p327
      %p329 = scmp.ne.s32.totalorder %s321, %s323
      %p330 = scmp.eq.s32.totalorder %s30, 1
      %p331 = por %p329, %p330
      %p332 = scmp.ne.s32.totalorder %s323, %s324
      %p333 = scmp.eq.s32.totalorder %s30, 0
      %p334 = por %p332, %p333
      %p335 = scmp.ne.s32.totalorder %s323, %s324
      %p336 = scmp.eq.s32.totalorder %s31, 1
      %p337 = por %p335, %p336
      %p339 = scmp.ne.s32.totalorder %s324, %s338
      %p340 = scmp.eq.s32.totalorder %s31, 0
      %p341 = por %p339, %p340
      %s342 = ssub.s32 %s25, %s32
      %p343 = scmp.eq.s32.totalorder %s342, 0
      %s345 = sadd.s32 %s344, 1
      %s346 = scalar_select %p343, %s344, %s345
      %p349 = pneg %p343
      %p350 = scmp.eq.s32.totalorder %s25, 1
      %p351 = por %p349, %p350
      %p352 = scmp.ne.s32.totalorder %s344, %s347
      %p353 = scmp.eq.s32.totalorder %s25, 0
      %p354 = por %p352, %p353
      %p355 = scmp.ne.s32.totalorder %s344, %s347
      %p356 = scmp.eq.s32.totalorder %s30, 1
      %p357 = por %p355, %p356
      %p358 = scmp.ne.s32.totalorder %s347, %s348
      %p359 = scmp.eq.s32.totalorder %s30, 0
      %p360 = por %p358, %p359
      %p361 = scmp.ne.s32.totalorder %s347, %s348
      %p362 = scmp.eq.s32.totalorder %s31, 1
      %p363 = por %p361, %p362
      %p365 = scmp.ne.s32.totalorder %s348, %s364
      %p366 = scmp.eq.s32.totalorder %s31, 0
      %p367 = por %p365, %p366
      %p368 = scmp.le.s32.totalorder 1, %s25
      %p369 = scmp.lt.s32.totalorder %s25, 3
      %p370 = pnand %p368, %p369
      %p371 = pneg %p370
      // Predicated region
      $region9: #{te_aug_adapter_clip_attention.5} parent=5 // pred_check
        _
      $region10: #{te_aug_adapter_clip_attention.5} parent=5 // pred_check_branch
        %373 = sbr.rel (%p370) target = $region12
      $region11: #{te_aug_adapter_clip_attention.5} parent=5 // pred_region
        %s374 = ssub.s32 %s25, 1
        // Predicated region
        $region13: #{te_aug_adapter_clip_attention.5} parent=11 // pred_check
          %p375 = pneg %p124
        $region14: #{te_aug_adapter_clip_attention.5} parent=11 // pred_check_branch
          %377 = sbr.rel (%p375) target = $region16
        $region15: #{te_aug_adapter_clip_attention.5} parent=11 // pred_region
          _
        $region16: #{te_aug_adapter_clip_attention.5} parent=11 // pred_fallthru
          _
        // Predicated region
        $region17: #{te_aug_adapter_clip_attention.5} parent=11 // pred_check
          %p378 = pneg %p145
        $region18: #{te_aug_adapter_clip_attention.5} parent=11 // pred_check_branch
          %380 = sbr.rel (%p378) target = $region20
        $region19: #{te_aug_adapter_clip_attention.5} parent=11 // pred_region
          _
        $region20: #{te_aug_adapter_clip_attention.5} parent=11 // pred_fallthru
          _
        // Predicated region
        $region21: #{te_aug_adapter_clip_attention.5} parent=11 // pred_check
          %p381 = pneg %p166
        $region22: #{te_aug_adapter_clip_attention.5} parent=11 // pred_check_branch
          %383 = sbr.rel (%p381) target = $region24
        $region23: #{te_aug_adapter_clip_attention.5} parent=11 // pred_region
          _
        $region24: #{te_aug_adapter_clip_attention.5} parent=11 // pred_fallthru
          _
        // Predicated region
        $region25: #{te_aug_adapter_clip_attention.5} parent=11 // pred_check
          %p384 = pneg %p187
        $region26: #{te_aug_adapter_clip_attention.5} parent=11 // pred_check_branch
          %386 = sbr.rel (%p384) target = $region28
        $region27: #{te_aug_adapter_clip_attention.5} parent=11 // pred_region
          _
        $region28: #{te_aug_adapter_clip_attention.5} parent=11 // pred_fallthru
          _
        // Predicated region
        $region29: #{te_aug_adapter_clip_attention.5} parent=11 // pred_check
          %p387 = pneg %p208
        $region30: #{te_aug_adapter_clip_attention.5} parent=11 // pred_check_branch
          %389 = sbr.rel (%p387) target = $region32
        $region31: #{te_aug_adapter_clip_attention.5} parent=11 // pred_region
          _
        $region32: #{te_aug_adapter_clip_attention.5} parent=11 // pred_fallthru
          _
        // Predicated region
        $region33: #{te_aug_adapter_clip_attention.5} parent=11 // pred_check
          %p390 = pneg %p229
        $region34: #{te_aug_adapter_clip_attention.5} parent=11 // pred_check_branch
          %392 = sbr.rel (%p390) target = $region36
        $region35: #{te_aug_adapter_clip_attention.5} parent=11 // pred_region
          _
        $region36: #{te_aug_adapter_clip_attention.5} parent=11 // pred_fallthru
          _
        // Predicated region
        $region37: #{te_aug_adapter_clip_attention.5} parent=11 // pred_check
          %p393 = pneg %p250
        $region38: #{te_aug_adapter_clip_attention.5} parent=11 // pred_check_branch
          %395 = sbr.rel (%p393) target = $region40
        $region39: #{te_aug_adapter_clip_attention.5} parent=11 // pred_region
          _
        $region40: #{te_aug_adapter_clip_attention.5} parent=11 // pred_fallthru
          _
        // Predicated region
        $region41: #{te_aug_adapter_clip_attention.5} parent=11 // pred_check
          %p396 = pneg %p271
        $region42: #{te_aug_adapter_clip_attention.5} parent=11 // pred_check_branch
          %398 = sbr.rel (%p396) target = $region44
        $region43: #{te_aug_adapter_clip_attention.5} parent=11 // pred_region
          _
        $region44: #{te_aug_adapter_clip_attention.5} parent=11 // pred_fallthru
          _
        // Predicated region
        $region45: #{te_aug_adapter_clip_attention.5} parent=11 // pred_check
          %p399 = pneg %p292
        $region46: #{te_aug_adapter_clip_attention.5} parent=11 // pred_check_branch
          %401 = sbr.rel (%p399) target = $region48
        $region47: #{te_aug_adapter_clip_attention.5} parent=11 // pred_region
          %s403 = ssub.s32 16, 16
          %404 = vsyncadd [#allocation4], %s403
          %s406 = sshll.u32 [#allocation3], 4
          %s407 = int_to_ptr.vmem [resolvable:$true] %s406
          %409 = dma.hbm_to_vmem [thread:$0]  %s11, 16, %s407, [#allocation4]
        $region48: #{te_aug_adapter_clip_attention.5} parent=11 // pred_fallthru
          _
        // Predicated region
        $region49: #{te_aug_adapter_clip_attention.5} parent=11 // pred_check
          %p410 = pneg %p313
        $region50: #{te_aug_adapter_clip_attention.5} parent=11 // pred_check_branch
          %412 = sbr.rel (%p410) target = $region52
        $region51: #{te_aug_adapter_clip_attention.5} parent=11 // pred_region
          _
        $region52: #{te_aug_adapter_clip_attention.5} parent=11 // pred_fallthru
          _
        // Predicated region
        $region53: #{te_aug_adapter_clip_attention.5} parent=11 // pred_check
          %p413 = pneg %p334
        $region54: #{te_aug_adapter_clip_attention.5} parent=11 // pred_check_branch
          %415 = sbr.rel (%p413) target = $region56
        $region55: #{te_aug_adapter_clip_attention.5} parent=11 // pred_region
          %s417 = ssub.s32 16, 16
          %418 = vsyncadd [#allocation7], %s417
          %s420 = sshll.u32 [#allocation6], 4
          %s421 = int_to_ptr.vmem [resolvable:$true] %s420
          %423 = dma.hbm_to_vmem [thread:$0]  %s13, 16, %s421, [#allocation7]
        $region56: #{te_aug_adapter_clip_attention.5} parent=11 // pred_fallthru
          _
      $region12: #{te_aug_adapter_clip_attention.5} parent=5 // pred_fallthru
        _
      %p424 = scmp.lt.s32.totalorder %s25, 2
      // Predicated region
      $region57: #{te_aug_adapter_clip_attention.5} parent=5 // pred_check
        %p425 = pneg %p424
      $region58: #{te_aug_adapter_clip_attention.5} parent=5 // pred_check_branch
        %427 = sbr.rel (%p425) target = $region60
      $region59: #{te_aug_adapter_clip_attention.5} parent=5 // pred_region
        // Predicated region
        $region61: #{te_aug_adapter_clip_attention.5} parent=59 // pred_check
          %p428 = pneg %p45
        $region62: #{te_aug_adapter_clip_attention.5} parent=59 // pred_check_branch
          %430 = sbr.rel (%p428) target = $region64
        $region63: #{te_aug_adapter_clip_attention.5} parent=59 // pred_region
          %p431 = scmp.lt.s32.totalorder %s25, 1
          %s432 = scalar_select %p431, %s25, 1
          %s433 = smul.addr %s432, 8
          %s434 = scalar_lea.vmem %s0, %s433
        $region64: #{te_aug_adapter_clip_attention.5} parent=59 // pred_fallthru
          _
        // Predicated region
        $region65: #{te_aug_adapter_clip_attention.5} parent=59 // pred_check
          %p435 = pneg %p71
        $region66: #{te_aug_adapter_clip_attention.5} parent=59 // pred_check_branch
          %437 = sbr.rel (%p435) target = $region68
        $region67: #{te_aug_adapter_clip_attention.5} parent=59 // pred_region
          %p438 = scmp.lt.s32.totalorder %s25, 1
          %s439 = scalar_select %p438, %s25, 1
          %s440 = smul.addr %s439, 8
          %s441 = scalar_lea.vmem %s1, %s440
        $region68: #{te_aug_adapter_clip_attention.5} parent=59 // pred_fallthru
          _
        // Predicated region
        $region69: #{te_aug_adapter_clip_attention.5} parent=59 // pred_check
          %p442 = pneg %p97
        $region70: #{te_aug_adapter_clip_attention.5} parent=59 // pred_check_branch
          %444 = sbr.rel (%p442) target = $region72
        $region71: #{te_aug_adapter_clip_attention.5} parent=59 // pred_region
          %p445 = scmp.lt.s32.totalorder %s25, 1
          %s446 = scalar_select %p445, %s25, 1
          %s447 = smul.addr %s446, 8
          %s448 = scalar_lea.vmem %s2, %s447
        $region72: #{te_aug_adapter_clip_attention.5} parent=59 // pred_fallthru
          _
      $region60: #{te_aug_adapter_clip_attention.5} parent=5 // pred_fallthru
        _
      %p449 = scmp.le.s32.totalorder 1, %s25
      %p450 = scmp.lt.s32.totalorder %s25, 3
      %p451 = pnand %p449, %p450
      %p452 = pneg %p451
      // Predicated region
      $region73: #{te_aug_adapter_clip_attention.5} parent=5 // pred_check
        _
      $region74: #{te_aug_adapter_clip_attention.5} parent=5 // pred_check_branch
        %454 = sbr.rel (%p451) target = $region76
      $region75: #{te_aug_adapter_clip_attention.5} parent=5 // pred_region
        %s455 = ssub.s32 %s25, 1
        // Predicated region
        $region77: #{te_aug_adapter_clip_attention.5} parent=75 // pred_check
          %p456 = pneg %p292
        $region78: #{te_aug_adapter_clip_attention.5} parent=75 // pred_check_branch
          %458 = sbr.rel (%p456) target = $region80
        $region79: #{te_aug_adapter_clip_attention.5} parent=75 // pred_region
          %459 = dma.done [#allocation4], 16
        $region80: #{te_aug_adapter_clip_attention.5} parent=75 // pred_fallthru
          _
        // Predicated region
        $region81: #{te_aug_adapter_clip_attention.5} parent=75 // pred_check
          %p460 = pneg %p334
        $region82: #{te_aug_adapter_clip_attention.5} parent=75 // pred_check_branch
          %462 = sbr.rel (%p460) target = $region84
        $region83: #{te_aug_adapter_clip_attention.5} parent=75 // pred_region
          %463 = dma.done [#allocation7], 16
        $region84: #{te_aug_adapter_clip_attention.5} parent=75 // pred_fallthru
          _
        %p464 = scmp.lt.s32.totalorder %s30, 1
        %s465 = scalar_select %p464, %s30, 1
        %s466 = smul.addr %s465, 8
        %s467 = scalar_lea.vmem %s0, %s466
        %p468 = pneg %p51
        %p469 = pneg %p48
        %p470 = scmp.lt.s32.totalorder %s30, 1
        %s471 = scalar_select %p470, %s30, 1
        %s472 = smul.addr %s471, 8
        %s473 = scalar_lea.vmem %s1, %s472
        %p474 = pneg %p77
        %p475 = pneg %p74
        %p476 = scmp.lt.s32.totalorder %s30, 1
        %s477 = scalar_select %p476, %s30, 1
        %s478 = smul.addr %s477, 8
        %s479 = scalar_lea.vmem %s2, %s478
        %p480 = pneg %p103
        %p481 = pneg %p100
        %p482 = pneg %p124
        %p483 = pneg %p121
        %p484 = pneg %p145
        %p485 = pneg %p142
        %p486 = pneg %p166
        %p487 = pneg %p163
        %p488 = pneg %p187
        %p489 = pneg %p184
        %p490 = pneg %p208
        %p491 = pneg %p205
        %p492 = pneg %p229
        %p493 = pneg %p226
        %p494 = pneg %p250
        %p495 = pneg %p247
        %p496 = pneg %p271
        %p497 = pneg %p268
        %p498 = pneg %p292
        %p499 = pneg %p289
        %p500 = pneg %p313
        %p501 = pneg %p310
        %p502 = pneg %p334
        %p503 = pneg %p331
        %p504 = pneg %p360
        %p505 = pneg %p357
        %s506 = sand.u32 %s347, 1
        %s507 = scalar_lea.sflag [#allocation5], %s506
        %s508 = sand.u32 %s347, 1
        %s509 = smul.addr %s508, 8
        %s510 = scalar_lea.vmem [#allocation8], %s509
        %p511 = scmp.lt.s32.totalorder %s30, 1
        %s512 = scalar_select %p511, %s30, 1
        %s513 = smul.addr %s512, 8
        %s514 = scalar_lea.vmem %s0, %s513
        %p515 = scmp.lt.s32.totalorder %s30, 1
        %s516 = scalar_select %p515, %s30, 1
        %s517 = smul.addr %s516, 8
        %s518 = scalar_lea.vmem %s1, %s517
        %p519 = scmp.lt.s32.totalorder %s30, 1
        %s520 = scalar_select %p519, %s30, 1
        %s521 = smul.addr %s520, 8
        %s522 = scalar_lea.vmem %s2, %s521
        %v524 = vld [vmem:[%s514] sm:$0xff]
        %v525 = vpack.c.bf16 %v524, %v524
        %v526 = vld [vmem:[%s518] sm:$0xff]
        %v527 = vpack.c.bf16 %v526, %v526
        %v528 = vld [vmem:[%s522] sm:$0xff]
        %530 = vrot.lane.b32.xlu0 %v525, 96
        %v531 = vpop.permute.xlu0 %530
        %vm532 = vcmask 64512
        %v534 = vsel %vm532, %v525, 0
        %v537 = vsel %vm532, %v531, 0
        %539 = vmatprep.subr.bf16.mxu0 0
        %540 = vmatpush1.bf16.xpose.msra.mxu0 0
        %541 = vmatprep.subr.bf16.mxu0 0
        %542 = vmatpush1.bf16.xpose.msra.mxu0 0
        %543 = vmatprep.subr.bf16.mxu0 0
        %544 = vmatpush1.bf16.xpose.msra.mxu0 0
        %545 = vmatprep.subr.bf16.mxu0 0
        %546 = vmatpush1.bf16.xpose.msra.mxu0 0
        %547 = vmatprep.subr.bf16.mxu0 0
        %548 = vmatpush1.bf16.xpose.msra.mxu0 0
        %549 = vmatprep.subr.bf16.mxu0 0
        %550 = vmatpush1.bf16.xpose.msra.mxu0 0
        %551 = vmatprep.subr.bf16.mxu0 0
        %552 = vmatpush1.bf16.xpose.msra.mxu0 0
        %553 = vmatprep.subr.bf16.mxu0 0
        %554 = vmatpush1.bf16.xpose.msra.mxu0 %v537
        %555 = vmatprep.subr.bf16.mxu0 0
        %556 = vmatpush2.bf16.xpose.msra.mxu0 0
        %557 = vmatprep.subr.bf16.mxu0 0
        %558 = vmatpush2.bf16.xpose.msra.mxu0 0
        %559 = vmatprep.subr.bf16.mxu0 0
        %560 = vmatpush2.bf16.xpose.msra.mxu0 0
        %561 = vmatprep.subr.bf16.mxu0 0
        %562 = vmatpush2.bf16.xpose.msra.mxu0 0
        %563 = vmatprep.subr.bf16.mxu0 0
        %564 = vmatpush2.bf16.xpose.msra.mxu0 0
        %565 = vmatprep.subr.bf16.mxu0 0
        %566 = vmatpush2.bf16.xpose.msra.mxu0 0
        %567 = vmatprep.subr.bf16.mxu0 0
        %568 = vmatpush2.bf16.xpose.msra.mxu0 0
        %569 = vmatprep.subr.bf16.mxu0 0
        %570 = vmatpush2.bf16.xpose.msra.mxu0 0
        %571 = vmatprep.mubr.bf16.mxu0 0
        %572 = vmatmul.mubr.bf16.gmra.mxu0 %v534
        %v573 = vpop.f32.mrf.mxu0
        %v574 = vadd.f32 %v528, %v573
        %v575 = vpop.f32.mrf.mxu0
        %v576 = vpop.f32.mrf.mxu0
        %v577 = vpop.f32.mrf.mxu0
        %578 = vdwg.mxu0
        %v579 = vsel %vm532, %v574, -inf
        %580 = vmax.xlane.f32.xlu0 %v579
        %v581 = vpop.xlane.xlu0 %580
        %v582 = vsub.f32 %v574, %v581
        %v583 = vmul.f32 %v582, 1.442695
        %v584 = vpow.pop %v583
        %v585 = vsel %vm532, %v584, 0.0
        %586 = vadd.xlane.f32.xlu0 %v585
        %v587 = vpop.xlane.xlu0 %586
        %v588 = vrcp.pop %v587
        %v589 = vmul.f32 %v584, %v588
        %v590 = vpack.c.bf16 %v589, %v589
        %591 = vrot.lane.b32.xlu0 %v525, 64
        %v592 = vpop.permute.xlu0 %591
        %v594 = vsel %vm532, %v590, 0
        %vm596 = vcmask 1043456
        %v598 = vsel %vm596, %v592, 0
        %600 = vmatprep.subr.bf16.mxu0 0
        %601 = vmatpush1.bf16.msra.mxu0 0
        %602 = vmatprep.subr.bf16.mxu0 0
        %603 = vmatpush1.bf16.msra.mxu0 0
        %604 = vmatprep.subr.bf16.mxu0 0
        %605 = vmatpush1.bf16.msra.mxu0 0
        %606 = vmatprep.subr.bf16.mxu0 0
        %607 = vmatpush1.bf16.msra.mxu0 0
        %608 = vmatprep.subr.bf16.mxu0 0
        %609 = vmatpush1.bf16.msra.mxu0 0
        %610 = vmatprep.subr.bf16.mxu0 0
        %611 = vmatpush1.bf16.msra.mxu0 0
        %612 = vmatprep.subr.bf16.mxu0 0
        %613 = vmatpush1.bf16.msra.mxu0 0
        %614 = vmatprep.subr.bf16.mxu0 0
        %615 = vmatpush1.bf16.msra.mxu0 %v598
        %616 = vmatprep.subr.bf16.mxu0 0
        %617 = vmatpush2.bf16.msra.mxu0 0
        %618 = vmatprep.subr.bf16.mxu0 0
        %619 = vmatpush2.bf16.msra.mxu0 0
        %620 = vmatprep.subr.bf16.mxu0 0
        %621 = vmatpush2.bf16.msra.mxu0 0
        %622 = vmatprep.subr.bf16.mxu0 0
        %623 = vmatpush2.bf16.msra.mxu0 0
        %624 = vmatprep.subr.bf16.mxu0 0
        %625 = vmatpush2.bf16.msra.mxu0 0
        %626 = vmatprep.subr.bf16.mxu0 0
        %627 = vmatpush2.bf16.msra.mxu0 0
        %628 = vmatprep.subr.bf16.mxu0 0
        %629 = vmatpush2.bf16.msra.mxu0 0
        %630 = vmatprep.subr.bf16.mxu0 0
        %631 = vmatpush2.bf16.msra.mxu0 0
        %632 = vmatprep.mubr.bf16.mxu0 0
        %633 = vmatmul.mubr.bf16.gmra.mxu0 %v594
        %v634 = vpop.f32.mrf.mxu0
        %v635 = vadd.f32 0.0, %v634
        %v636 = vpop.f32.mrf.mxu0
        %v637 = vpop.f32.mrf.mxu0
        %v638 = vpop.f32.mrf.mxu0
        %639 = vdwg.mxu0
        %v641 = vsel %vm532, %v527, 0
        %643 = vmatprep.subr.bf16.mxu0 0
        %644 = vmatpush1.bf16.xpose.msra.mxu0 0
        %645 = vmatprep.subr.bf16.mxu0 0
        %646 = vmatpush1.bf16.xpose.msra.mxu0 0
        %647 = vmatprep.subr.bf16.mxu0 0
        %648 = vmatpush1.bf16.xpose.msra.mxu0 0
        %649 = vmatprep.subr.bf16.mxu0 0
        %650 = vmatpush1.bf16.xpose.msra.mxu0 0
        %651 = vmatprep.subr.bf16.mxu0 0
        %652 = vmatpush1.bf16.xpose.msra.mxu0 0
        %653 = vmatprep.subr.bf16.mxu0 0
        %654 = vmatpush1.bf16.xpose.msra.mxu0 0
        %655 = vmatprep.subr.bf16.mxu0 0
        %656 = vmatpush1.bf16.xpose.msra.mxu0 0
        %657 = vmatprep.subr.bf16.mxu0 0
        %658 = vmatpush1.bf16.xpose.msra.mxu0 %v641
        %659 = vmatprep.subr.bf16.mxu0 0
        %660 = vmatpush2.bf16.xpose.msra.mxu0 0
        %661 = vmatprep.subr.bf16.mxu0 0
        %662 = vmatpush2.bf16.xpose.msra.mxu0 0
        %663 = vmatprep.subr.bf16.mxu0 0
        %664 = vmatpush2.bf16.xpose.msra.mxu0 0
        %665 = vmatprep.subr.bf16.mxu0 0
        %666 = vmatpush2.bf16.xpose.msra.mxu0 0
        %667 = vmatprep.subr.bf16.mxu0 0
        %668 = vmatpush2.bf16.xpose.msra.mxu0 0
        %669 = vmatprep.subr.bf16.mxu0 0
        %670 = vmatpush2.bf16.xpose.msra.mxu0 0
        %671 = vmatprep.subr.bf16.mxu0 0
        %672 = vmatpush2.bf16.xpose.msra.mxu0 0
        %673 = vmatprep.subr.bf16.mxu0 0
        %674 = vmatpush2.bf16.xpose.msra.mxu0 0
        %675 = vmatprep.mubr.bf16.mxu0 0
        %676 = vmatmul.mubr.bf16.gmra.mxu0 %v534
        %v677 = vpop.f32.mrf.mxu0
        %v678 = vadd.f32 0.0, %v677
        %v679 = vpop.f32.mrf.mxu0
        %v680 = vpop.f32.mrf.mxu0
        %v681 = vpop.f32.mrf.mxu0
        %682 = vdwg.mxu0
        %v683 = vsel %vm532, %v678, -inf
        %684 = vmax.xlane.f32.xlu0 %v683
        %v685 = vpop.xlane.xlu0 %684
        %v686 = vsub.f32 %v678, %v685
        %v687 = vmul.f32 %v686, 1.442695
        %v688 = vpow.pop %v687
        %v689 = vsel %vm532, %v688, 0.0
        %690 = vadd.xlane.f32.xlu0 %v689
        %v691 = vpop.xlane.xlu0 %690
        %v692 = vrcp.pop %v691
        %v693 = vmul.f32 %v688, %v692
        %v694 = vpack.c.bf16 %v693, %v693
        %696 = vrot.lane.b32.xlu0 %v527, 96
        %v697 = vpop.permute.xlu0 %696
        %v699 = vsel %vm532, %v694, 0
        %v702 = vsel %vm596, %v697, 0
        %704 = vmatprep.subr.bf16.mxu0 0
        %705 = vmatpush1.bf16.msra.mxu0 0
        %706 = vmatprep.subr.bf16.mxu0 0
        %707 = vmatpush1.bf16.msra.mxu0 0
        %708 = vmatprep.subr.bf16.mxu0 0
        %709 = vmatpush1.bf16.msra.mxu0 0
        %710 = vmatprep.subr.bf16.mxu0 0
        %711 = vmatpush1.bf16.msra.mxu0 0
        %712 = vmatprep.subr.bf16.mxu0 0
        %713 = vmatpush1.bf16.msra.mxu0 0
        %714 = vmatprep.subr.bf16.mxu0 0
        %715 = vmatpush1.bf16.msra.mxu0 0
        %716 = vmatprep.subr.bf16.mxu0 0
        %717 = vmatpush1.bf16.msra.mxu0 0
        %718 = vmatprep.subr.bf16.mxu0 0
        %719 = vmatpush1.bf16.msra.mxu0 %v702
        %720 = vmatprep.subr.bf16.mxu0 0
        %721 = vmatpush2.bf16.msra.mxu0 0
        %722 = vmatprep.subr.bf16.mxu0 0
        %723 = vmatpush2.bf16.msra.mxu0 0
        %724 = vmatprep.subr.bf16.mxu0 0
        %725 = vmatpush2.bf16.msra.mxu0 0
        %726 = vmatprep.subr.bf16.mxu0 0
        %727 = vmatpush2.bf16.msra.mxu0 0
        %728 = vmatprep.subr.bf16.mxu0 0
        %729 = vmatpush2.bf16.msra.mxu0 0
        %730 = vmatprep.subr.bf16.mxu0 0
        %731 = vmatpush2.bf16.msra.mxu0 0
        %732 = vmatprep.subr.bf16.mxu0 0
        %733 = vmatpush2.bf16.msra.mxu0 0
        %734 = vmatprep.subr.bf16.mxu0 0
        %735 = vmatpush2.bf16.msra.mxu0 0
        %736 = vmatprep.mubr.bf16.mxu0 0
        %737 = vmatmul.mubr.bf16.gmra.mxu0 %v699
        %v738 = vpop.f32.mrf.mxu0
        %v739 = vadd.f32 0.0, %v738
        %v740 = vpop.f32.mrf.mxu0
        %v741 = vpop.f32.mrf.mxu0
        %v742 = vpop.f32.mrf.mxu0
        %743 = vdwg.mxu0
        %744 = vrot.lane.b32.xlu0 %v525, 120
        %v745 = vpop.permute.xlu0 %744
        %746 = vrot.lane.b32.xlu0 %v525, 88
        %v747 = vpop.permute.xlu0 %746
        %v749 = vsel %vm532, %v745, 0
        %v752 = vsel %vm532, %v747, 0
        %754 = vmatprep.subr.bf16.mxu0 0
        %755 = vmatpush1.bf16.xpose.msra.mxu0 0
        %756 = vmatprep.subr.bf16.mxu0 0
        %757 = vmatpush1.bf16.xpose.msra.mxu0 0
        %758 = vmatprep.subr.bf16.mxu0 0
        %759 = vmatpush1.bf16.xpose.msra.mxu0 0
        %760 = vmatprep.subr.bf16.mxu0 0
        %761 = vmatpush1.bf16.xpose.msra.mxu0 0
        %762 = vmatprep.subr.bf16.mxu0 0
        %763 = vmatpush1.bf16.xpose.msra.mxu0 0
        %764 = vmatprep.subr.bf16.mxu0 0
        %765 = vmatpush1.bf16.xpose.msra.mxu0 0
        %766 = vmatprep.subr.bf16.mxu0 0
        %767 = vmatpush1.bf16.xpose.msra.mxu0 0
        %768 = vmatprep.subr.bf16.mxu0 0
        %769 = vmatpush1.bf16.xpose.msra.mxu0 %v752
        %770 = vmatprep.subr.bf16.mxu0 0
        %771 = vmatpush2.bf16.xpose.msra.mxu0 0
        %772 = vmatprep.subr.bf16.mxu0 0
        %773 = vmatpush2.bf16.xpose.msra.mxu0 0
        %774 = vmatprep.subr.bf16.mxu0 0
        %775 = vmatpush2.bf16.xpose.msra.mxu0 0
        %776 = vmatprep.subr.bf16.mxu0 0
        %777 = vmatpush2.bf16.xpose.msra.mxu0 0
        %778 = vmatprep.subr.bf16.mxu0 0
        %779 = vmatpush2.bf16.xpose.msra.mxu0 0
        %780 = vmatprep.subr.bf16.mxu0 0
        %781 = vmatpush2.bf16.xpose.msra.mxu0 0
        %782 = vmatprep.subr.bf16.mxu0 0
        %783 = vmatpush2.bf16.xpose.msra.mxu0 0
        %784 = vmatprep.subr.bf16.mxu0 0
        %785 = vmatpush2.bf16.xpose.msra.mxu0 0
        %786 = vmatprep.mubr.bf16.mxu0 0
        %787 = vmatmul.mubr.bf16.gmra.mxu0 %v749
        %v788 = vpop.f32.mrf.mxu0
        %v789 = vadd.f32 %v528, %v788
        %v790 = vpop.f32.mrf.mxu0
        %v791 = vpop.f32.mrf.mxu0
        %v792 = vpop.f32.mrf.mxu0
        %793 = vdwg.mxu0
        %v794 = vsel %vm532, %v789, -inf
        %795 = vmax.xlane.f32.xlu0 %v794
        %v796 = vpop.xlane.xlu0 %795
        %v797 = vsub.f32 %v789, %v796
        %v798 = vmul.f32 %v797, 1.442695
        %v799 = vpow.pop %v798
        %v800 = vsel %vm532, %v799, 0.0
        %801 = vadd.xlane.f32.xlu0 %v800
        %v802 = vpop.xlane.xlu0 %801
        %v803 = vrcp.pop %v802
        %v804 = vmul.f32 %v799, %v803
        %v805 = vpack.c.bf16 %v804, %v804
        %806 = vrot.lane.b32.xlu0 %v525, 56
        %v807 = vpop.permute.xlu0 %806
        %v809 = vsel %vm532, %v805, 0
        %v812 = vsel %vm596, %v807, 0
        %814 = vmatprep.subr.bf16.mxu0 0
        %815 = vmatpush1.bf16.msra.mxu0 0
        %816 = vmatprep.subr.bf16.mxu0 0
        %817 = vmatpush1.bf16.msra.mxu0 0
        %818 = vmatprep.subr.bf16.mxu0 0
        %819 = vmatpush1.bf16.msra.mxu0 0
        %820 = vmatprep.subr.bf16.mxu0 0
        %821 = vmatpush1.bf16.msra.mxu0 0
        %822 = vmatprep.subr.bf16.mxu0 0
        %823 = vmatpush1.bf16.msra.mxu0 0
        %824 = vmatprep.subr.bf16.mxu0 0
        %825 = vmatpush1.bf16.msra.mxu0 0
        %826 = vmatprep.subr.bf16.mxu0 0
        %827 = vmatpush1.bf16.msra.mxu0 0
        %828 = vmatprep.subr.bf16.mxu0 0
        %829 = vmatpush1.bf16.msra.mxu0 %v812
        %830 = vmatprep.subr.bf16.mxu0 0
        %831 = vmatpush2.bf16.msra.mxu0 0
        %832 = vmatprep.subr.bf16.mxu0 0
        %833 = vmatpush2.bf16.msra.mxu0 0
        %834 = vmatprep.subr.bf16.mxu0 0
        %835 = vmatpush2.bf16.msra.mxu0 0
        %836 = vmatprep.subr.bf16.mxu0 0
        %837 = vmatpush2.bf16.msra.mxu0 0
        %838 = vmatprep.subr.bf16.mxu0 0
        %839 = vmatpush2.bf16.msra.mxu0 0
        %840 = vmatprep.subr.bf16.mxu0 0
        %841 = vmatpush2.bf16.msra.mxu0 0
        %842 = vmatprep.subr.bf16.mxu0 0
        %843 = vmatpush2.bf16.msra.mxu0 0
        %844 = vmatprep.subr.bf16.mxu0 0
        %845 = vmatpush2.bf16.msra.mxu0 0
        %846 = vmatprep.mubr.bf16.mxu0 0
        %847 = vmatmul.mubr.bf16.gmra.mxu0 %v809
        %v848 = vpop.f32.mrf.mxu0
        %v849 = vadd.f32 0.0, %v848
        %v850 = vpop.f32.mrf.mxu0
        %v851 = vpop.f32.mrf.mxu0
        %v852 = vpop.f32.mrf.mxu0
        %853 = vdwg.mxu0
        %854 = vrot.lane.b32.xlu0 %v527, 120
        %v855 = vpop.permute.xlu0 %854
        %v857 = vsel %vm532, %v855, 0
        %859 = vmatprep.subr.bf16.mxu0 0
        %860 = vmatpush1.bf16.xpose.msra.mxu0 0
        %861 = vmatprep.subr.bf16.mxu0 0
        %862 = vmatpush1.bf16.xpose.msra.mxu0 0
        %863 = vmatprep.subr.bf16.mxu0 0
        %864 = vmatpush1.bf16.xpose.msra.mxu0 0
        %865 = vmatprep.subr.bf16.mxu0 0
        %866 = vmatpush1.bf16.xpose.msra.mxu0 0
        %867 = vmatprep.subr.bf16.mxu0 0
        %868 = vmatpush1.bf16.xpose.msra.mxu0 0
        %869 = vmatprep.subr.bf16.mxu0 0
        %870 = vmatpush1.bf16.xpose.msra.mxu0 0
        %871 = vmatprep.subr.bf16.mxu0 0
        %872 = vmatpush1.bf16.xpose.msra.mxu0 0
        %873 = vmatprep.subr.bf16.mxu0 0
        %874 = vmatpush1.bf16.xpose.msra.mxu0 %v857
        %875 = vmatprep.subr.bf16.mxu0 0
        %876 = vmatpush2.bf16.xpose.msra.mxu0 0
        %877 = vmatprep.subr.bf16.mxu0 0
        %878 = vmatpush2.bf16.xpose.msra.mxu0 0
        %879 = vmatprep.subr.bf16.mxu0 0
        %880 = vmatpush2.bf16.xpose.msra.mxu0 0
        %881 = vmatprep.subr.bf16.mxu0 0
        %882 = vmatpush2.bf16.xpose.msra.mxu0 0
        %883 = vmatprep.subr.bf16.mxu0 0
        %884 = vmatpush2.bf16.xpose.msra.mxu0 0
        %885 = vmatprep.subr.bf16.mxu0 0
        %886 = vmatpush2.bf16.xpose.msra.mxu0 0
        %887 = vmatprep.subr.bf16.mxu0 0
        %888 = vmatpush2.bf16.xpose.msra.mxu0 0
        %889 = vmatprep.subr.bf16.mxu0 0
        %890 = vmatpush2.bf16.xpose.msra.mxu0 0
        %891 = vmatprep.mubr.bf16.mxu0 0
        %892 = vmatmul.mubr.bf16.gmra.mxu0 %v749
        %v893 = vpop.f32.mrf.mxu0
        %v894 = vadd.f32 0.0, %v893
        %v895 = vpop.f32.mrf.mxu0
        %v896 = vpop.f32.mrf.mxu0
        %v897 = vpop.f32.mrf.mxu0
        %898 = vdwg.mxu0
        %v899 = vsel %vm532, %v894, -inf
        %900 = vmax.xlane.f32.xlu0 %v899
        %v901 = vpop.xlane.xlu0 %900
        %v902 = vsub.f32 %v894, %v901
        %v903 = vmul.f32 %v902, 1.442695
        %v904 = vpow.pop %v903
        %v905 = vsel %vm532, %v904, 0.0
        %906 = vadd.xlane.f32.xlu0 %v905
        %v907 = vpop.xlane.xlu0 %906
        %v908 = vrcp.pop %v907
        %v909 = vmul.f32 %v904, %v908
        %v910 = vpack.c.bf16 %v909, %v909
        %911 = vrot.lane.b32.xlu0 %v527, 88
        %v912 = vpop.permute.xlu0 %911
        %v914 = vsel %vm532, %v910, 0
        %v917 = vsel %vm596, %v912, 0
        %919 = vmatprep.subr.bf16.mxu0 0
        %920 = vmatpush1.bf16.msra.mxu0 0
        %921 = vmatprep.subr.bf16.mxu0 0
        %922 = vmatpush1.bf16.msra.mxu0 0
        %923 = vmatprep.subr.bf16.mxu0 0
        %924 = vmatpush1.bf16.msra.mxu0 0
        %925 = vmatprep.subr.bf16.mxu0 0
        %926 = vmatpush1.bf16.msra.mxu0 0
        %927 = vmatprep.subr.bf16.mxu0 0
        %928 = vmatpush1.bf16.msra.mxu0 0
        %929 = vmatprep.subr.bf16.mxu0 0
        %930 = vmatpush1.bf16.msra.mxu0 0
        %931 = vmatprep.subr.bf16.mxu0 0
        %932 = vmatpush1.bf16.msra.mxu0 0
        %933 = vmatprep.subr.bf16.mxu0 0
        %934 = vmatpush1.bf16.msra.mxu0 %v917
        %935 = vmatprep.subr.bf16.mxu0 0
        %936 = vmatpush2.bf16.msra.mxu0 0
        %937 = vmatprep.subr.bf16.mxu0 0
        %938 = vmatpush2.bf16.msra.mxu0 0
        %939 = vmatprep.subr.bf16.mxu0 0
        %940 = vmatpush2.bf16.msra.mxu0 0
        %941 = vmatprep.subr.bf16.mxu0 0
        %942 = vmatpush2.bf16.msra.mxu0 0
        %943 = vmatprep.subr.bf16.mxu0 0
        %944 = vmatpush2.bf16.msra.mxu0 0
        %945 = vmatprep.subr.bf16.mxu0 0
        %946 = vmatpush2.bf16.msra.mxu0 0
        %947 = vmatprep.subr.bf16.mxu0 0
        %948 = vmatpush2.bf16.msra.mxu0 0
        %949 = vmatprep.subr.bf16.mxu0 0
        %950 = vmatpush2.bf16.msra.mxu0 0
        %951 = vmatprep.mubr.bf16.mxu0 0
        %952 = vmatmul.mubr.bf16.gmra.mxu0 %v914
        %v953 = vpop.f32.mrf.mxu0
        %v954 = vadd.f32 0.0, %v953
        %v955 = vpop.f32.mrf.mxu0
        %v956 = vpop.f32.mrf.mxu0
        %v957 = vpop.f32.mrf.mxu0
        %958 = vdwg.mxu0
        %959 = vrot.lane.b32.xlu0 %v525, 112
        %v960 = vpop.permute.xlu0 %959
        %961 = vrot.lane.b32.xlu0 %v525, 80
        %v962 = vpop.permute.xlu0 %961
        %v964 = vsel %vm532, %v960, 0
        %v967 = vsel %vm532, %v962, 0
        %969 = vmatprep.subr.bf16.mxu0 0
        %970 = vmatpush1.bf16.xpose.msra.mxu0 0
        %971 = vmatprep.subr.bf16.mxu0 0
        %972 = vmatpush1.bf16.xpose.msra.mxu0 0
        %973 = vmatprep.subr.bf16.mxu0 0
        %974 = vmatpush1.bf16.xpose.msra.mxu0 0
        %975 = vmatprep.subr.bf16.mxu0 0
        %976 = vmatpush1.bf16.xpose.msra.mxu0 0
        %977 = vmatprep.subr.bf16.mxu0 0
        %978 = vmatpush1.bf16.xpose.msra.mxu0 0
        %979 = vmatprep.subr.bf16.mxu0 0
        %980 = vmatpush1.bf16.xpose.msra.mxu0 0
        %981 = vmatprep.subr.bf16.mxu0 0
        %982 = vmatpush1.bf16.xpose.msra.mxu0 0
        %983 = vmatprep.subr.bf16.mxu0 0
        %984 = vmatpush1.bf16.xpose.msra.mxu0 %v967
        %985 = vmatprep.subr.bf16.mxu0 0
        %986 = vmatpush2.bf16.xpose.msra.mxu0 0
        %987 = vmatprep.subr.bf16.mxu0 0
        %988 = vmatpush2.bf16.xpose.msra.mxu0 0
        %989 = vmatprep.subr.bf16.mxu0 0
        %990 = vmatpush2.bf16.xpose.msra.mxu0 0
        %991 = vmatprep.subr.bf16.mxu0 0
        %992 = vmatpush2.bf16.xpose.msra.mxu0 0
        %993 = vmatprep.subr.bf16.mxu0 0
        %994 = vmatpush2.bf16.xpose.msra.mxu0 0
        %995 = vmatprep.subr.bf16.mxu0 0
        %996 = vmatpush2.bf16.xpose.msra.mxu0 0
        %997 = vmatprep.subr.bf16.mxu0 0
        %998 = vmatpush2.bf16.xpose.msra.mxu0 0
        %999 = vmatprep.subr.bf16.mxu0 0
        %1000 = vmatpush2.bf16.xpose.msra.mxu0 0
        %1001 = vmatprep.mubr.bf16.mxu0 0
        %1002 = vmatmul.mubr.bf16.gmra.mxu0 %v964
        %v1003 = vpop.f32.mrf.mxu0
        %v1004 = vadd.f32 %v528, %v1003
        %v1005 = vpop.f32.mrf.mxu0
        %v1006 = vpop.f32.mrf.mxu0
        %v1007 = vpop.f32.mrf.mxu0
        %1008 = vdwg.mxu0
        %v1009 = vsel %vm532, %v1004, -inf
        %1010 = vmax.xlane.f32.xlu0 %v1009
        %v1011 = vpop.xlane.xlu0 %1010
        %v1012 = vsub.f32 %v1004, %v1011
        %v1013 = vmul.f32 %v1012, 1.442695
        %v1014 = vpow.pop %v1013
        %v1015 = vsel %vm532, %v1014, 0.0
        %1016 = vadd.xlane.f32.xlu0 %v1015
        %v1017 = vpop.xlane.xlu0 %1016
        %v1018 = vrcp.pop %v1017
        %v1019 = vmul.f32 %v1014, %v1018
        %v1020 = vpack.c.bf16 %v1019, %v1019
        %1021 = vrot.lane.b32.xlu0 %v525, 48
        %v1022 = vpop.permute.xlu0 %1021
        %v1024 = vsel %vm532, %v1020, 0
        %v1027 = vsel %vm596, %v1022, 0
        %1029 = vmatprep.subr.bf16.mxu0 0
        %1030 = vmatpush1.bf16.msra.mxu0 0
        %1031 = vmatprep.subr.bf16.mxu0 0
        %1032 = vmatpush1.bf16.msra.mxu0 0
        %1033 = vmatprep.subr.bf16.mxu0 0
        %1034 = vmatpush1.bf16.msra.mxu0 0
        %1035 = vmatprep.subr.bf16.mxu0 0
        %1036 = vmatpush1.bf16.msra.mxu0 0
        %1037 = vmatprep.subr.bf16.mxu0 0
        %1038 = vmatpush1.bf16.msra.mxu0 0
        %1039 = vmatprep.subr.bf16.mxu0 0
        %1040 = vmatpush1.bf16.msra.mxu0 0
        %1041 = vmatprep.subr.bf16.mxu0 0
        %1042 = vmatpush1.bf16.msra.mxu0 0
        %1043 = vmatprep.subr.bf16.mxu0 0
        %1044 = vmatpush1.bf16.msra.mxu0 %v1027
        %1045 = vmatprep.subr.bf16.mxu0 0
        %1046 = vmatpush2.bf16.msra.mxu0 0
        %1047 = vmatprep.subr.bf16.mxu0 0
        %1048 = vmatpush2.bf16.msra.mxu0 0
        %1049 = vmatprep.subr.bf16.mxu0 0
        %1050 = vmatpush2.bf16.msra.mxu0 0
        %1051 = vmatprep.subr.bf16.mxu0 0
        %1052 = vmatpush2.bf16.msra.mxu0 0
        %1053 = vmatprep.subr.bf16.mxu0 0
        %1054 = vmatpush2.bf16.msra.mxu0 0
        %1055 = vmatprep.subr.bf16.mxu0 0
        %1056 = vmatpush2.bf16.msra.mxu0 0
        %1057 = vmatprep.subr.bf16.mxu0 0
        %1058 = vmatpush2.bf16.msra.mxu0 0
        %1059 = vmatprep.subr.bf16.mxu0 0
        %1060 = vmatpush2.bf16.msra.mxu0 0
        %1061 = vmatprep.mubr.bf16.mxu0 0
        %1062 = vmatmul.mubr.bf16.gmra.mxu0 %v1024
        %v1063 = vpop.f32.mrf.mxu0
        %v1064 = vadd.f32 0.0, %v1063
        %v1065 = vpop.f32.mrf.mxu0
        %v1066 = vpop.f32.mrf.mxu0
        %v1067 = vpop.f32.mrf.mxu0
        %1068 = vdwg.mxu0
        %1069 = vrot.lane.b32.xlu0 %v527, 112
        %v1070 = vpop.permute.xlu0 %1069
        %v1072 = vsel %vm532, %v1070, 0
        %1074 = vmatprep.subr.bf16.mxu0 0
        %1075 = vmatpush1.bf16.xpose.msra.mxu0 0
        %1076 = vmatprep.subr.bf16.mxu0 0
        %1077 = vmatpush1.bf16.xpose.msra.mxu0 0
        %1078 = vmatprep.subr.bf16.mxu0 0
        %1079 = vmatpush1.bf16.xpose.msra.mxu0 0
        %1080 = vmatprep.subr.bf16.mxu0 0
        %1081 = vmatpush1.bf16.xpose.msra.mxu0 0
        %1082 = vmatprep.subr.bf16.mxu0 0
        %1083 = vmatpush1.bf16.xpose.msra.mxu0 0
        %1084 = vmatprep.subr.bf16.mxu0 0
        %1085 = vmatpush1.bf16.xpose.msra.mxu0 0
        %1086 = vmatprep.subr.bf16.mxu0 0
        %1087 = vmatpush1.bf16.xpose.msra.mxu0 0
        %1088 = vmatprep.subr.bf16.mxu0 0
        %1089 = vmatpush1.bf16.xpose.msra.mxu0 %v1072
        %1090 = vmatprep.subr.bf16.mxu0 0
        %1091 = vmatpush2.bf16.xpose.msra.mxu0 0
        %1092 = vmatprep.subr.bf16.mxu0 0
        %1093 = vmatpush2.bf16.xpose.msra.mxu0 0
        %1094 = vmatprep.subr.bf16.mxu0 0
        %1095 = vmatpush2.bf16.xpose.msra.mxu0 0
        %1096 = vmatprep.subr.bf16.mxu0 0
        %1097 = vmatpush2.bf16.xpose.msra.mxu0 0
        %1098 = vmatprep.subr.bf16.mxu0 0
        %1099 = vmatpush2.bf16.xpose.msra.mxu0 0
        %1100 = vmatprep.subr.bf16.mxu0 0
        %1101 = vmatpush2.bf16.xpose.msra.mxu0 0
        %1102 = vmatprep.subr.bf16.mxu0 0
        %1103 = vmatpush2.bf16.xpose.msra.mxu0 0
        %1104 = vmatprep.subr.bf16.mxu0 0
        %1105 = vmatpush2.bf16.xpose.msra.mxu0 0
        %1106 = vmatprep.mubr.bf16.mxu0 0
        %1107 = vmatmul.mubr.bf16.gmra.mxu0 %v964
        %v1108 = vpop.f32.mrf.mxu0
        %v1109 = vadd.f32 0.0, %v1108
        %v1110 = vpop.f32.mrf.mxu0
        %v1111 = vpop.f32.mrf.mxu0
        %v1112 = vpop.f32.mrf.mxu0
        %1113 = vdwg.mxu0
        %v1114 = vsel %vm532, %v1109, -inf
        %1115 = vmax.xlane.f32.xlu0 %v1114
        %v1116 = vpop.xlane.xlu0 %1115
        %v1117 = vsub.f32 %v1109, %v1116
        %v1118 = vmul.f32 %v1117, 1.442695
        %v1119 = vpow.pop %v1118
        %v1120 = vsel %vm532, %v1119, 0.0
        %1121 = vadd.xlane.f32.xlu0 %v1120
        %v1122 = vpop.xlane.xlu0 %1121
        %v1123 = vrcp.pop %v1122
        %v1124 = vmul.f32 %v1119, %v1123
        %v1125 = vpack.c.bf16 %v1124, %v1124
        %1126 = vrot.lane.b32.xlu0 %v527, 80
        %v1127 = vpop.permute.xlu0 %1126
        %v1129 = vsel %vm532, %v1125, 0
        %v1132 = vsel %vm596, %v1127, 0
        %1134 = vmatprep.subr.bf16.mxu0 0
        %1135 = vmatpush1.bf16.msra.mxu0 0
        %1136 = vmatprep.subr.bf16.mxu0 0
        %1137 = vmatpush1.bf16.msra.mxu0 0
        %1138 = vmatprep.subr.bf16.mxu0 0
        %1139 = vmatpush1.bf16.msra.mxu0 0
        %1140 = vmatprep.subr.bf16.mxu0 0
        %1141 = vmatpush1.bf16.msra.mxu0 0
        %1142 = vmatprep.subr.bf16.mxu0 0
        %1143 = vmatpush1.bf16.msra.mxu0 0
        %1144 = vmatprep.subr.bf16.mxu0 0
        %1145 = vmatpush1.bf16.msra.mxu0 0
        %1146 = vmatprep.subr.bf16.mxu0 0
        %1147 = vmatpush1.bf16.msra.mxu0 0
        %1148 = vmatprep.subr.bf16.mxu0 0
        %1149 = vmatpush1.bf16.msra.mxu0 %v1132
        %1150 = vmatprep.subr.bf16.mxu0 0
        %1151 = vmatpush2.bf16.msra.mxu0 0
        %1152 = vmatprep.subr.bf16.mxu0 0
        %1153 = vmatpush2.bf16.msra.mxu0 0
        %1154 = vmatprep.subr.bf16.mxu0 0
        %1155 = vmatpush2.bf16.msra.mxu0 0
        %1156 = vmatprep.subr.bf16.mxu0 0
        %1157 = vmatpush2.bf16.msra.mxu0 0
        %1158 = vmatprep.subr.bf16.mxu0 0
        %1159 = vmatpush2.bf16.msra.mxu0 0
        %1160 = vmatprep.subr.bf16.mxu0 0
        %1161 = vmatpush2.bf16.msra.mxu0 0
        %1162 = vmatprep.subr.bf16.mxu0 0
        %1163 = vmatpush2.bf16.msra.mxu0 0
        %1164 = vmatprep.subr.bf16.mxu0 0
        %1165 = vmatpush2.bf16.msra.mxu0 0
        %1166 = vmatprep.mubr.bf16.mxu0 0
        %1167 = vmatmul.mubr.bf16.gmra.mxu0 %v1129
        %v1168 = vpop.f32.mrf.mxu0
        %v1169 = vadd.f32 0.0, %v1168
        %v1170 = vpop.f32.mrf.mxu0
        %v1171 = vpop.f32.mrf.mxu0
        %v1172 = vpop.f32.mrf.mxu0
        %1173 = vdwg.mxu0
        %1174 = vrot.lane.b32.xlu0 %v525, 104
        %v1175 = vpop.permute.xlu0 %1174
        %1176 = vrot.lane.b32.xlu0 %v525, 72
        %v1177 = vpop.permute.xlu0 %1176
        %v1179 = vsel %vm532, %v1175, 0
        %v1182 = vsel %vm532, %v1177, 0
        %1184 = vmatprep.subr.bf16.mxu0 0
        %1185 = vmatpush1.bf16.xpose.msra.mxu0 0
        %1186 = vmatprep.subr.bf16.mxu0 0
        %1187 = vmatpush1.bf16.xpose.msra.mxu0 0
        %1188 = vmatprep.subr.bf16.mxu0 0
        %1189 = vmatpush1.bf16.xpose.msra.mxu0 0
        %1190 = vmatprep.subr.bf16.mxu0 0
        %1191 = vmatpush1.bf16.xpose.msra.mxu0 0
        %1192 = vmatprep.subr.bf16.mxu0 0
        %1193 = vmatpush1.bf16.xpose.msra.mxu0 0
        %1194 = vmatprep.subr.bf16.mxu0 0
        %1195 = vmatpush1.bf16.xpose.msra.mxu0 0
        %1196 = vmatprep.subr.bf16.mxu0 0
        %1197 = vmatpush1.bf16.xpose.msra.mxu0 0
        %1198 = vmatprep.subr.bf16.mxu0 0
        %1199 = vmatpush1.bf16.xpose.msra.mxu0 %v1182
        %1200 = vmatprep.subr.bf16.mxu0 0
        %1201 = vmatpush2.bf16.xpose.msra.mxu0 0
        %1202 = vmatprep.subr.bf16.mxu0 0
        %1203 = vmatpush2.bf16.xpose.msra.mxu0 0
        %1204 = vmatprep.subr.bf16.mxu0 0
        %1205 = vmatpush2.bf16.xpose.msra.mxu0 0
        %1206 = vmatprep.subr.bf16.mxu0 0
        %1207 = vmatpush2.bf16.xpose.msra.mxu0 0
        %1208 = vmatprep.subr.bf16.mxu0 0
        %1209 = vmatpush2.bf16.xpose.msra.mxu0 0
        %1210 = vmatprep.subr.bf16.mxu0 0
        %1211 = vmatpush2.bf16.xpose.msra.mxu0 0
        %1212 = vmatprep.subr.bf16.mxu0 0
        %1213 = vmatpush2.bf16.xpose.msra.mxu0 0
        %1214 = vmatprep.subr.bf16.mxu0 0
        %1215 = vmatpush2.bf16.xpose.msra.mxu0 0
        %1216 = vmatprep.mubr.bf16.mxu0 0
        %1217 = vmatmul.mubr.bf16.gmra.mxu0 %v1179
        %v1218 = vpop.f32.mrf.mxu0
        %v1219 = vadd.f32 %v528, %v1218
        %v1220 = vpop.f32.mrf.mxu0
        %v1221 = vpop.f32.mrf.mxu0
        %v1222 = vpop.f32.mrf.mxu0
        %1223 = vdwg.mxu0
        %v1224 = vsel %vm532, %v1219, -inf
        %1225 = vmax.xlane.f32.xlu0 %v1224
        %v1226 = vpop.xlane.xlu0 %1225
        %v1227 = vsub.f32 %v1219, %v1226
        %v1228 = vmul.f32 %v1227, 1.442695
        %v1229 = vpow.pop %v1228
        %v1230 = vsel %vm532, %v1229, 0.0
        %1231 = vadd.xlane.f32.xlu0 %v1230
        %v1232 = vpop.xlane.xlu0 %1231
        %v1233 = vrcp.pop %v1232
        %v1234 = vmul.f32 %v1229, %v1233
        %v1235 = vpack.c.bf16 %v1234, %v1234
        %1236 = vrot.lane.b32.xlu0 %v525, 40
        %v1237 = vpop.permute.xlu0 %1236
        %v1239 = vsel %vm532, %v1235, 0
        %v1242 = vsel %vm596, %v1237, 0
        %1244 = vmatprep.subr.bf16.mxu0 0
        %1245 = vmatpush1.bf16.msra.mxu0 0
        %1246 = vmatprep.subr.bf16.mxu0 0
        %1247 = vmatpush1.bf16.msra.mxu0 0
        %1248 = vmatprep.subr.bf16.mxu0 0
        %1249 = vmatpush1.bf16.msra.mxu0 0
        %1250 = vmatprep.subr.bf16.mxu0 0
        %1251 = vmatpush1.bf16.msra.mxu0 0
        %1252 = vmatprep.subr.bf16.mxu0 0
        %1253 = vmatpush1.bf16.msra.mxu0 0
        %1254 = vmatprep.subr.bf16.mxu0 0
        %1255 = vmatpush1.bf16.msra.mxu0 0
        %1256 = vmatprep.subr.bf16.mxu0 0
        %1257 = vmatpush1.bf16.msra.mxu0 0
        %1258 = vmatprep.subr.bf16.mxu0 0
        %1259 = vmatpush1.bf16.msra.mxu0 %v1242
        %1260 = vmatprep.subr.bf16.mxu0 0
        %1261 = vmatpush2.bf16.msra.mxu0 0
        %1262 = vmatprep.subr.bf16.mxu0 0
        %1263 = vmatpush2.bf16.msra.mxu0 0
        %1264 = vmatprep.subr.bf16.mxu0 0
        %1265 = vmatpush2.bf16.msra.mxu0 0
        %1266 = vmatprep.subr.bf16.mxu0 0
        %1267 = vmatpush2.bf16.msra.mxu0 0
        %1268 = vmatprep.subr.bf16.mxu0 0
        %1269 = vmatpush2.bf16.msra.mxu0 0
        %1270 = vmatprep.subr.bf16.mxu0 0
        %1271 = vmatpush2.bf16.msra.mxu0 0
        %1272 = vmatprep.subr.bf16.mxu0 0
        %1273 = vmatpush2.bf16.msra.mxu0 0
        %1274 = vmatprep.subr.bf16.mxu0 0
        %1275 = vmatpush2.bf16.msra.mxu0 0
        %1276 = vmatprep.mubr.bf16.mxu0 0
        %1277 = vmatmul.mubr.bf16.gmra.mxu0 %v1239
        %v1278 = vpop.f32.mrf.mxu0
        %v1279 = vadd.f32 0.0, %v1278
        %v1280 = vpop.f32.mrf.mxu0
        %v1281 = vpop.f32.mrf.mxu0
        %v1282 = vpop.f32.mrf.mxu0
        %1283 = vdwg.mxu0
        %1284 = vrot.lane.b32.xlu0 %v527, 104
        %v1285 = vpop.permute.xlu0 %1284
        %v1287 = vsel %vm532, %v1285, 0
        %1289 = vmatprep.subr.bf16.mxu0 0
        %1290 = vmatpush1.bf16.xpose.msra.mxu0 0
        %1291 = vmatprep.subr.bf16.mxu0 0
        %1292 = vmatpush1.bf16.xpose.msra.mxu0 0
        %1293 = vmatprep.subr.bf16.mxu0 0
        %1294 = vmatpush1.bf16.xpose.msra.mxu0 0
        %1295 = vmatprep.subr.bf16.mxu0 0
        %1296 = vmatpush1.bf16.xpose.msra.mxu0 0
        %1297 = vmatprep.subr.bf16.mxu0 0
        %1298 = vmatpush1.bf16.xpose.msra.mxu0 0
        %1299 = vmatprep.subr.bf16.mxu0 0
        %1300 = vmatpush1.bf16.xpose.msra.mxu0 0
        %1301 = vmatprep.subr.bf16.mxu0 0
        %1302 = vmatpush1.bf16.xpose.msra.mxu0 0
        %1303 = vmatprep.subr.bf16.mxu0 0
        %1304 = vmatpush1.bf16.xpose.msra.mxu0 %v1287
        %1305 = vmatprep.subr.bf16.mxu0 0
        %1306 = vmatpush2.bf16.xpose.msra.mxu0 0
        %1307 = vmatprep.subr.bf16.mxu0 0
        %1308 = vmatpush2.bf16.xpose.msra.mxu0 0
        %1309 = vmatprep.subr.bf16.mxu0 0
        %1310 = vmatpush2.bf16.xpose.msra.mxu0 0
        %1311 = vmatprep.subr.bf16.mxu0 0
        %1312 = vmatpush2.bf16.xpose.msra.mxu0 0
        %1313 = vmatprep.subr.bf16.mxu0 0
        %1314 = vmatpush2.bf16.xpose.msra.mxu0 0
        %1315 = vmatprep.subr.bf16.mxu0 0
        %1316 = vmatpush2.bf16.xpose.msra.mxu0 0
        %1317 = vmatprep.subr.bf16.mxu0 0
        %1318 = vmatpush2.bf16.xpose.msra.mxu0 0
        %1319 = vmatprep.subr.bf16.mxu0 0
        %1320 = vmatpush2.bf16.xpose.msra.mxu0 0
        %1321 = vmatprep.mubr.bf16.mxu0 0
        %1322 = vmatmul.mubr.bf16.gmra.mxu0 %v1179
        %v1323 = vpop.f32.mrf.mxu0
        %v1324 = vadd.f32 0.0, %v1323
        %v1325 = vpop.f32.mrf.mxu0
        %v1326 = vpop.f32.mrf.mxu0
        %v1327 = vpop.f32.mrf.mxu0
        %1328 = vdwg.mxu0
        %v1329 = vsel %vm532, %v1324, -inf
        %1330 = vmax.xlane.f32.xlu0 %v1329
        %v1331 = vpop.xlane.xlu0 %1330
        %v1332 = vsub.f32 %v1324, %v1331
        %v1333 = vmul.f32 %v1332, 1.442695
        %v1334 = vpow.pop %v1333
        %v1335 = vsel %vm532, %v1334, 0.0
        %1336 = vadd.xlane.f32.xlu0 %v1335
        %v1337 = vpop.xlane.xlu0 %1336
        %v1338 = vrcp.pop %v1337
        %v1339 = vmul.f32 %v1334, %v1338
        %v1340 = vpack.c.bf16 %v1339, %v1339
        %1341 = vrot.lane.b32.xlu0 %v527, 72
        %v1342 = vpop.permute.xlu0 %1341
        %v1344 = vsel %vm532, %v1340, 0
        %v1347 = vsel %vm596, %v1342, 0
        %1349 = vmatprep.subr.bf16.mxu0 0
        %1350 = vmatpush1.bf16.msra.mxu0 0
        %1351 = vmatprep.subr.bf16.mxu0 0
        %1352 = vmatpush1.bf16.msra.mxu0 0
        %1353 = vmatprep.subr.bf16.mxu0 0
        %1354 = vmatpush1.bf16.msra.mxu0 0
        %1355 = vmatprep.subr.bf16.mxu0 0
        %1356 = vmatpush1.bf16.msra.mxu0 0
        %1357 = vmatprep.subr.bf16.mxu0 0
        %1358 = vmatpush1.bf16.msra.mxu0 0
        %1359 = vmatprep.subr.bf16.mxu0 0
        %1360 = vmatpush1.bf16.msra.mxu0 0
        %1361 = vmatprep.subr.bf16.mxu0 0
        %1362 = vmatpush1.bf16.msra.mxu0 0
        %1363 = vmatprep.subr.bf16.mxu0 0
        %1364 = vmatpush1.bf16.msra.mxu0 %v1347
        %1365 = vmatprep.subr.bf16.mxu0 0
        %1366 = vmatpush2.bf16.msra.mxu0 0
        %1367 = vmatprep.subr.bf16.mxu0 0
        %1368 = vmatpush2.bf16.msra.mxu0 0
        %1369 = vmatprep.subr.bf16.mxu0 0
        %1370 = vmatpush2.bf16.msra.mxu0 0
        %1371 = vmatprep.subr.bf16.mxu0 0
        %1372 = vmatpush2.bf16.msra.mxu0 0
        %1373 = vmatprep.subr.bf16.mxu0 0
        %1374 = vmatpush2.bf16.msra.mxu0 0
        %1375 = vmatprep.subr.bf16.mxu0 0
        %1376 = vmatpush2.bf16.msra.mxu0 0
        %1377 = vmatprep.subr.bf16.mxu0 0
        %1378 = vmatpush2.bf16.msra.mxu0 0
        %1379 = vmatprep.subr.bf16.mxu0 0
        %1380 = vmatpush2.bf16.msra.mxu0 0
        %1381 = vmatprep.mubr.bf16.mxu0 0
        %1382 = vmatmul.mubr.bf16.gmra.mxu0 %v1344
        %v1383 = vpop.f32.mrf.mxu0
        %v1384 = vadd.f32 0.0, %v1383
        %v1385 = vpop.f32.mrf.mxu0
        %v1386 = vpop.f32.mrf.mxu0
        %v1387 = vpop.f32.mrf.mxu0
        %1388 = vdwg.mxu0
        %1390 = vrot.lane.b32.xlu0 %v849, 8
        %v1391 = vpop.permute.xlu0 %1390
        %1394 = vrot.lane.b32.xlu0 %v1064, 16
        %v1395 = vpop.permute.xlu0 %1394
        %1398 = vrot.lane.b32.xlu0 %v1279, 24
        %v1399 = vpop.permute.xlu0 %1398
        %v1401 = vsel %vm532, %v635, %v1391
        %vm1402 = vcmask 130048
        %v1403 = vsel %vm1402, %v1401, %v1395
        %vm1404 = vcmask 195584
        %v1405 = vsel %vm1404, %v1403, %v1399
        %vm1406 = vcmask 261120
        %1407 = vst.msk [vmem:[#allocation2] sm:$0xff] %vm1406, %v1405
        %v1408 = vpack.c.bf16 %v1405, %v1405
        %1410 = vrot.lane.b32.xlu0 %v954, 8
        %v1411 = vpop.permute.xlu0 %1410
        %1414 = vrot.lane.b32.xlu0 %v1169, 16
        %v1415 = vpop.permute.xlu0 %1414
        %1418 = vrot.lane.b32.xlu0 %v1384, 24
        %v1419 = vpop.permute.xlu0 %1418
        %v1421 = vsel %vm532, %v739, %v1411
        %v1422 = vsel %vm1402, %v1421, %v1415
        %v1423 = vsel %vm1404, %v1422, %v1419
        %v1424 = vpack.c.bf16 %v1423, %v1423
        %v1425 = vld [vmem:[%s3] sm:$0xf]
        %v1426 = vld [vmem:[%s4] sm:$0xf]
        %v1428 = vsel %vm532, %v1426, 0
        %v1431 = vsel %vm596, %v1408, 0
        %1433 = vmatprep.subr.bf16.mxu0 0
        %1434 = vmatpush1.bf16.msra.mxu0 0
        %1435 = vmatprep.subr.bf16.mxu0 0
        %1436 = vmatpush1.bf16.msra.mxu0 0
        %1437 = vmatprep.subr.bf16.mxu0 0
        %1438 = vmatpush1.bf16.msra.mxu0 0
        %1439 = vmatprep.subr.bf16.mxu0 0
        %1440 = vmatpush1.bf16.msra.mxu0 0
        %1441 = vmatprep.subr.bf16.mxu0 0
        %1442 = vmatpush1.bf16.msra.mxu0 0
        %1443 = vmatprep.subr.bf16.mxu0 0
        %1444 = vmatpush1.bf16.msra.mxu0 0
        %1445 = vmatprep.subr.bf16.mxu0 0
        %1446 = vmatpush1.bf16.msra.mxu0 0
        %1447 = vmatprep.subr.bf16.mxu0 0
        %1448 = vmatpush1.bf16.msra.mxu0 %v1431
        %1449 = vmatprep.subr.bf16.mxu0 0
        %1450 = vmatpush2.bf16.msra.mxu0 0
        %1451 = vmatprep.subr.bf16.mxu0 0
        %1452 = vmatpush2.bf16.msra.mxu0 0
        %1453 = vmatprep.subr.bf16.mxu0 0
        %1454 = vmatpush2.bf16.msra.mxu0 0
        %1455 = vmatprep.subr.bf16.mxu0 0
        %1456 = vmatpush2.bf16.msra.mxu0 0
        %1457 = vmatprep.subr.bf16.mxu0 0
        %1458 = vmatpush2.bf16.msra.mxu0 0
        %1459 = vmatprep.subr.bf16.mxu0 0
        %1460 = vmatpush2.bf16.msra.mxu0 0
        %1461 = vmatprep.subr.bf16.mxu0 0
        %1462 = vmatpush2.bf16.msra.mxu0 0
        %1463 = vmatprep.subr.bf16.mxu0 0
        %1464 = vmatpush2.bf16.msra.mxu0 0
        %1465 = vmatprep.mubr.bf16.mxu0 0
        %1466 = vmatmul.mubr.bf16.gmra.mxu0 %v1428
        %v1467 = vpop.f32.mrf.mxu0
        %v1468 = vadd.f32 0.0, %v1467
        %v1469 = vpop.f32.mrf.mxu0
        %v1470 = vpop.f32.mrf.mxu0
        %v1471 = vpop.f32.mrf.mxu0
        %1472 = vdwg.mxu0
        %v1474 = vsel %vm532, %v1425, 0
        %v1477 = vsel %vm596, %v1424, 0
        %1479 = vmatprep.subr.bf16.mxu0 0
        %1480 = vmatpush1.bf16.msra.mxu0 0
        %1481 = vmatprep.subr.bf16.mxu0 0
        %1482 = vmatpush1.bf16.msra.mxu0 0
        %1483 = vmatprep.subr.bf16.mxu0 0
        %1484 = vmatpush1.bf16.msra.mxu0 0
        %1485 = vmatprep.subr.bf16.mxu0 0
        %1486 = vmatpush1.bf16.msra.mxu0 0
        %1487 = vmatprep.subr.bf16.mxu0 0
        %1488 = vmatpush1.bf16.msra.mxu0 0
        %1489 = vmatprep.subr.bf16.mxu0 0
        %1490 = vmatpush1.bf16.msra.mxu0 0
        %1491 = vmatprep.subr.bf16.mxu0 0
        %1492 = vmatpush1.bf16.msra.mxu0 0
        %1493 = vmatprep.subr.bf16.mxu0 0
        %1494 = vmatpush1.bf16.msra.mxu0 %v1477
        %1495 = vmatprep.subr.bf16.mxu0 0
        %1496 = vmatpush2.bf16.msra.mxu0 0
        %1497 = vmatprep.subr.bf16.mxu0 0
        %1498 = vmatpush2.bf16.msra.mxu0 0
        %1499 = vmatprep.subr.bf16.mxu0 0
        %1500 = vmatpush2.bf16.msra.mxu0 0
        %1501 = vmatprep.subr.bf16.mxu0 0
        %1502 = vmatpush2.bf16.msra.mxu0 0
        %1503 = vmatprep.subr.bf16.mxu0 0
        %1504 = vmatpush2.bf16.msra.mxu0 0
        %1505 = vmatprep.subr.bf16.mxu0 0
        %1506 = vmatpush2.bf16.msra.mxu0 0
        %1507 = vmatprep.subr.bf16.mxu0 0
        %1508 = vmatpush2.bf16.msra.mxu0 0
        %1509 = vmatprep.subr.bf16.mxu0 0
        %1510 = vmatpush2.bf16.msra.mxu0 0
        %1511 = vmatprep.mubr.bf16.mxu0 0
        %1512 = vmatmul.mubr.bf16.gmra.mxu0 %v1474
        %v1513 = vpop.f32.mrf.mxu0
        %v1514 = vadd.f32 %v1468, %v1513
        %v1515 = vpop.f32.mrf.mxu0
        %v1516 = vpop.f32.mrf.mxu0
        %v1517 = vpop.f32.mrf.mxu0
        %1518 = vdwg.mxu0
        %v1519 = vld [vmem:[%s5] sm:$0xff]
        %1521 = vset.pattern.permute.xlu0 0
        %1522 = vperm.xlu0 %1521, %v1519
        %v1523 = vpop.permute.xlu0 %1522
        %v1525 = vadd.f32 %v1514, %v1523
        %v1526 = vmul.f32 %v1525, %v1525
        %v1527 = vmul.f32 %v1525, %v1526
        %v1528 = vmul.f32 %v1527, 0.044715
        %v1529 = vadd.f32 %v1525, %v1528
        %v1530 = vmul.f32 %v1529, 0.7978846
        %v1531 = vtanh.pop %v1530
        %v1532 = vadd.f32 %v1531, 1.0
        %v1533 = vmul.f32 %v1532, 0.5
        %v1534 = vmul.f32 %v1525, %v1533
        %v1535 = vpack.c.bf16 %v1534, %v1534
        %v1536 = vld [vmem:[%s6] sm:$0xf]
        %v1537 = vld [vmem:[%s6 + $0x4] sm:$0xf]
        %v1538 = vld [vmem:[%s6 + $0x8] sm:$0xf]
        %v1539 = vld [vmem:[%s6 + $0xc] sm:$0xf]
        %v1540 = vld [vmem:[%s7] sm:$0x1]
        %v1542 = vlaneseq
        %v1543 = vshrl.u32 %v1542, 7
        %v1544 = vsub.s32 0, %v1543
        %v1545 = vrot.slane %v1540, %v1544
        %v1551 = vunpack.c.l.b16 %v1536
        %v1552 = vunpack.c.l.b16 %v1537
        %v1553 = vunpack.c.l.b16 %v1538
        %v1554 = vunpack.c.l.b16 %v1539
        %v1555 = vpack.c.b16 %v1552, %v1551
        %v1556 = vpack.c.b16 %v1554, %v1553
        %v1560 = vsel %vm1406, %v1535, 0
        %1562 = vmatprep.subr.bf16.mxu0 0
        %1563 = vmatpush1.bf16.msra.mxu0 0
        %1564 = vmatprep.subr.bf16.mxu0 0
        %1565 = vmatpush1.bf16.msra.mxu0 0
        %1566 = vmatprep.subr.bf16.mxu0 0
        %1567 = vmatpush1.bf16.msra.mxu0 0
        %1568 = vmatprep.subr.bf16.mxu0 0
        %1569 = vmatpush1.bf16.msra.mxu0 0
        %1570 = vmatprep.subr.bf16.mxu0 0
        %1571 = vmatpush1.bf16.msra.mxu0 0
        %1572 = vmatprep.subr.bf16.mxu0 0
        %1573 = vmatpush1.bf16.msra.mxu0 0
        %1574 = vmatprep.subr.bf16.mxu0 0
        %1575 = vmatpush1.bf16.msra.mxu0 %v1556
        %1576 = vmatprep.subr.bf16.mxu0 0
        %1577 = vmatpush1.bf16.msra.mxu0 %v1555
        %1578 = vmatprep.subr.bf16.mxu0 0
        %1579 = vmatpush2.bf16.msra.mxu0 0
        %1580 = vmatprep.subr.bf16.mxu0 0
        %1581 = vmatpush2.bf16.msra.mxu0 0
        %1582 = vmatprep.subr.bf16.mxu0 0
        %1583 = vmatpush2.bf16.msra.mxu0 0
        %1584 = vmatprep.subr.bf16.mxu0 0
        %1585 = vmatpush2.bf16.msra.mxu0 0
        %1586 = vmatprep.subr.bf16.mxu0 0
        %1587 = vmatpush2.bf16.msra.mxu0 0
        %1588 = vmatprep.subr.bf16.mxu0 0
        %1589 = vmatpush2.bf16.msra.mxu0 0
        %1590 = vmatprep.subr.bf16.mxu0 0
        %1591 = vmatpush2.bf16.msra.mxu0 0
        %1592 = vmatprep.subr.bf16.mxu0 0
        %1593 = vmatpush2.bf16.msra.mxu0 0
        %1594 = vmatprep.mubr.bf16.mxu0 0
        %1595 = vmatmul.mubr.bf16.gmra.mxu0 %v1560
        %v1596 = vpop.f32.mrf.mxu0
        %v1597 = vadd.f32 %v1545, %v1596
        %v1598 = vpop.f32.mrf.mxu0
        %v1599 = vpop.f32.mrf.mxu0
        %v1600 = vpop.f32.mrf.mxu0
        %1601 = vdwg.mxu0
        %v1602 = vmul.f32 %v1597, %v1597
        %v1603 = vmul.f32 %v1597, %v1602
        %v1604 = vmul.f32 %v1603, 0.044715
        %v1605 = vadd.f32 %v1597, %v1604
        %v1606 = vmul.f32 %v1605, 0.7978846
        %v1607 = vtanh.pop %v1606
        %v1608 = vadd.f32 %v1607, 1.0
        %v1609 = vmul.f32 %v1608, 0.5
        %v1610 = vmul.f32 %v1597, %v1609
        %v1611 = vld [vmem:[%s8] sm:$0xf]
        %v1612 = vpack.c.bf16 %v1610, %v1610
        %v1613 = vld [vmem:[%s9] sm:$0xff]
        %1615 = vset.pattern.permute.xlu0 0
        %1616 = vperm.xlu0 %1615, %v1613
        %v1617 = vpop.permute.xlu0 %1616
        %v1620 = vsel %vm532, %v1611, 0
        %v1623 = vsel %vm596, %v1612, 0
        %1625 = vmatprep.subr.bf16.mxu0 0
        %1626 = vmatpush1.bf16.msra.mxu0 0
        %1627 = vmatprep.subr.bf16.mxu0 0
        %1628 = vmatpush1.bf16.msra.mxu0 0
        %1629 = vmatprep.subr.bf16.mxu0 0
        %1630 = vmatpush1.bf16.msra.mxu0 0
        %1631 = vmatprep.subr.bf16.mxu0 0
        %1632 = vmatpush1.bf16.msra.mxu0 0
        %1633 = vmatprep.subr.bf16.mxu0 0
        %1634 = vmatpush1.bf16.msra.mxu0 0
        %1635 = vmatprep.subr.bf16.mxu0 0
        %1636 = vmatpush1.bf16.msra.mxu0 0
        %1637 = vmatprep.subr.bf16.mxu0 0
        %1638 = vmatpush1.bf16.msra.mxu0 0
        %1639 = vmatprep.subr.bf16.mxu0 0
        %1640 = vmatpush1.bf16.msra.mxu0 %v1623
        %1641 = vmatprep.subr.bf16.mxu0 0
        %1642 = vmatpush2.bf16.msra.mxu0 0
        %1643 = vmatprep.subr.bf16.mxu0 0
        %1644 = vmatpush2.bf16.msra.mxu0 0
        %1645 = vmatprep.subr.bf16.mxu0 0
        %1646 = vmatpush2.bf16.msra.mxu0 0
        %1647 = vmatprep.subr.bf16.mxu0 0
        %1648 = vmatpush2.bf16.msra.mxu0 0
        %1649 = vmatprep.subr.bf16.mxu0 0
        %1650 = vmatpush2.bf16.msra.mxu0 0
        %1651 = vmatprep.subr.bf16.mxu0 0
        %1652 = vmatpush2.bf16.msra.mxu0 0
        %1653 = vmatprep.subr.bf16.mxu0 0
        %1654 = vmatpush2.bf16.msra.mxu0 0
        %1655 = vmatprep.subr.bf16.mxu0 0
        %1656 = vmatpush2.bf16.msra.mxu0 0
        %1657 = vmatprep.mubr.bf16.mxu0 0
        %1658 = vmatmul.mubr.bf16.gmra.mxu0 %v1620
        %v1659 = vpop.f32.mrf.mxu0
        %v1660 = vadd.f32 %v1617, %v1659
        %v1661 = vpop.f32.mrf.mxu0
        %v1662 = vpop.f32.mrf.mxu0
        %v1663 = vpop.f32.mrf.mxu0
        %1664 = vdwg.mxu0
        %v1665 = vmul.f32 %v1660, %v1660
        %v1666 = vmul.f32 %v1660, %v1665
        %v1667 = vmul.f32 %v1666, 0.044715
        %v1668 = vadd.f32 %v1660, %v1667
        %v1669 = vmul.f32 %v1668, 0.7978846
        %v1670 = vtanh.pop %v1669
        %v1671 = vadd.f32 %v1670, 1.0
        %v1672 = vmul.f32 %v1671, 0.5
        %v1673 = vmul.f32 %v1660, %v1672
        %v1674 = vpack.c.bf16 %v1673, %v1673
        %v1675 = vld [vmem:[%s10] sm:$0xf]
        %v1676 = vld [vmem:[%s10 + $0x4] sm:$0xf]
        %v1677 = vld [vmem:[%s10 + $0x8] sm:$0xf]
        %v1678 = vld [vmem:[%s10 + $0xc] sm:$0xf]
        %v1679 = vld [vmem:[#allocation3] sm:$0x1]
        %v1681 = vlaneseq
        %v1682 = vshrl.u32 %v1681, 7
        %v1683 = vsub.s32 0, %v1682
        %v1684 = vrot.slane %v1679, %v1683
        %v1690 = vunpack.c.l.b16 %v1675
        %v1691 = vunpack.c.l.b16 %v1676
        %v1692 = vunpack.c.l.b16 %v1677
        %v1693 = vunpack.c.l.b16 %v1678
        %v1694 = vpack.c.b16 %v1691, %v1690
        %v1695 = vpack.c.b16 %v1693, %v1692
        %v1699 = vsel %vm1406, %v1674, 0
        %1701 = vmatprep.subr.bf16.mxu0 0
        %1702 = vmatpush1.bf16.msra.mxu0 0
        %1703 = vmatprep.subr.bf16.mxu0 0
        %1704 = vmatpush1.bf16.msra.mxu0 0
        %1705 = vmatprep.subr.bf16.mxu0 0
        %1706 = vmatpush1.bf16.msra.mxu0 0
        %1707 = vmatprep.subr.bf16.mxu0 0
        %1708 = vmatpush1.bf16.msra.mxu0 0
        %1709 = vmatprep.subr.bf16.mxu0 0
        %1710 = vmatpush1.bf16.msra.mxu0 0
        %1711 = vmatprep.subr.bf16.mxu0 0
        %1712 = vmatpush1.bf16.msra.mxu0 0
        %1713 = vmatprep.subr.bf16.mxu0 0
        %1714 = vmatpush1.bf16.msra.mxu0 %v1695
        %1715 = vmatprep.subr.bf16.mxu0 0
        %1716 = vmatpush1.bf16.msra.mxu0 %v1694
        %1717 = vmatprep.subr.bf16.mxu0 0
        %1718 = vmatpush2.bf16.msra.mxu0 0
        %1719 = vmatprep.subr.bf16.mxu0 0
        %1720 = vmatpush2.bf16.msra.mxu0 0
        %1721 = vmatprep.subr.bf16.mxu0 0
        %1722 = vmatpush2.bf16.msra.mxu0 0
        %1723 = vmatprep.subr.bf16.mxu0 0
        %1724 = vmatpush2.bf16.msra.mxu0 0
        %1725 = vmatprep.subr.bf16.mxu0 0
        %1726 = vmatpush2.bf16.msra.mxu0 0
        %1727 = vmatprep.subr.bf16.mxu0 0
        %1728 = vmatpush2.bf16.msra.mxu0 0
        %1729 = vmatprep.subr.bf16.mxu0 0
        %1730 = vmatpush2.bf16.msra.mxu0 0
        %1731 = vmatprep.subr.bf16.mxu0 0
        %1732 = vmatpush2.bf16.msra.mxu0 0
        %1733 = vmatprep.mubr.bf16.mxu0 0
        %1734 = vmatmul.mubr.bf16.gmra.mxu0 %v1699
        %v1735 = vpop.f32.mrf.mxu0
        %v1736 = vadd.f32 %v1684, %v1735
        %v1737 = vpop.f32.mrf.mxu0
        %v1738 = vpop.f32.mrf.mxu0
        %v1739 = vpop.f32.mrf.mxu0
        %1740 = vdwg.mxu0
        %v1741 = vld [vmem:[#allocation2] sm:$0xff]
        %v1742 = vadd.f32 %v1741, %v1736
        %v1743 = vpack.c.bf16 %v1742, %v1742
        %v1744 = vld [vmem:[%s12] sm:$0xf]
        %v1745 = vld [vmem:[%s12 + $0x4] sm:$0xf]
        %v1746 = vld [vmem:[%s12 + $0x8] sm:$0xf]
        %v1747 = vld [vmem:[%s12 + $0xc] sm:$0xf]
        %v1748 = vld [vmem:[#allocation6] sm:$0x1]
        %v1750 = vlaneseq
        %v1751 = vshrl.u32 %v1750, 7
        %v1752 = vsub.s32 0, %v1751
        %v1753 = vrot.slane %v1748, %v1752
        %v1759 = vunpack.c.l.b16 %v1744
        %v1760 = vunpack.c.l.b16 %v1745
        %v1761 = vunpack.c.l.b16 %v1746
        %v1762 = vunpack.c.l.b16 %v1747
        %v1763 = vpack.c.b16 %v1760, %v1759
        %v1764 = vpack.c.b16 %v1762, %v1761
        %v1768 = vsel %vm1406, %v1743, 0
        %1770 = vmatprep.subr.bf16.mxu0 0
        %1771 = vmatpush1.bf16.msra.mxu0 0
        %1772 = vmatprep.subr.bf16.mxu0 0
        %1773 = vmatpush1.bf16.msra.mxu0 0
        %1774 = vmatprep.subr.bf16.mxu0 0
        %1775 = vmatpush1.bf16.msra.mxu0 0
        %1776 = vmatprep.subr.bf16.mxu0 0
        %1777 = vmatpush1.bf16.msra.mxu0 0
        %1778 = vmatprep.subr.bf16.mxu0 0
        %1779 = vmatpush1.bf16.msra.mxu0 0
        %1780 = vmatprep.subr.bf16.mxu0 0
        %1781 = vmatpush1.bf16.msra.mxu0 0
        %1782 = vmatprep.subr.bf16.mxu0 0
        %1783 = vmatpush1.bf16.msra.mxu0 %v1764
        %1784 = vmatprep.subr.bf16.mxu0 0
        %1785 = vmatpush1.bf16.msra.mxu0 %v1763
        %1786 = vmatprep.subr.bf16.mxu0 0
        %1787 = vmatpush2.bf16.msra.mxu0 0
        %1788 = vmatprep.subr.bf16.mxu0 0
        %1789 = vmatpush2.bf16.msra.mxu0 0
        %1790 = vmatprep.subr.bf16.mxu0 0
        %1791 = vmatpush2.bf16.msra.mxu0 0
        %1792 = vmatprep.subr.bf16.mxu0 0
        %1793 = vmatpush2.bf16.msra.mxu0 0
        %1794 = vmatprep.subr.bf16.mxu0 0
        %1795 = vmatpush2.bf16.msra.mxu0 0
        %1796 = vmatprep.subr.bf16.mxu0 0
        %1797 = vmatpush2.bf16.msra.mxu0 0
        %1798 = vmatprep.subr.bf16.mxu0 0
        %1799 = vmatpush2.bf16.msra.mxu0 0
        %1800 = vmatprep.subr.bf16.mxu0 0
        %1801 = vmatpush2.bf16.msra.mxu0 0
        %1802 = vmatprep.mubr.bf16.mxu0 0
        %1803 = vmatmul.mubr.bf16.gmra.mxu0 %v1768
        %v1804 = vpop.f32.mrf.mxu0
        %v1805 = vadd.f32 %v1753, %v1804
        %v1806 = vpop.f32.mrf.mxu0
        %v1807 = vpop.f32.mrf.mxu0
        %v1808 = vpop.f32.mrf.mxu0
        %1809 = vdwg.mxu0
        %1810 = vst.msk [vmem:[%s510] sm:$0xff] %vm1406, %v1805
        %s1811 = sand.u32 %s347, 1
        %s1812 = scalar_lea.sflag [#allocation5], %s1811
        %s1813 = sand.u32 %s347, 1
        %s1814 = smul.addr %s1813, 8
        %s1815 = scalar_lea.vmem [#allocation8], %s1814
        // Predicated region
        $region85: #{te_aug_adapter_clip_attention.5} parent=75 // pred_check
          %p1816 = pneg %p357
        $region86: #{te_aug_adapter_clip_attention.5} parent=75 // pred_check_branch
          %1818 = sbr.rel (%p1816) target = $region88
        $region87: #{te_aug_adapter_clip_attention.5} parent=75 // pred_region
          %s1820 = ssub.s32 128, 128
          %1821 = vsyncadd %s1812, %s1820
          %s1822 = smul.addr %s30, 128
          %s1823 = scalar_lea.hbm %s14, %s1822
          %s1825 = sshll.u32 %s1815, 4
          %s1826 = int_to_ptr.vmem [resolvable:$true] %s1825
          %1828 = dma.vmem_to_hbm [thread:$0]  %s1826, 128, %s1823, %s1812
        $region88: #{te_aug_adapter_clip_attention.5} parent=75 // pred_fallthru
          _
      $region76: #{te_aug_adapter_clip_attention.5} parent=5 // pred_fallthru
        _
      %p1829 = scmp.le.s32.totalorder 2, %s25
      // Predicated region
      $region89: #{te_aug_adapter_clip_attention.5} parent=5 // pred_check
        %p1830 = pneg %p1829
      $region90: #{te_aug_adapter_clip_attention.5} parent=5 // pred_check_branch
        %1832 = sbr.rel (%p1830) target = $region92
      $region91: #{te_aug_adapter_clip_attention.5} parent=5 // pred_region
        %s1833 = ssub.s32 %s25, 2
        // Predicated region
        $region93: #{te_aug_adapter_clip_attention.5} parent=91 // pred_check
          %p1834 = pneg %p363
        $region94: #{te_aug_adapter_clip_attention.5} parent=91 // pred_check_branch
          %1836 = sbr.rel (%p1834) target = $region96
        $region95: #{te_aug_adapter_clip_attention.5} parent=91 // pred_region
          %s1837 = sand.u32 %s348, 1
          %s1838 = scalar_lea.sflag [#allocation5], %s1837
          %s1839 = sand.u32 %s348, 1
          %s1840 = smul.addr %s1839, 8
          %s1841 = scalar_lea.vmem [#allocation8], %s1840
          %1842 = dma.done %s1838, 128
        $region96: #{te_aug_adapter_clip_attention.5} parent=91 // pred_fallthru
          _
      $region92: #{te_aug_adapter_clip_attention.5} parent=5 // pred_fallthru
        _
    $region6: #{te_aug_adapter_clip_attention.5} parent=1 // loop_footer
      %s29 = sadd.s32 1, %s25
    $region7: #{te_aug_adapter_clip_attention.5} parent=1 // loop_footer_branch
      %24 = sbr.rel target = $region3
    $region8: #{te_aug_adapter_clip_attention.5} parent=1 // loop_exit
      _
    %1843 = vsyncpa [#allocation4], 1
    %s1844 = scalar_lea.sflag [#allocation4], 1
    %1845 = vsyncpa %s1844, 1
    %1846 = vsyncpa [#allocation7], 1
    %1847 = vsyncpa [#allocation5], 1
    %s1848 = scalar_lea.sflag [#allocation5], 1
    %1849 = vsyncpa %s1848, 1

// kernel: te_aug_adapter_clip_attention.4
$region0: #{te_aug_adapter_clip_attention.4}
  #allocation0 [shape = 'u32[]', space=smem, size = 0x4, offset = 0x4, fixed_abs, tag = 'smem constant byte address 0x4 - core index']
  #allocation1 [shape = 'u32[144,128]{1,0:T(1,128)}', space=vmem, size = 0x12000, scoped, tag = 'internal scratch']
  %s0 = inlined_call_operand.vmem [shape: f32[16,32], index: 0, kind: input, shape index: {}]
  %s1 = inlined_call_operand.vmem [shape: bf16[32,64], index: 1, kind: input, shape index: {}]
  %s2 = inlined_call_operand.hbm [shape: f32[1,64], index: 2, kind: input, shape index: {}]
  %s3 = inlined_call_operand.vmem [shape: f32[16,64], index: 3, kind: output, shape index: {}]
  %s4 = sld [smem:[#allocation0]]
  $region26: #{te_aug_adapter_clip_attention.4} parent=0
    _
  %s6 = ssub.s32 1, %s4
  %s7 = scalar_select 0, %s6, %s4
  $region1: #{te_aug_adapter_clip_attention.4} parent=0
    #allocation2 [shape = 'u8[512]{0}', space=vmem, size = 0x400, scoped, tag = 'input window, operand 2, single buffered']
    #allocation3 [shape = 's32[1]{0}', space=sflag, size = 0x4, scoped, tag = 'scoped memory for te_aug_adapter_clip_attention.4']
    %8 = vsyncpa [#allocation3], 0
    // Predicated region
    $region2: #{te_aug_adapter_clip_attention.4} parent=1 // pred_check
      _
    $region3: #{te_aug_adapter_clip_attention.4} parent=1 // pred_check_branch
      %10 = sbr.rel (0) target = $region5
    $region4: #{te_aug_adapter_clip_attention.4} parent=1 // pred_region
      _
    $region5: #{te_aug_adapter_clip_attention.4} parent=1 // pred_fallthru
      _
    // Predicated region
    $region6: #{te_aug_adapter_clip_attention.4} parent=1 // pred_check
      _
    $region7: #{te_aug_adapter_clip_attention.4} parent=1 // pred_check_branch
      %12 = sbr.rel (0) target = $region9
    $region8: #{te_aug_adapter_clip_attention.4} parent=1 // pred_region
      _
    $region9: #{te_aug_adapter_clip_attention.4} parent=1 // pred_fallthru
      _
    // Predicated region
    $region10: #{te_aug_adapter_clip_attention.4} parent=1 // pred_check
      _
    $region11: #{te_aug_adapter_clip_attention.4} parent=1 // pred_check_branch
      %14 = sbr.rel (0) target = $region13
    $region12: #{te_aug_adapter_clip_attention.4} parent=1 // pred_region
      %s16 = ssub.s32 16, 16
      %17 = vsyncadd [#allocation3], %s16
      %s19 = sshll.u32 [#allocation2], 4
      %s20 = int_to_ptr.vmem [resolvable:$true] %s19
      %22 = dma.hbm_to_vmem [thread:$0]  %s2, 16, %s20, [#allocation3]
    $region13: #{te_aug_adapter_clip_attention.4} parent=1 // pred_fallthru
      _
    // Predicated region
    $region14: #{te_aug_adapter_clip_attention.4} parent=1 // pred_check
      _
    $region15: #{te_aug_adapter_clip_attention.4} parent=1 // pred_check_branch
      %24 = sbr.rel (0) target = $region17
    $region16: #{te_aug_adapter_clip_attention.4} parent=1 // pred_region
      %25 = dma.done [#allocation3], 16
    $region17: #{te_aug_adapter_clip_attention.4} parent=1 // pred_fallthru
      _
    %v27 = vld [vmem:[%s0] sm:$0xff]
    %v28 = vld [vmem:[%s0 + $0x8] sm:$0xff]
    %v29 = vpack.c.bf16 %v28, %v27
    %v30 = vld [vmem:[%s1] sm:$0xf]
    %v31 = vld [vmem:[%s1 + $0x4] sm:$0xf]
    %v32 = vld [vmem:[%s1 + $0x8] sm:$0xf]
    %v33 = vld [vmem:[%s1 + $0xc] sm:$0xf]
    %v34 = vld [vmem:[#allocation2] sm:$0x1]
    %v36 = vlaneseq
    %v37 = vshrl.u32 %v36, 7
    %v38 = vsub.s32 0, %v37
    %v39 = vrot.slane %v34, %v38
    %v45 = vunpack.c.l.b16 %v30
    %v46 = vunpack.c.l.b16 %v31
    %v47 = vunpack.c.l.b16 %v32
    %v48 = vunpack.c.l.b16 %v33
    %v49 = vpack.c.b16 %v46, %v45
    %v50 = vpack.c.b16 %v48, %v47
    %vm53 = vcmask 261120
    %v55 = vsel %vm53, %v29, 0
    %57 = vmatprep.subr.bf16.mxu0 0
    %58 = vmatpush1.bf16.msra.mxu0 0
    %59 = vmatprep.subr.bf16.mxu0 0
    %60 = vmatpush1.bf16.msra.mxu0 0
    %61 = vmatprep.subr.bf16.mxu0 0
    %62 = vmatpush1.bf16.msra.mxu0 0
    %63 = vmatprep.subr.bf16.mxu0 0
    %64 = vmatpush1.bf16.msra.mxu0 0
    %65 = vmatprep.subr.bf16.mxu0 0
    %66 = vmatpush1.bf16.msra.mxu0 0
    %67 = vmatprep.subr.bf16.mxu0 0
    %68 = vmatpush1.bf16.msra.mxu0 0
    %69 = vmatprep.subr.bf16.mxu0 0
    %70 = vmatpush1.bf16.msra.mxu0 %v50
    %71 = vmatprep.subr.bf16.mxu0 0
    %72 = vmatpush1.bf16.msra.mxu0 %v49
    %73 = vmatprep.subr.bf16.mxu0 0
    %74 = vmatpush2.bf16.msra.mxu0 0
    %75 = vmatprep.subr.bf16.mxu0 0
    %76 = vmatpush2.bf16.msra.mxu0 0
    %77 = vmatprep.subr.bf16.mxu0 0
    %78 = vmatpush2.bf16.msra.mxu0 0
    %79 = vmatprep.subr.bf16.mxu0 0
    %80 = vmatpush2.bf16.msra.mxu0 0
    %81 = vmatprep.subr.bf16.mxu0 0
    %82 = vmatpush2.bf16.msra.mxu0 0
    %83 = vmatprep.subr.bf16.mxu0 0
    %84 = vmatpush2.bf16.msra.mxu0 0
    %85 = vmatprep.subr.bf16.mxu0 0
    %86 = vmatpush2.bf16.msra.mxu0 0
    %87 = vmatprep.subr.bf16.mxu0 0
    %88 = vmatpush2.bf16.msra.mxu0 0
    %89 = vmatprep.mubr.bf16.mxu0 0
    %90 = vmatmul.mubr.bf16.gmra.mxu0 %v55
    %v91 = vpop.f32.mrf.mxu0
    %v92 = vadd.f32 %v39, %v91
    %v93 = vpop.f32.mrf.mxu0
    %v94 = vpop.f32.mrf.mxu0
    %v95 = vadd.f32 %v39, %v94
    %v96 = vpop.f32.mrf.mxu0
    %97 = vdwg.mxu0
    %vm98 = vcmask 523264
    %99 = vst.msk [vmem:[%s3] sm:$0xff] %vm98, %v92
    %100 = vst.msk [vmem:[%s3 + $0x8] sm:$0xff] %vm98, %v95
    // Predicated region
    $region18: #{te_aug_adapter_clip_attention.4} parent=1 // pred_check
      _
    $region19: #{te_aug_adapter_clip_attention.4} parent=1 // pred_check_branch
      %102 = sbr.rel (0) target = $region21
    $region20: #{te_aug_adapter_clip_attention.4} parent=1 // pred_region
      _
    $region21: #{te_aug_adapter_clip_attention.4} parent=1 // pred_fallthru
      _
    // Predicated region
    $region22: #{te_aug_adapter_clip_attention.4} parent=1 // pred_check
      _
    $region23: #{te_aug_adapter_clip_attention.4} parent=1 // pred_check_branch
      %104 = sbr.rel (0) target = $region25
    $region24: #{te_aug_adapter_clip_attention.4} parent=1 // pred_region
      _
    $region25: #{te_aug_adapter_clip_attention.4} parent=1 // pred_fallthru
      _
    %105 = vsyncpa [#allocation3], 1

// kernel: te_aug_adapter_clip_attention.3
$region0: #{te_aug_adapter_clip_attention.3}
  #allocation0 [shape = 'u32[]', space=smem, size = 0x4, offset = 0x4, fixed_abs, tag = 'smem constant byte address 0x4 - core index']
  #allocation1 [shape = 'u32[144,128]{1,0:T(1,128)}', space=vmem, size = 0x12000, scoped, tag = 'internal scratch']
  %s0 = inlined_call_operand.vmem [shape: f32[16,32], index: 0, kind: input, shape index: {}]
  %s1 = inlined_call_operand.vmem [shape: bf16[32,96], index: 1, kind: input, shape index: {}]
  %s2 = inlined_call_operand.hbm [shape: f32[1,96], index: 2, kind: input, shape index: {}]
  %s3 = inlined_call_operand.vmem [shape: f32[16,96], index: 3, kind: output, shape index: {}]
  %s4 = sld [smem:[#allocation0]]
  $region26: #{te_aug_adapter_clip_attention.3} parent=0
    _
  %s6 = ssub.s32 1, %s4
  %s7 = scalar_select 0, %s6, %s4
  $region1: #{te_aug_adapter_clip_attention.3} parent=0
    #allocation2 [shape = 'u8[512]{0}', space=vmem, size = 0x400, scoped, tag = 'input window, operand 2, single buffered']
    #allocation3 [shape = 's32[1]{0}', space=sflag, size = 0x4, scoped, tag = 'scoped memory for te_aug_adapter_clip_attention.3']
    %8 = vsyncpa [#allocation3], 0
    // Predicated region
    $region2: #{te_aug_adapter_clip_attention.3} parent=1 // pred_check
      _
    $region3: #{te_aug_adapter_clip_attention.3} parent=1 // pred_check_branch
      %10 = sbr.rel (0) target = $region5
    $region4: #{te_aug_adapter_clip_attention.3} parent=1 // pred_region
      _
    $region5: #{te_aug_adapter_clip_attention.3} parent=1 // pred_fallthru
      _
    // Predicated region
    $region6: #{te_aug_adapter_clip_attention.3} parent=1 // pred_check
      _
    $region7: #{te_aug_adapter_clip_attention.3} parent=1 // pred_check_branch
      %12 = sbr.rel (0) target = $region9
    $region8: #{te_aug_adapter_clip_attention.3} parent=1 // pred_region
      _
    $region9: #{te_aug_adapter_clip_attention.3} parent=1 // pred_fallthru
      _
    // Predicated region
    $region10: #{te_aug_adapter_clip_attention.3} parent=1 // pred_check
      _
    $region11: #{te_aug_adapter_clip_attention.3} parent=1 // pred_check_branch
      %14 = sbr.rel (0) target = $region13
    $region12: #{te_aug_adapter_clip_attention.3} parent=1 // pred_region
      %s16 = ssub.s32 16, 16
      %17 = vsyncadd [#allocation3], %s16
      %s19 = sshll.u32 [#allocation2], 4
      %s20 = int_to_ptr.vmem [resolvable:$true] %s19
      %22 = dma.hbm_to_vmem [thread:$0]  %s2, 16, %s20, [#allocation3]
    $region13: #{te_aug_adapter_clip_attention.3} parent=1 // pred_fallthru
      _
    // Predicated region
    $region14: #{te_aug_adapter_clip_attention.3} parent=1 // pred_check
      _
    $region15: #{te_aug_adapter_clip_attention.3} parent=1 // pred_check_branch
      %24 = sbr.rel (0) target = $region17
    $region16: #{te_aug_adapter_clip_attention.3} parent=1 // pred_region
      %25 = dma.done [#allocation3], 16
    $region17: #{te_aug_adapter_clip_attention.3} parent=1 // pred_fallthru
      _
    %v27 = vld [vmem:[%s0] sm:$0xff]
    %v28 = vld [vmem:[%s0 + $0x8] sm:$0xff]
    %v29 = vpack.c.bf16 %v28, %v27
    %v30 = vld [vmem:[%s1] sm:$0xf]
    %v31 = vld [vmem:[%s1 + $0x4] sm:$0xf]
    %v32 = vld [vmem:[%s1 + $0x8] sm:$0xf]
    %v33 = vld [vmem:[%s1 + $0xc] sm:$0xf]
    %v34 = vld [vmem:[#allocation2] sm:$0x1]
    %v36 = vlaneseq
    %v37 = vshrl.u32 %v36, 7
    %v38 = vsub.s32 0, %v37
    %v39 = vrot.slane %v34, %v38
    %v45 = vunpack.c.l.b16 %v30
    %v46 = vunpack.c.l.b16 %v31
    %v47 = vunpack.c.l.b16 %v32
    %v48 = vunpack.c.l.b16 %v33
    %v49 = vpack.c.b16 %v46, %v45
    %v50 = vpack.c.b16 %v48, %v47
    %vm53 = vcmask 261120
    %v55 = vsel %vm53, %v29, 0
    %57 = vmatprep.subr.bf16.mxu0 0
    %58 = vmatpush1.bf16.msra.mxu0 0
    %59 = vmatprep.subr.bf16.mxu0 0
    %60 = vmatpush1.bf16.msra.mxu0 0
    %61 = vmatprep.subr.bf16.mxu0 0
    %62 = vmatpush1.bf16.msra.mxu0 0
    %63 = vmatprep.subr.bf16.mxu0 0
    %64 = vmatpush1.bf16.msra.mxu0 0
    %65 = vmatprep.subr.bf16.mxu0 0
    %66 = vmatpush1.bf16.msra.mxu0 0
    %67 = vmatprep.subr.bf16.mxu0 0
    %68 = vmatpush1.bf16.msra.mxu0 0
    %69 = vmatprep.subr.bf16.mxu0 0
    %70 = vmatpush1.bf16.msra.mxu0 %v50
    %71 = vmatprep.subr.bf16.mxu0 0
    %72 = vmatpush1.bf16.msra.mxu0 %v49
    %73 = vmatprep.subr.bf16.mxu0 0
    %74 = vmatpush2.bf16.msra.mxu0 0
    %75 = vmatprep.subr.bf16.mxu0 0
    %76 = vmatpush2.bf16.msra.mxu0 0
    %77 = vmatprep.subr.bf16.mxu0 0
    %78 = vmatpush2.bf16.msra.mxu0 0
    %79 = vmatprep.subr.bf16.mxu0 0
    %80 = vmatpush2.bf16.msra.mxu0 0
    %81 = vmatprep.subr.bf16.mxu0 0
    %82 = vmatpush2.bf16.msra.mxu0 0
    %83 = vmatprep.subr.bf16.mxu0 0
    %84 = vmatpush2.bf16.msra.mxu0 0
    %85 = vmatprep.subr.bf16.mxu0 0
    %86 = vmatpush2.bf16.msra.mxu0 0
    %87 = vmatprep.subr.bf16.mxu0 0
    %88 = vmatpush2.bf16.msra.mxu0 0
    %89 = vmatprep.mubr.bf16.mxu0 0
    %90 = vmatmul.mubr.bf16.gmra.mxu0 %v55
    %v91 = vpop.f32.mrf.mxu0
    %v92 = vadd.f32 %v39, %v91
    %v93 = vpop.f32.mrf.mxu0
    %v94 = vpop.f32.mrf.mxu0
    %v95 = vadd.f32 %v39, %v94
    %v96 = vpop.f32.mrf.mxu0
    %97 = vdwg.mxu0
    %vm98 = vcmask 785408
    %99 = vst.msk [vmem:[%s3] sm:$0xff] %vm98, %v92
    %100 = vst.msk [vmem:[%s3 + $0x8] sm:$0xff] %vm98, %v95
    // Predicated region
    $region18: #{te_aug_adapter_clip_attention.3} parent=1 // pred_check
      _
    $region19: #{te_aug_adapter_clip_attention.3} parent=1 // pred_check_branch
      %102 = sbr.rel (0) target = $region21
    $region20: #{te_aug_adapter_clip_attention.3} parent=1 // pred_region
      _
    $region21: #{te_aug_adapter_clip_attention.3} parent=1 // pred_fallthru
      _
    // Predicated region
    $region22: #{te_aug_adapter_clip_attention.3} parent=1 // pred_check
      _
    $region23: #{te_aug_adapter_clip_attention.3} parent=1 // pred_check_branch
      %104 = sbr.rel (0) target = $region25
    $region24: #{te_aug_adapter_clip_attention.3} parent=1 // pred_region
      _
    $region25: #{te_aug_adapter_clip_attention.3} parent=1 // pred_fallthru
      _
    %105 = vsyncpa [#allocation3], 1

// kernel: te_aug_adapter_clip_attention.5
$region0: #{te_aug_adapter_clip_attention.5}
  #allocation0 [shape = 'u32[]', space=smem, size = 0x4, offset = 0x4, fixed_abs, tag = 'smem constant byte address 0x4 - core index']
  #allocation1 [shape = 'u32[144,128]{1,0:T(1,128)}', space=vmem, size = 0x12000, scoped, tag = 'internal scratch']
  #allocation2 [shape = 'f32[8,32]{1,0:T(8,128)}', space=vmem, size = 0x1000, scoped, tag = 'scratch operand']
  %s0 = inlined_call_operand.vmem [shape: f32[2,8,96], index: 0, kind: input, shape index: {}]
  %s1 = inlined_call_operand.vmem [shape: f32[2,8,64], index: 1, kind: input, shape index: {}]
  %s2 = inlined_call_operand.vmem [shape: f32[2,8,8], index: 2, kind: input, shape index: {}]
  %s3 = inlined_call_operand.vmem [shape: bf16[8,8], index: 3, kind: input, shape index: {}]
  %s4 = inlined_call_operand.vmem [shape: bf16[8,8], index: 4, kind: input, shape index: {}]
  %s5 = inlined_call_operand.vmem [shape: f32[8,1], index: 5, kind: input, shape index: {}]
  %s6 = inlined_call_operand.vmem [shape: bf16[32,32], index: 6, kind: input, shape index: {}]
  %s7 = inlined_call_operand.vmem [shape: f32[1,32], index: 7, kind: input, shape index: {}]
  %s8 = inlined_call_operand.vmem [shape: bf16[8,8], index: 8, kind: input, shape index: {}]
  %s9 = inlined_call_operand.vmem [shape: f32[8,1], index: 9, kind: input, shape index: {}]
  %s10 = inlined_call_operand.vmem [shape: bf16[32,32], index: 10, kind: input, shape index: {}]
  %s11 = inlined_call_operand.hbm [shape: f32[1,32], index: 11, kind: input, shape index: {}]
  %s12 = inlined_call_operand.vmem [shape: bf16[32,32], index: 12, kind: input, shape index: {}]
  %s13 = inlined_call_operand.hbm [shape: f32[1,32], index: 13, kind: input, shape index: {}]
  %s14 = inlined_call_operand.hbm [shape: f32[2,8,32], index: 14, kind: output, shape index: {}]
  %s15 = sld [smem:[#allocation0]]
  $region97: #{te_aug_adapter_clip_attention.5} parent=0
    _
  %s17 = ssub.s32 1, %s15
  %s18 = scalar_select 0, %s17, %s15
  $region1: #{te_aug_adapter_clip_attention.5} parent=0
    #allocation3 [shape = 'u8[512]{0}', space=vmem, size = 0x400, scoped, tag = 'input window, operand 11, single buffered']
    #allocation4 [shape = 's32[2]{0}', space=sflag, size = 0x8, scoped, tag = 'scoped memory for te_aug_adapter_clip_attention.5']
    #allocation5 [shape = 's32[2]{0}', space=sflag, size = 0x8, scoped, tag = 'scoped memory for te_aug_adapter_clip_attention.5']
    #allocation6 [shape = 'u8[512]{0}', space=vmem, size = 0x400, scoped, tag = 'input window, operand 13, single buffered']
    #allocation7 [shape = 's32[1]{0}', space=sflag, size = 0x4, scoped, tag = 'scoped memory for te_aug_adapter_clip_attention.5']
    #allocation8 [shape = 'u8[8192]{0}', space=vmem, size = 0x2000, scoped, tag = 'output window, operand 0']
    %19 = vsyncpa [#allocation4], 0
    %20 = vsyncpa [#allocation7], 0
    %21 = vsyncpa [#allocation5], 0
    %s22 = scalar_lea.sflag [#allocation5], 1
    %23 = vsyncpa %s22, 0
    loop: start=0, step=1, limit=4
    $region2: #{te_aug_adapter_clip_attention.5} parent=1 // loop_pre_header
      _
    $region3: #{te_aug_adapter_clip_attention.5} parent=1 // loop_header
      %s25 = sphi 0, %s29
      %p26 = scmp.ge.s32.totalorder %s25, 4
      %s35 = sphi 0, %s37
      %s38 = sphi 0, %s35
      %s39 = sphi 0, %s38
      %s55 = sphi 0, %s39
      %s61 = sphi 0, %s63
      %s64 = sphi 0, %s61
      %s65 = sphi 0, %s64
      %s81 = sphi 0, %s65
      %s87 = sphi 0, %s89
      %s90 = sphi 0, %s87
      %s91 = sphi 0, %s90
      %s107 = sphi 0, %s91
      %s111 = sphi 0, %s111
      %s113 = sphi 0, %s111
      %s114 = sphi 0, %s113
      %s128 = sphi 0, %s114
      %s132 = sphi 0, %s132
      %s134 = sphi 0, %s132
      %s135 = sphi 0, %s134
      %s149 = sphi 0, %s135
      %s153 = sphi 0, %s153
      %s155 = sphi 0, %s153
      %s156 = sphi 0, %s155
      %s170 = sphi 0, %s156
      %s174 = sphi 0, %s174
      %s176 = sphi 0, %s174
      %s177 = sphi 0, %s176
      %s191 = sphi 0, %s177
      %s195 = sphi 0, %s195
      %s197 = sphi 0, %s195
      %s198 = sphi 0, %s197
      %s212 = sphi 0, %s198
      %s216 = sphi 0, %s216
      %s218 = sphi 0, %s216
      %s219 = sphi 0, %s218
      %s233 = sphi 0, %s219
      %s237 = sphi 0, %s237
      %s239 = sphi 0, %s237
      %s240 = sphi 0, %s239
      %s254 = sphi 0, %s240
      %s258 = sphi 0, %s258
      %s260 = sphi 0, %s258
      %s261 = sphi 0, %s260
      %s275 = sphi 0, %s261
      %s279 = sphi 0, %s279
      %s281 = sphi 0, %s279
      %s282 = sphi 0, %s281
      %s296 = sphi 0, %s282
      %s300 = sphi 0, %s300
      %s302 = sphi 0, %s300
      %s303 = sphi 0, %s302
      %s317 = sphi 0, %s303
      %s321 = sphi 0, %s321
      %s323 = sphi 0, %s321
      %s324 = sphi 0, %s323
      %s338 = sphi 0, %s324
      %s344 = sphi 0, %s346
      %s347 = sphi 0, %s344
      %s348 = sphi 0, %s347
      %s364 = sphi 0, %s348
    $region4: #{te_aug_adapter_clip_attention.5} parent=1 // loop_header_branch
      %28 = sbr.rel (%p26) target = $region8
    $region5: #{te_aug_adapter_clip_attention.5} parent=1 // loop_body
      %s30 = ssub.s32 %s25, 1
      %s31 = ssub.s32 %s25, 2
      %s32 = sadd.s32 %s25, 1
      %s33 = ssub.s32 %s25, %s32
      %p34 = scmp.eq.s32.totalorder %s33, 0
      %s36 = sadd.s32 %s35, 1
      %s37 = scalar_select %p34, %s35, %s36
      %p40 = pneg %p34
      %p41 = scmp.eq.s32.totalorder %s25, 1
      %p42 = por %p40, %p41
      %p43 = scmp.ne.s32.totalorder %s35, %s38
      %p44 = scmp.eq.s32.totalorder %s25, 0
      %p45 = por %p43, %p44
      %p46 = scmp.ne.s32.totalorder %s35, %s38
      %p47 = scmp.eq.s32.totalorder %s30, 1
      %p48 = por %p46, %p47
      %p49 = scmp.ne.s32.totalorder %s38, %s39
      %p50 = scmp.eq.s32.totalorder %s30, 0
      %p51 = por %p49, %p50
      %p52 = scmp.ne.s32.totalorder %s38, %s39
      %p53 = scmp.eq.s32.totalorder %s31, 1
      %p54 = por %p52, %p53
      %p56 = scmp.ne.s32.totalorder %s39, %s55
      %p57 = scmp.eq.s32.totalorder %s31, 0
      %p58 = por %p56, %p57
      %s59 = ssub.s32 %s25, %s32
      %p60 = scmp.eq.s32.totalorder %s59, 0
      %s62 = sadd.s32 %s61, 1
      %s63 = scalar_select %p60, %s61, %s62
      %p66 = pneg %p60
      %p67 = scmp.eq.s32.totalorder %s25, 1
      %p68 = por %p66, %p67
      %p69 = scmp.ne.s32.totalorder %s61, %s64
      %p70 = scmp.eq.s32.totalorder %s25, 0
      %p71 = por %p69, %p70
      %p72 = scmp.ne.s32.totalorder %s61, %s64
      %p73 = scmp.eq.s32.totalorder %s30, 1
      %p74 = por %p72, %p73
      %p75 = scmp.ne.s32.totalorder %s64, %s65
      %p76 = scmp.eq.s32.totalorder %s30, 0
      %p77 = por %p75, %p76
      %p78 = scmp.ne.s32.totalorder %s64, %s65
      %p79 = scmp.eq.s32.totalorder %s31, 1
      %p80 = por %p78, %p79
      %p82 = scmp.ne.s32.totalorder %s65, %s81
      %p83 = scmp.eq.s32.totalorder %s31, 0
      %p84 = por %p82, %p83
      %s85 = ssub.s32 %s25, %s32
      %p86 = scmp.eq.s32.totalorder %s85, 0
      %s88 = sadd.s32 %s87, 1
      %s89 = scalar_select %p86, %s87, %s88
      %p92 = pneg %p86
      %p93 = scmp.eq.s32.totalorder %s25, 1
      %p94 = por %p92, %p93
      %p95 = scmp.ne.s32.totalorder %s87, %s90
      %p96 = scmp.eq.s32.totalorder %s25, 0
      %p97 = por %p95, %p96
      %p98 = scmp.ne.s32.totalorder %s87, %s90
      %p99 = scmp.eq.s32.totalorder %s30, 1
      %p100 = por %p98, %p99
      %p101 = scmp.ne.s32.totalorder %s90, %s91
      %p102 = scmp.eq.s32.totalorder %s30, 0
      %p103 = por %p101, %p102
      %p104 = scmp.ne.s32.totalorder %s90, %s91
      %p105 = scmp.eq.s32.totalorder %s31, 1
      %p106 = por %p104, %p105
      %p108 = scmp.ne.s32.totalorder %s91, %s107
      %p109 = scmp.eq.s32.totalorder %s31, 0
      %p110 = por %p108, %p109
      %s112 = sadd.s32 %s111, 1
      %p115 = scmp.eq.s32.totalorder %s25, 1
      %p116 = scmp.ne.s32.totalorder %s111, %s113
      %p117 = scmp.eq.s32.totalorder %s25, 0
      %p118 = por %p116, %p117
      %p119 = scmp.ne.s32.totalorder %s111, %s113
      %p120 = scmp.eq.s32.totalorder %s30, 1
      %p121 = por %p119, %p120
      %p122 = scmp.ne.s32.totalorder %s113, %s114
      %p123 = scmp.eq.s32.totalorder %s30, 0
      %p124 = por %p122, %p123
      %p125 = scmp.ne.s32.totalorder %s113, %s114
      %p126 = scmp.eq.s32.totalorder %s31, 1
      %p127 = por %p125, %p126
      %p129 = scmp.ne.s32.totalorder %s114, %s128
      %p130 = scmp.eq.s32.totalorder %s31, 0
      %p131 = por %p129, %p130
      %s133 = sadd.s32 %s132, 1
      %p136 = scmp.eq.s32.totalorder %s25, 1
      %p137 = scmp.ne.s32.totalorder %s132, %s134
      %p138 = scmp.eq.s32.totalorder %s25, 0
      %p139 = por %p137, %p138
      %p140 = scmp.ne.s32.totalorder %s132, %s134
      %p141 = scmp.eq.s32.totalorder %s30, 1
      %p142 = por %p140, %p141
      %p143 = scmp.ne.s32.totalorder %s134, %s135
      %p144 = scmp.eq.s32.totalorder %s30, 0
      %p145 = por %p143, %p144
      %p146 = scmp.ne.s32.totalorder %s134, %s135
      %p147 = scmp.eq.s32.totalorder %s31, 1
      %p148 = por %p146, %p147
      %p150 = scmp.ne.s32.totalorder %s135, %s149
      %p151 = scmp.eq.s32.totalorder %s31, 0
      %p152 = por %p150, %p151
      %s154 = sadd.s32 %s153, 1
      %p157 = scmp.eq.s32.totalorder %s25, 1
      %p158 = scmp.ne.s32.totalorder %s153, %s155
      %p159 = scmp.eq.s32.totalorder %s25, 0
      %p160 = por %p158, %p159
      %p161 = scmp.ne.s32.totalorder %s153, %s155
      %p162 = scmp.eq.s32.totalorder %s30, 1
      %p163 = por %p161, %p162
      %p164 = scmp.ne.s32.totalorder %s155, %s156
      %p165 = scmp.eq.s32.totalorder %s30, 0
      %p166 = por %p164, %p165
      %p167 = scmp.ne.s32.totalorder %s155, %s156
      %p168 = scmp.eq.s32.totalorder %s31, 1
      %p169 = por %p167, %p168
      %p171 = scmp.ne.s32.totalorder %s156, %s170
      %p172 = scmp.eq.s32.totalorder %s31, 0
      %p173 = por %p171, %p172
      %s175 = sadd.s32 %s174, 1
      %p178 = scmp.eq.s32.totalorder %s25, 1
      %p179 = scmp.ne.s32.totalorder %s174, %s176
      %p180 = scmp.eq.s32.totalorder %s25, 0
      %p181 = por %p179, %p180
      %p182 = scmp.ne.s32.totalorder %s174, %s176
      %p183 = scmp.eq.s32.totalorder %s30, 1
      %p184 = por %p182, %p183
      %p185 = scmp.ne.s32.totalorder %s176, %s177
      %p186 = scmp.eq.s32.totalorder %s30, 0
      %p187 = por %p185, %p186
      %p188 = scmp.ne.s32.totalorder %s176, %s177
      %p189 = scmp.eq.s32.totalorder %s31, 1
      %p190 = por %p188, %p189
      %p192 = scmp.ne.s32.totalorder %s177, %s191
      %p193 = scmp.eq.s32.totalorder %s31, 0
      %p194 = por %p192, %p193
      %s196 = sadd.s32 %s195, 1
      %p199 = scmp.eq.s32.totalorder %s25, 1
      %p200 = scmp.ne.s32.totalorder %s195, %s197
      %p201 = scmp.eq.s32.totalorder %s25, 0
      %p202 = por %p200, %p201
      %p203 = scmp.ne.s32.totalorder %s195, %s197
      %p204 = scmp.eq.s32.totalorder %s30, 1
      %p205 = por %p203, %p204
      %p206 = scmp.ne.s32.totalorder %s197, %s198
      %p207 = scmp.eq.s32.totalorder %s30, 0
      %p208 = por %p206, %p207
      %p209 = scmp.ne.s32.totalorder %s197, %s198
      %p210 = scmp.eq.s32.totalorder %s31, 1
      %p211 = por %p209, %p210
      %p213 = scmp.ne.s32.totalorder %s198, %s212
      %p214 = scmp.eq.s32.totalorder %s31, 0
      %p215 = por %p213, %p214
      %s217 = sadd.s32 %s216, 1
      %p220 = scmp.eq.s32.totalorder %s25, 1
      %p221 = scmp.ne.s32.totalorder %s216, %s218
      %p222 = scmp.eq.s32.totalorder %s25, 0
      %p223 = por %p221, %p222
      %p224 = scmp.ne.s32.totalorder %s216, %s218
      %p225 = scmp.eq.s32.totalorder %s30, 1
      %p226 = por %p224, %p225
      %p227 = scmp.ne.s32.totalorder %s218, %s219
      %p228 = scmp.eq.s32.totalorder %s30, 0
      %p229 = por %p227, %p228
      %p230 = scmp.ne.s32.totalorder %s218, %s219
      %p231 = scmp.eq.s32.totalorder %s31, 1
      %p232 = por %p230, %p231
      %p234 = scmp.ne.s32.totalorder %s219, %s233
      %p235 = scmp.eq.s32.totalorder %s31, 0
      %p236 = por %p234, %p235
      %s238 = sadd.s32 %s237, 1
      %p241 = scmp.eq.s32.totalorder %s25, 1
      %p242 = scmp.ne.s32.totalorder %s237, %s239
      %p243 = scmp.eq.s32.totalorder %s25, 0
      %p244 = por %p242, %p243
      %p245 = scmp.ne.s32.totalorder %s237, %s239
      %p246 = scmp.eq.s32.totalorder %s30, 1
      %p247 = por %p245, %p246
      %p248 = scmp.ne.s32.totalorder %s239, %s240
      %p249 = scmp.eq.s32.totalorder %s30, 0
      %p250 = por %p248, %p249
      %p251 = scmp.ne.s32.totalorder %s239, %s240
      %p252 = scmp.eq.s32.totalorder %s31, 1
      %p253 = por %p251, %p252
      %p255 = scmp.ne.s32.totalorder %s240, %s254
      %p256 = scmp.eq.s32.totalorder %s31, 0
      %p257 = por %p255, %p256
      %s259 = sadd.s32 %s258, 1
      %p262 = scmp.eq.s32.totalorder %s25, 1
      %p263 = scmp.ne.s32.totalorder %s258, %s260
      %p264 = scmp.eq.s32.totalorder %s25, 0
      %p265 = por %p263, %p264
      %p266 = scmp.ne.s32.totalorder %s258, %s260
      %p267 = scmp.eq.s32.totalorder %s30, 1
      %p268 = por %p266, %p267
      %p269 = scmp.ne.s32.totalorder %s260, %s261
      %p270 = scmp.eq.s32.totalorder %s30, 0
      %p271 = por %p269, %p270
      %p272 = scmp.ne.s32.totalorder %s260, %s261
      %p273 = scmp.eq.s32.totalorder %s31, 1
      %p274 = por %p272, %p273
      %p276 = scmp.ne.s32.totalorder %s261, %s275
      %p277 = scmp.eq.s32.totalorder %s31, 0
      %p278 = por %p276, %p277
      %s280 = sadd.s32 %s279, 1
      %p283 = scmp.eq.s32.totalorder %s25, 1
      %p284 = scmp.ne.s32.totalorder %s279, %s281
      %p285 = scmp.eq.s32.totalorder %s25, 0
      %p286 = por %p284, %p285
      %p287 = scmp.ne.s32.totalorder %s279, %s281
      %p288 = scmp.eq.s32.totalorder %s30, 1
      %p289 = por %p287, %p288
      %p290 = scmp.ne.s32.totalorder %s281, %s282
      %p291 = scmp.eq.s32.totalorder %s30, 0
      %p292 = por %p290, %p291
      %p293 = scmp.ne.s32.totalorder %s281, %s282
      %p294 = scmp.eq.s32.totalorder %s31, 1
      %p295 = por %p293, %p294
      %p297 = scmp.ne.s32.totalorder %s282, %s296
      %p298 = scmp.eq.s32.totalorder %s31, 0
      %p299 = por %p297, %p298
      %s301 = sadd.s32 %s300, 1
      %p304 = scmp.eq.s32.totalorder %s25, 1
      %p305 = scmp.ne.s32.totalorder %s300, %s302
      %p306 = scmp.eq.s32.totalorder %s25, 0
      %p307 = por %p305, %p306
      %p308 = scmp.ne.s32.totalorder %s300, %s302
      %p309 = scmp.eq.s32.totalorder %s30, 1
      %p310 = por %p308, %p309
      %p311 = scmp.ne.s32.totalorder %s302, %s303
      %p312 = scmp.eq.s32.totalorder %s30, 0
      %p313 = por %p311, %p312
      %p314 = scmp.ne.s32.totalorder %s302, %s303
      %p315 = scmp.eq.s32.totalorder %s31, 1
      %p316 = por %p314, %p315
      %p318 = scmp.ne.s32.totalorder %s303, %s317
      %p319 = scmp.eq.s32.totalorder %s31, 0
      %p320 = por %p318, %p319
      %s322 = sadd.s32 %s321, 1
      %p325 = scmp.eq.s32.totalorder %s25, 1
      %p326 = scmp.ne.s32.totalorder %s321, %s323
      %p327 = scmp.eq.s32.totalorder %s25, 0
      %p328 = por %p326, %p327
      %p329 = scmp.ne.s32.totalorder %s321, %s323
      %p330 = scmp.eq.s32.totalorder %s30, 1
      %p331 = por %p329, %p330
      %p332 = scmp.ne.s32.totalorder %s323, %s324
      %p333 = scmp.eq.s32.totalorder %s30, 0
      %p334 = por %p332, %p333
      %p335 = scmp.ne.s32.totalorder %s323, %s324
      %p336 = scmp.eq.s32.totalorder %s31, 1
      %p337 = por %p335, %p336
      %p339 = scmp.ne.s32.totalorder %s324, %s338
      %p340 = scmp.eq.s32.totalorder %s31, 0
      %p341 = por %p339, %p340
      %s342 = ssub.s32 %s25, %s32
      %p343 = scmp.eq.s32.totalorder %s342, 0
      %s345 = sadd.s32 %s344, 1
      %s346 = scalar_select %p343, %s344, %s345
      %p349 = pneg %p343
      %p350 = scmp.eq.s32.totalorder %s25, 1
      %p351 = por %p349, %p350
      %p352 = scmp.ne.s32.totalorder %s344, %s347
      %p353 = scmp.eq.s32.totalorder %s25, 0
      %p354 = por %p352, %p353
      %p355 = scmp.ne.s32.totalorder %s344, %s347
      %p356 = scmp.eq.s32.totalorder %s30, 1
      %p357 = por %p355, %p356
      %p358 = scmp.ne.s32.totalorder %s347, %s348
      %p359 = scmp.eq.s32.totalorder %s30, 0
      %p360 = por %p358, %p359
      %p361 = scmp.ne.s32.totalorder %s347, %s348
      %p362 = scmp.eq.s32.totalorder %s31, 1
      %p363 = por %p361, %p362
      %p365 = scmp.ne.s32.totalorder %s348, %s364
      %p366 = scmp.eq.s32.totalorder %s31, 0
      %p367 = por %p365, %p366
      %p368 = scmp.le.s32.totalorder 1, %s25
      %p369 = scmp.lt.s32.totalorder %s25, 3
      %p370 = pnand %p368, %p369
      %p371 = pneg %p370
      // Predicated region
      $region9: #{te_aug_adapter_clip_attention.5} parent=5 // pred_check
        _
      $region10: #{te_aug_adapter_clip_attention.5} parent=5 // pred_check_branch
        %373 = sbr.rel (%p370) target = $region12
      $region11: #{te_aug_adapter_clip_attention.5} parent=5 // pred_region
        %s374 = ssub.s32 %s25, 1
        // Predicated region
        $region13: #{te_aug_adapter_clip_attention.5} parent=11 // pred_check
          %p375 = pneg %p124
        $region14: #{te_aug_adapter_clip_attention.5} parent=11 // pred_check_branch
          %377 = sbr.rel (%p375) target = $region16
        $region15: #{te_aug_adapter_clip_attention.5} parent=11 // pred_region
          _
        $region16: #{te_aug_adapter_clip_attention.5} parent=11 // pred_fallthru
          _
        // Predicated region
        $region17: #{te_aug_adapter_clip_attention.5} parent=11 // pred_check
          %p378 = pneg %p145
        $region18: #{te_aug_adapter_clip_attention.5} parent=11 // pred_check_branch
          %380 = sbr.rel (%p378) target = $region20
        $region19: #{te_aug_adapter_clip_attention.5} parent=11 // pred_region
          _
        $region20: #{te_aug_adapter_clip_attention.5} parent=11 // pred_fallthru
          _
        // Predicated region
        $region21: #{te_aug_adapter_clip_attention.5} parent=11 // pred_check
          %p381 = pneg %p166
        $region22: #{te_aug_adapter_clip_attention.5} parent=11 // pred_check_branch
          %383 = sbr.rel (%p381) target = $region24
        $region23: #{te_aug_adapter_clip_attention.5} parent=11 // pred_region
          _
        $region24: #{te_aug_adapter_clip_attention.5} parent=11 // pred_fallthru
          _
        // Predicated region
        $region25: #{te_aug_adapter_clip_attention.5} parent=11 // pred_check
          %p384 = pneg %p187
        $region26: #{te_aug_adapter_clip_attention.5} parent=11 // pred_check_branch
          %386 = sbr.rel (%p384) target = $region28
        $region27: #{te_aug_adapter_clip_attention.5} parent=11 // pred_region
          _
        $region28: #{te_aug_adapter_clip_attention.5} parent=11 // pred_fallthru
          _
        // Predicated region
        $region29: #{te_aug_adapter_clip_attention.5} parent=11 // pred_check
          %p387 = pneg %p208
        $region30: #{te_aug_adapter_clip_attention.5} parent=11 // pred_check_branch
          %389 = sbr.rel (%p387) target = $region32
        $region31: #{te_aug_adapter_clip_attention.5} parent=11 // pred_region
          _
        $region32: #{te_aug_adapter_clip_attention.5} parent=11 // pred_fallthru
          _
        // Predicated region
        $region33: #{te_aug_adapter_clip_attention.5} parent=11 // pred_check
          %p390 = pneg %p229
        $region34: #{te_aug_adapter_clip_attention.5} parent=11 // pred_check_branch
          %392 = sbr.rel (%p390) target = $region36
        $region35: #{te_aug_adapter_clip_attention.5} parent=11 // pred_region
          _
        $region36: #{te_aug_adapter_clip_attention.5} parent=11 // pred_fallthru
          _
        // Predicated region
        $region37: #{te_aug_adapter_clip_attention.5} parent=11 // pred_check
          %p393 = pneg %p250
        $region38: #{te_aug_adapter_clip_attention.5} parent=11 // pred_check_branch
          %395 = sbr.rel (%p393) target = $region40
        $region39: #{te_aug_adapter_clip_attention.5} parent=11 // pred_region
          _
        $region40: #{te_aug_adapter_clip_attention.5} parent=11 // pred_fallthru
          _
        // Predicated region
        $region41: #{te_aug_adapter_clip_attention.5} parent=11 // pred_check
          %p396 = pneg %p271
        $region42: #{te_aug_adapter_clip_attention.5} parent=11 // pred_check_branch
          %398 = sbr.rel (%p396) target = $region44
        $region43: #{te_aug_adapter_clip_attention.5} parent=11 // pred_region
          _
        $region44: #{te_aug_adapter_clip_attention.5} parent=11 // pred_fallthru
          _
        // Predicated region
        $region45: #{te_aug_adapter_clip_attention.5} parent=11 // pred_check
          %p399 = pneg %p292
        $region46: #{te_aug_adapter_clip_attention.5} parent=11 // pred_check_branch
          %401 = sbr.rel (%p399) target = $region48
        $region47: #{te_aug_adapter_clip_attention.5} parent=11 // pred_region
          %s403 = ssub.s32 16, 16
          %404 = vsyncadd [#allocation4], %s403
          %s406 = sshll.u32 [#allocation3], 4
          %s407 = int_to_ptr.vmem [resolvable:$true] %s406
          %409 = dma.hbm_to_vmem [thread:$0]  %s11, 16, %s407, [#allocation4]
        $region48: #{te_aug_adapter_clip_attention.5} parent=11 // pred_fallthru
          _
        // Predicated region
        $region49: #{te_aug_adapter_clip_attention.5} parent=11 // pred_check
          %p410 = pneg %p313
        $region50: #{te_aug_adapter_clip_attention.5} parent=11 // pred_check_branch
          %412 = sbr.rel (%p410) target = $region52
        $region51: #{te_aug_adapter_clip_attention.5} parent=11 // pred_region
          _
        $region52: #{te_aug_adapter_clip_attention.5} parent=11 // pred_fallthru
          _
        // Predicated region
        $region53: #{te_aug_adapter_clip_attention.5} parent=11 // pred_check
          %p413 = pneg %p334
        $region54: #{te_aug_adapter_clip_attention.5} parent=11 // pred_check_branch
          %415 = sbr.rel (%p413) target = $region56
        $region55: #{te_aug_adapter_clip_attention.5} parent=11 // pred_region
          %s417 = ssub.s32 16, 16
          %418 = vsyncadd [#allocation7], %s417
          %s420 = sshll.u32 [#allocation6], 4
          %s421 = int_to_ptr.vmem [resolvable:$true] %s420
          %423 = dma.hbm_to_vmem [thread:$0]  %s13, 16, %s421, [#allocation7]
        $region56: #{te_aug_adapter_clip_attention.5} parent=11 // pred_fallthru
          _
      $region12: #{te_aug_adapter_clip_attention.5} parent=5 // pred_fallthru
        _
      %p424 = scmp.lt.s32.totalorder %s25, 2
      // Predicated region
      $region57: #{te_aug_adapter_clip_attention.5} parent=5 // pred_check
        %p425 = pneg %p424
      $region58: #{te_aug_adapter_clip_attention.5} parent=5 // pred_check_branch
        %427 = sbr.rel (%p425) target = $region60
      $region59: #{te_aug_adapter_clip_attention.5} parent=5 // pred_region
        // Predicated region
        $region61: #{te_aug_adapter_clip_attention.5} parent=59 // pred_check
          %p428 = pneg %p45
        $region62: #{te_aug_adapter_clip_attention.5} parent=59 // pred_check_branch
          %430 = sbr.rel (%p428) target = $region64
        $region63: #{te_aug_adapter_clip_attention.5} parent=59 // pred_region
          %p431 = scmp.lt.s32.totalorder %s25, 1
          %s432 = scalar_select %p431, %s25, 1
          %s433 = smul.addr %s432, 8
          %s434 = scalar_lea.vmem %s0, %s433
        $region64: #{te_aug_adapter_clip_attention.5} parent=59 // pred_fallthru
          _
        // Predicated region
        $region65: #{te_aug_adapter_clip_attention.5} parent=59 // pred_check
          %p435 = pneg %p71
        $region66: #{te_aug_adapter_clip_attention.5} parent=59 // pred_check_branch
          %437 = sbr.rel (%p435) target = $region68
        $region67: #{te_aug_adapter_clip_attention.5} parent=59 // pred_region
          %p438 = scmp.lt.s32.totalorder %s25, 1
          %s439 = scalar_select %p438, %s25, 1
          %s440 = smul.addr %s439, 8
          %s441 = scalar_lea.vmem %s1, %s440
        $region68: #{te_aug_adapter_clip_attention.5} parent=59 // pred_fallthru
          _
        // Predicated region
        $region69: #{te_aug_adapter_clip_attention.5} parent=59 // pred_check
          %p442 = pneg %p97
        $region70: #{te_aug_adapter_clip_attention.5} parent=59 // pred_check_branch
          %444 = sbr.rel (%p442) target = $region72
        $region71: #{te_aug_adapter_clip_attention.5} parent=59 // pred_region
          %p445 = scmp.lt.s32.totalorder %s25, 1
          %s446 = scalar_select %p445, %s25, 1
          %s447 = smul.addr %s446, 8
          %s448 = scalar_lea.vmem %s2, %s447
        $region72: #{te_aug_adapter_clip_attention.5} parent=59 // pred_fallthru
          _
      $region60: #{te_aug_adapter_clip_attention.5} parent=5 // pred_fallthru
        _
      %p449 = scmp.le.s32.totalorder 1, %s25
      %p450 = scmp.lt.s32.totalorder %s25, 3
      %p451 = pnand %p449, %p450
      %p452 = pneg %p451
      // Predicated region
      $region73: #{te_aug_adapter_clip_attention.5} parent=5 // pred_check
        _
      $region74: #{te_aug_adapter_clip_attention.5} parent=5 // pred_check_branch
        %454 = sbr.rel (%p451) target = $region76
      $region75: #{te_aug_adapter_clip_attention.5} parent=5 // pred_region
        %s455 = ssub.s32 %s25, 1
        // Predicated region
        $region77: #{te_aug_adapter_clip_attention.5} parent=75 // pred_check
          %p456 = pneg %p292
        $region78: #{te_aug_adapter_clip_attention.5} parent=75 // pred_check_branch
          %458 = sbr.rel (%p456) target = $region80
        $region79: #{te_aug_adapter_clip_attention.5} parent=75 // pred_region
          %459 = dma.done [#allocation4], 16
        $region80: #{te_aug_adapter_clip_attention.5} parent=75 // pred_fallthru
          _
        // Predicated region
        $region81: #{te_aug_adapter_clip_attention.5} parent=75 // pred_check
          %p460 = pneg %p334
        $region82: #{te_aug_adapter_clip_attention.5} parent=75 // pred_check_branch
          %462 = sbr.rel (%p460) target = $region84
        $region83: #{te_aug_adapter_clip_attention.5} parent=75 // pred_region
          %463 = dma.done [#allocation7], 16
        $region84: #{te_aug_adapter_clip_attention.5} parent=75 // pred_fallthru
          _
        %p464 = scmp.lt.s32.totalorder %s30, 1
        %s465 = scalar_select %p464, %s30, 1
        %s466 = smul.addr %s465, 8
        %s467 = scalar_lea.vmem %s0, %s466
        %p468 = pneg %p51
        %p469 = pneg %p48
        %p470 = scmp.lt.s32.totalorder %s30, 1
        %s471 = scalar_select %p470, %s30, 1
        %s472 = smul.addr %s471, 8
        %s473 = scalar_lea.vmem %s1, %s472
        %p474 = pneg %p77
        %p475 = pneg %p74
        %p476 = scmp.lt.s32.totalorder %s30, 1
        %s477 = scalar_select %p476, %s30, 1
        %s478 = smul.addr %s477, 8
        %s479 = scalar_lea.vmem %s2, %s478
        %p480 = pneg %p103
        %p481 = pneg %p100
        %p482 = pneg %p124
        %p483 = pneg %p121
        %p484 = pneg %p145
        %p485 = pneg %p142
        %p486 = pneg %p166
        %p487 = pneg %p163
        %p488 = pneg %p187
        %p489 = pneg %p184
        %p490 = pneg %p208
        %p491 = pneg %p205
        %p492 = pneg %p229
        %p493 = pneg %p226
        %p494 = pneg %p250
        %p495 = pneg %p247
        %p496 = pneg %p271
        %p497 = pneg %p268
        %p498 = pneg %p292
        %p499 = pneg %p289
        %p500 = pneg %p313
        %p501 = pneg %p310
        %p502 = pneg %p334
        %p503 = pneg %p331
        %p504 = pneg %p360
        %p505 = pneg %p357
        %s506 = sand.u32 %s347, 1
        %s507 = scalar_lea.sflag [#allocation5], %s506
        %s508 = sand.u32 %s347, 1
        %s509 = smul.addr %s508, 8
        %s510 = scalar_lea.vmem [#allocation8], %s509
        %p511 = scmp.lt.s32.totalorder %s30, 1
        %s512 = scalar_select %p511, %s30, 1
        %s513 = smul.addr %s512, 8
        %s514 = scalar_lea.vmem %s0, %s513
        %p515 = scmp.lt.s32.totalorder %s30, 1
        %s516 = scalar_select %p515, %s30, 1
        %s517 = smul.addr %s516, 8
        %s518 = scalar_lea.vmem %s1, %s517
        %p519 = scmp.lt.s32.totalorder %s30, 1
        %s520 = scalar_select %p519, %s30, 1
        %s521 = smul.addr %s520, 8
        %s522 = scalar_lea.vmem %s2, %s521
        %v524 = vld [vmem:[%s514] sm:$0xff]
        %v525 = vpack.c.bf16 %v524, %v524
        %v526 = vld [vmem:[%s518] sm:$0xff]
        %v527 = vpack.c.bf16 %v526, %v526
        %v528 = vld [vmem:[%s522] sm:$0xff]
        %530 = vrot.lane.b32.xlu0 %v525, 96
        %v531 = vpop.permute.xlu0 %530
        %vm532 = vcmask 64512
        %v534 = vsel %vm532, %v525, 0
        %v537 = vsel %vm532, %v531, 0
        %539 = vmatprep.subr.bf16.mxu0 0
        %540 = vmatpush1.bf16.xpose.msra.mxu0 0
        %541 = vmatprep.subr.bf16.mxu0 0
        %542 = vmatpush1.bf16.xpose.msra.mxu0 0
        %543 = vmatprep.subr.bf16.mxu0 0
        %544 = vmatpush1.bf16.xpose.msra.mxu0 0
        %545 = vmatprep.subr.bf16.mxu0 0
        %546 = vmatpush1.bf16.xpose.msra.mxu0 0
        %547 = vmatprep.subr.bf16.mxu0 0
        %548 = vmatpush1.bf16.xpose.msra.mxu0 0
        %549 = vmatprep.subr.bf16.mxu0 0
        %550 = vmatpush1.bf16.xpose.msra.mxu0 0
        %551 = vmatprep.subr.bf16.mxu0 0
        %552 = vmatpush1.bf16.xpose.msra.mxu0 0
        %553 = vmatprep.subr.bf16.mxu0 0
        %554 = vmatpush1.bf16.xpose.msra.mxu0 %v537
        %555 = vmatprep.subr.bf16.mxu0 0
        %556 = vmatpush2.bf16.xpose.msra.mxu0 0
        %557 = vmatprep.subr.bf16.mxu0 0
        %558 = vmatpush2.bf16.xpose.msra.mxu0 0
        %559 = vmatprep.subr.bf16.mxu0 0
        %560 = vmatpush2.bf16.xpose.msra.mxu0 0
        %561 = vmatprep.subr.bf16.mxu0 0
        %562 = vmatpush2.bf16.xpose.msra.mxu0 0
        %563 = vmatprep.subr.bf16.mxu0 0
        %564 = vmatpush2.bf16.xpose.msra.mxu0 0
        %565 = vmatprep.subr.bf16.mxu0 0
        %566 = vmatpush2.bf16.xpose.msra.mxu0 0
        %567 = vmatprep.subr.bf16.mxu0 0
        %568 = vmatpush2.bf16.xpose.msra.mxu0 0
        %569 = vmatprep.subr.bf16.mxu0 0
        %570 = vmatpush2.bf16.xpose.msra.mxu0 0
        %571 = vmatprep.mubr.bf16.mxu0 0
        %572 = vmatmul.mubr.bf16.gmra.mxu0 %v534
        %v573 = vpop.f32.mrf.mxu0
        %v574 = vadd.f32 %v528, %v573
        %v575 = vpop.f32.mrf.mxu0
        %v576 = vpop.f32.mrf.mxu0
        %v577 = vpop.f32.mrf.mxu0
        %578 = vdwg.mxu0
        %v579 = vsel %vm532, %v574, -inf
        %580 = vmax.xlane.f32.xlu0 %v579
        %v581 = vpop.xlane.xlu0 %580
        %v582 = vsub.f32 %v574, %v581
        %v583 = vmul.f32 %v582, 1.442695
        %v584 = vpow.pop %v583
        %v585 = vsel %vm532, %v584, 0.0
        %586 = vadd.xlane.f32.xlu0 %v585
        %v587 = vpop.xlane.xlu0 %586
        %v588 = vrcp.pop %v587
        %v589 = vmul.f32 %v584, %v588
        %v590 = vpack.c.bf16 %v589, %v589
        %591 = vrot.lane.b32.xlu0 %v525, 64
        %v592 = vpop.permute.xlu0 %591
        %v594 = vsel %vm532, %v590, 0
        %vm596 = vcmask 1043456
        %v598 = vsel %vm596, %v592, 0
        %600 = vmatprep.subr.bf16.mxu0 0
        %601 = vmatpush1.bf16.msra.mxu0 0
        %602 = vmatprep.subr.bf16.mxu0 0
        %603 = vmatpush1.bf16.msra.mxu0 0
        %604 = vmatprep.subr.bf16.mxu0 0
        %605 = vmatpush1.bf16.msra.mxu0 0
        %606 = vmatprep.subr.bf16.mxu0 0
        %607 = vmatpush1.bf16.msra.mxu0 0
        %608 = vmatprep.subr.bf16.mxu0 0
        %609 = vmatpush1.bf16.msra.mxu0 0
        %610 = vmatprep.subr.bf16.mxu0 0
        %611 = vmatpush1.bf16.msra.mxu0 0
        %612 = vmatprep.subr.bf16.mxu0 0
        %613 = vmatpush1.bf16.msra.mxu0 0
        %614 = vmatprep.subr.bf16.mxu0 0
        %615 = vmatpush1.bf16.msra.mxu0 %v598
        %616 = vmatprep.subr.bf16.mxu0 0
        %617 = vmatpush2.bf16.msra.mxu0 0
        %618 = vmatprep.subr.bf16.mxu0 0
        %619 = vmatpush2.bf16.msra.mxu0 0
        %620 = vmatprep.subr.bf16.mxu0 0
        %621 = vmatpush2.bf16.msra.mxu0 0
        %622 = vmatprep.subr.bf16.mxu0 0
        %623 = vmatpush2.bf16.msra.mxu0 0
        %624 = vmatprep.subr.bf16.mxu0 0
        %625 = vmatpush2.bf16.msra.mxu0 0
        %626 = vmatprep.subr.bf16.mxu0 0
        %627 = vmatpush2.bf16.msra.mxu0 0
        %628 = vmatprep.subr.bf16.mxu0 0
        %629 = vmatpush2.bf16.msra.mxu0 0
        %630 = vmatprep.subr.bf16.mxu0 0
        %631 = vmatpush2.bf16.msra.mxu0 0
        %632 = vmatprep.mubr.bf16.mxu0 0
        %633 = vmatmul.mubr.bf16.gmra.mxu0 %v594
        %v634 = vpop.f32.mrf.mxu0
        %v635 = vadd.f32 0.0, %v634
        %v636 = vpop.f32.mrf.mxu0
        %v637 = vpop.f32.mrf.mxu0
        %v638 = vpop.f32.mrf.mxu0
        %639 = vdwg.mxu0
        %v641 = vsel %vm532, %v527, 0
        %643 = vmatprep.subr.bf16.mxu0 0
        %644 = vmatpush1.bf16.xpose.msra.mxu0 0
        %645 = vmatprep.subr.bf16.mxu0 0
        %646 = vmatpush1.bf16.xpose.msra.mxu0 0
        %647 = vmatprep.subr.bf16.mxu0 0
        %648 = vmatpush1.bf16.xpose.msra.mxu0 0
        %649 = vmatprep.subr.bf16.mxu0 0
        %650 = vmatpush1.bf16.xpose.msra.mxu0 0
        %651 = vmatprep.subr.bf16.mxu0 0
        %652 = vmatpush1.bf16.xpose.msra.mxu0 0
        %653 = vmatprep.subr.bf16.mxu0 0
        %654 = vmatpush1.bf16.xpose.msra.mxu0 0
        %655 = vmatprep.subr.bf16.mxu0 0
        %656 = vmatpush1.bf16.xpose.msra.mxu0 0
        %657 = vmatprep.subr.bf16.mxu0 0
        %658 = vmatpush1.bf16.xpose.msra.mxu0 %v641
        %659 = vmatprep.subr.bf16.mxu0 0
        %660 = vmatpush2.bf16.xpose.msra.mxu0 0
        %661 = vmatprep.subr.bf16.mxu0 0
        %662 = vmatpush2.bf16.xpose.msra.mxu0 0
        %663 = vmatprep.subr.bf16.mxu0 0
        %664 = vmatpush2.bf16.xpose.msra.mxu0 0
        %665 = vmatprep.subr.bf16.mxu0 0
        %666 = vmatpush2.bf16.xpose.msra.mxu0 0
        %667 = vmatprep.subr.bf16.mxu0 0
        %668 = vmatpush2.bf16.xpose.msra.mxu0 0
        %669 = vmatprep.subr.bf16.mxu0 0
        %670 = vmatpush2.bf16.xpose.msra.mxu0 0
        %671 = vmatprep.subr.bf16.mxu0 0
        %672 = vmatpush2.bf16.xpose.msra.mxu0 0
        %673 = vmatprep.subr.bf16.mxu0 0
        %674 = vmatpush2.bf16.xpose.msra.mxu0 0
        %675 = vmatprep.mubr.bf16.mxu0 0
        %676 = vmatmul.mubr.bf16.gmra.mxu0 %v534
        %v677 = vpop.f32.mrf.mxu0
        %v678 = vadd.f32 0.0, %v677
        %v679 = vpop.f32.mrf.mxu0
        %v680 = vpop.f32.mrf.mxu0
        %v681 = vpop.f32.mrf.mxu0
        %682 = vdwg.mxu0
        %v683 = vsel %vm532, %v678, -inf
        %684 = vmax.xlane.f32.xlu0 %v683
        %v685 = vpop.xlane.xlu0 %684
        %v686 = vsub.f32 %v678, %v685
        %v687 = vmul.f32 %v686, 1.442695
        %v688 = vpow.pop %v687
        %v689 = vsel %vm532, %v688, 0.0
        %690 = vadd.xlane.f32.xlu0 %v689
        %v691 = vpop.xlane.xlu0 %690
        %v692 = vrcp.pop %v691
        %v693 = vmul.f32 %v688, %v692
        %v694 = vpack.c.bf16 %v693, %v693
        %696 = vrot.lane.b32.xlu0 %v527, 96
        %v697 = vpop.permute.xlu0 %696
        %v699 = vsel %vm532, %v694, 0
        %v702 = vsel %vm596, %v697, 0
        %704 = vmatprep.subr.bf16.mxu0 0
        %705 = vmatpush1.bf16.msra.mxu0 0
        %706 = vmatprep.subr.bf16.mxu0 0
        %707 = vmatpush1.bf16.msra.mxu0 0
        %708 = vmatprep.subr.bf16.mxu0 0
        %709 = vmatpush1.bf16.msra.mxu0 0
        %710 = vmatprep.subr.bf16.mxu0 0
        %711 = vmatpush1.bf16.msra.mxu0 0
        %712 = vmatprep.subr.bf16.mxu0 0
        %713 = vmatpush1.bf16.msra.mxu0 0
        %714 = vmatprep.subr.bf16.mxu0 0
        %715 = vmatpush1.bf16.msra.mxu0 0
        %716 = vmatprep.subr.bf16.mxu0 0
        %717 = vmatpush1.bf16.msra.mxu0 0
        %718 = vmatprep.subr.bf16.mxu0 0
        %719 = vmatpush1.bf16.msra.mxu0 %v702
        %720 = vmatprep.subr.bf16.mxu0 0
        %721 = vmatpush2.bf16.msra.mxu0 0
        %722 = vmatprep.subr.bf16.mxu0 0
        %723 = vmatpush2.bf16.msra.mxu0 0
        %724 = vmatprep.subr.bf16.mxu0 0
        %725 = vmatpush2.bf16.msra.mxu0 0
        %726 = vmatprep.subr.bf16.mxu0 0
        %727 = vmatpush2.bf16.msra.mxu0 0
        %728 = vmatprep.subr.bf16.mxu0 0
        %729 = vmatpush2.bf16.msra.mxu0 0
        %730 = vmatprep.subr.bf16.mxu0 0
        %731 = vmatpush2.bf16.msra.mxu0 0
        %732 = vmatprep.subr.bf16.mxu0 0
        %733 = vmatpush2.bf16.msra.mxu0 0
        %734 = vmatprep.subr.bf16.mxu0 0
        %735 = vmatpush2.bf16.msra.mxu0 0
        %736 = vmatprep.mubr.bf16.mxu0 0
        %737 = vmatmul.mubr.bf16.gmra.mxu0 %v699
        %v738 = vpop.f32.mrf.mxu0
        %v739 = vadd.f32 0.0, %v738
        %v740 = vpop.f32.mrf.mxu0
        %v741 = vpop.f32.mrf.mxu0
        %v742 = vpop.f32.mrf.mxu0
        %743 = vdwg.mxu0
        %744 = vrot.lane.b32.xlu0 %v525, 120
        %v745 = vpop.permute.xlu0 %744
        %746 = vrot.lane.b32.xlu0 %v525, 88
        %v747 = vpop.permute.xlu0 %746
        %v749 = vsel %vm532, %v745, 0
        %v752 = vsel %vm532, %v747, 0
        %754 = vmatprep.subr.bf16.mxu0 0
        %755 = vmatpush1.bf16.xpose.msra.mxu0 0
        %756 = vmatprep.subr.bf16.mxu0 0
        %757 = vmatpush1.bf16.xpose.msra.mxu0 0
        %758 = vmatprep.subr.bf16.mxu0 0
        %759 = vmatpush1.bf16.xpose.msra.mxu0 0
        %760 = vmatprep.subr.bf16.mxu0 0
        %761 = vmatpush1.bf16.xpose.msra.mxu0 0
        %762 = vmatprep.subr.bf16.mxu0 0
        %763 = vmatpush1.bf16.xpose.msra.mxu0 0
        %764 = vmatprep.subr.bf16.mxu0 0
        %765 = vmatpush1.bf16.xpose.msra.mxu0 0
        %766 = vmatprep.subr.bf16.mxu0 0
        %767 = vmatpush1.bf16.xpose.msra.mxu0 0
        %768 = vmatprep.subr.bf16.mxu0 0
        %769 = vmatpush1.bf16.xpose.msra.mxu0 %v752
        %770 = vmatprep.subr.bf16.mxu0 0
        %771 = vmatpush2.bf16.xpose.msra.mxu0 0
        %772 = vmatprep.subr.bf16.mxu0 0
        %773 = vmatpush2.bf16.xpose.msra.mxu0 0
        %774 = vmatprep.subr.bf16.mxu0 0
        %775 = vmatpush2.bf16.xpose.msra.mxu0 0
        %776 = vmatprep.subr.bf16.mxu0 0
        %777 = vmatpush2.bf16.xpose.msra.mxu0 0
        %778 = vmatprep.subr.bf16.mxu0 0
        %779 = vmatpush2.bf16.xpose.msra.mxu0 0
        %780 = vmatprep.subr.bf16.mxu0 0
        %781 = vmatpush2.bf16.xpose.msra.mxu0 0
        %782 = vmatprep.subr.bf16.mxu0 0
        %783 = vmatpush2.bf16.xpose.msra.mxu0 0
        %784 = vmatprep.subr.bf16.mxu0 0
        %785 = vmatpush2.bf16.xpose.msra.mxu0 0
        %786 = vmatprep.mubr.bf16.mxu0 0
        %787 = vmatmul.mubr.bf16.gmra.mxu0 %v749
        %v788 = vpop.f32.mrf.mxu0
        %v789 = vadd.f32 %v528, %v788
        %v790 = vpop.f32.mrf.mxu0
        %v791 = vpop.f32.mrf.mxu0
        %v792 = vpop.f32.mrf.mxu0
        %793 = vdwg.mxu0
        %v794 = vsel %vm532, %v789, -inf
        %795 = vmax.xlane.f32.xlu0 %v794
        %v796 = vpop.xlane.xlu0 %795
        %v797 = vsub.f32 %v789, %v796
        %v798 = vmul.f32 %v797, 1.442695
        %v799 = vpow.pop %v798
        %v800 = vsel %vm532, %v799, 0.0
        %801 = vadd.xlane.f32.xlu0 %v800
        %v802 = vpop.xlane.xlu0 %801
        %v803 = vrcp.pop %v802
        %v804 = vmul.f32 %v799, %v803
        %v805 = vpack.c.bf16 %v804, %v804
        %806 = vrot.lane.b32.xlu0 %v525, 56
        %v807 = vpop.permute.xlu0 %806
        %v809 = vsel %vm532, %v805, 0
        %v812 = vsel %vm596, %v807, 0
        %814 = vmatprep.subr.bf16.mxu0 0
        %815 = vmatpush1.bf16.msra.mxu0 0
        %816 = vmatprep.subr.bf16.mxu0 0
        %817 = vmatpush1.bf16.msra.mxu0 0
        %818 = vmatprep.subr.bf16.mxu0 0
        %819 = vmatpush1.bf16.msra.mxu0 0
        %820 = vmatprep.subr.bf16.mxu0 0
        %821 = vmatpush1.bf16.msra.mxu0 0
        %822 = vmatprep.subr.bf16.mxu0 0
        %823 = vmatpush1.bf16.msra.mxu0 0
        %824 = vmatprep.subr.bf16.mxu0 0
        %825 = vmatpush1.bf16.msra.mxu0 0
        %826 = vmatprep.subr.bf16.mxu0 0
        %827 = vmatpush1.bf16.msra.mxu0 0
        %828 = vmatprep.subr.bf16.mxu0 0
        %829 = vmatpush1.bf16.msra.mxu0 %v812
        %830 = vmatprep.subr.bf16.mxu0 0
        %831 = vmatpush2.bf16.msra.mxu0 0
        %832 = vmatprep.subr.bf16.mxu0 0
        %833 = vmatpush2.bf16.msra.mxu0 0
        %834 = vmatprep.subr.bf16.mxu0 0
        %835 = vmatpush2.bf16.msra.mxu0 0
        %836 = vmatprep.subr.bf16.mxu0 0
        %837 = vmatpush2.bf16.msra.mxu0 0
        %838 = vmatprep.subr.bf16.mxu0 0
        %839 = vmatpush2.bf16.msra.mxu0 0
        %840 = vmatprep.subr.bf16.mxu0 0
        %841 = vmatpush2.bf16.msra.mxu0 0
        %842 = vmatprep.subr.bf16.mxu0 0
        %843 = vmatpush2.bf16.msra.mxu0 0
        %844 = vmatprep.subr.bf16.mxu0 0
        %845 = vmatpush2.bf16.msra.mxu0 0
        %846 = vmatprep.mubr.bf16.mxu0 0
        %847 = vmatmul.mubr.bf16.gmra.mxu0 %v809
        %v848 = vpop.f32.mrf.mxu0
        %v849 = vadd.f32 0.0, %v848
        %v850 = vpop.f32.mrf.mxu0
        %v851 = vpop.f32.mrf.mxu0
        %v852 = vpop.f32.mrf.mxu0
        %853 = vdwg.mxu0
        %854 = vrot.lane.b32.xlu0 %v527, 120
        %v855 = vpop.permute.xlu0 %854
        %v857 = vsel %vm532, %v855, 0
        %859 = vmatprep.subr.bf16.mxu0 0
        %860 = vmatpush1.bf16.xpose.msra.mxu0 0
        %861 = vmatprep.subr.bf16.mxu0 0
        %862 = vmatpush1.bf16.xpose.msra.mxu0 0
        %863 = vmatprep.subr.bf16.mxu0 0
        %864 = vmatpush1.bf16.xpose.msra.mxu0 0
        %865 = vmatprep.subr.bf16.mxu0 0
        %866 = vmatpush1.bf16.xpose.msra.mxu0 0
        %867 = vmatprep.subr.bf16.mxu0 0
        %868 = vmatpush1.bf16.xpose.msra.mxu0 0
        %869 = vmatprep.subr.bf16.mxu0 0
        %870 = vmatpush1.bf16.xpose.msra.mxu0 0
        %871 = vmatprep.subr.bf16.mxu0 0
        %872 = vmatpush1.bf16.xpose.msra.mxu0 0
        %873 = vmatprep.subr.bf16.mxu0 0
        %874 = vmatpush1.bf16.xpose.msra.mxu0 %v857
        %875 = vmatprep.subr.bf16.mxu0 0
        %876 = vmatpush2.bf16.xpose.msra.mxu0 0
        %877 = vmatprep.subr.bf16.mxu0 0
        %878 = vmatpush2.bf16.xpose.msra.mxu0 0
        %879 = vmatprep.subr.bf16.mxu0 0
        %880 = vmatpush2.bf16.xpose.msra.mxu0 0
        %881 = vmatprep.subr.bf16.mxu0 0
        %882 = vmatpush2.bf16.xpose.msra.mxu0 0
        %883 = vmatprep.subr.bf16.mxu0 0
        %884 = vmatpush2.bf16.xpose.msra.mxu0 0
        %885 = vmatprep.subr.bf16.mxu0 0
        %886 = vmatpush2.bf16.xpose.msra.mxu0 0
        %887 = vmatprep.subr.bf16.mxu0 0
        %888 = vmatpush2.bf16.xpose.msra.mxu0 0
        %889 = vmatprep.subr.bf16.mxu0 0
        %890 = vmatpush2.bf16.xpose.msra.mxu0 0
        %891 = vmatprep.mubr.bf16.mxu0 0
        %892 = vmatmul.mubr.bf16.gmra.mxu0 %v749
        %v893 = vpop.f32.mrf.mxu0
        %v894 = vadd.f32 0.0, %v893
        %v895 = vpop.f32.mrf.mxu0
        %v896 = vpop.f32.mrf.mxu0
        %v897 = vpop.f32.mrf.mxu0
        %898 = vdwg.mxu0
        %v899 = vsel %vm532, %v894, -inf
        %900 = vmax.xlane.f32.xlu0 %v899
        %v901 = vpop.xlane.xlu0 %900
        %v902 = vsub.f32 %v894, %v901
        %v903 = vmul.f32 %v902, 1.442695
        %v904 = vpow.pop %v903
        %v905 = vsel %vm532, %v904, 0.0
        %906 = vadd.xlane.f32.xlu0 %v905
        %v907 = vpop.xlane.xlu0 %906
        %v908 = vrcp.pop %v907
        %v909 = vmul.f32 %v904, %v908
        %v910 = vpack.c.bf16 %v909, %v909
        %911 = vrot.lane.b32.xlu0 %v527, 88
        %v912 = vpop.permute.xlu0 %911
        %v914 = vsel %vm532, %v910, 0
        %v917 = vsel %vm596, %v912, 0
        %919 = vmatprep.subr.bf16.mxu0 0
        %920 = vmatpush1.bf16.msra.mxu0 0
        %921 = vmatprep.subr.bf16.mxu0 0
        %922 = vmatpush1.bf16.msra.mxu0 0
        %923 = vmatprep.subr.bf16.mxu0 0
        %924 = vmatpush1.bf16.msra.mxu0 0
        %925 = vmatprep.subr.bf16.mxu0 0
        %926 = vmatpush1.bf16.msra.mxu0 0
        %927 = vmatprep.subr.bf16.mxu0 0
        %928 = vmatpush1.bf16.msra.mxu0 0
        %929 = vmatprep.subr.bf16.mxu0 0
        %930 = vmatpush1.bf16.msra.mxu0 0
        %931 = vmatprep.subr.bf16.mxu0 0
        %932 = vmatpush1.bf16.msra.mxu0 0
        %933 = vmatprep.subr.bf16.mxu0 0
        %934 = vmatpush1.bf16.msra.mxu0 %v917
        %935 = vmatprep.subr.bf16.mxu0 0
        %936 = vmatpush2.bf16.msra.mxu0 0
        %937 = vmatprep.subr.bf16.mxu0 0
        %938 = vmatpush2.bf16.msra.mxu0 0
        %939 = vmatprep.subr.bf16.mxu0 0
        %940 = vmatpush2.bf16.msra.mxu0 0
        %941 = vmatprep.subr.bf16.mxu0 0
        %942 = vmatpush2.bf16.msra.mxu0 0
        %943 = vmatprep.subr.bf16.mxu0 0
        %944 = vmatpush2.bf16.msra.mxu0 0
        %945 = vmatprep.subr.bf16.mxu0 0
        %946 = vmatpush2.bf16.msra.mxu0 0
        %947 = vmatprep.subr.bf16.mxu0 0
        %948 = vmatpush2.bf16.msra.mxu0 0
        %949 = vmatprep.subr.bf16.mxu0 0
        %950 = vmatpush2.bf16.msra.mxu0 0
        %951 = vmatprep.mubr.bf16.mxu0 0
        %952 = vmatmul.mubr.bf16.gmra.mxu0 %v914
        %v953 = vpop.f32.mrf.mxu0
        %v954 = vadd.f32 0.0, %v953
        %v955 = vpop.f32.mrf.mxu0
        %v956 = vpop.f32.mrf.mxu0
        %v957 = vpop.f32.mrf.mxu0
        %958 = vdwg.mxu0
        %959 = vrot.lane.b32.xlu0 %v525, 112
        %v960 = vpop.permute.xlu0 %959
        %961 = vrot.lane.b32.xlu0 %v525, 80
        %v962 = vpop.permute.xlu0 %961
        %v964 = vsel %vm532, %v960, 0
        %v967 = vsel %vm532, %v962, 0
        %969 = vmatprep.subr.bf16.mxu0 0
        %970 = vmatpush1.bf16.xpose.msra.mxu0 0
        %971 = vmatprep.subr.bf16.mxu0 0
        %972 = vmatpush1.bf16.xpose.msra.mxu0 0
        %973 = vmatprep.subr.bf16.mxu0 0
        %974 = vmatpush1.bf16.xpose.msra.mxu0 0
        %975 = vmatprep.subr.bf16.mxu0 0
        %976 = vmatpush1.bf16.xpose.msra.mxu0 0
        %977 = vmatprep.subr.bf16.mxu0 0
        %978 = vmatpush1.bf16.xpose.msra.mxu0 0
        %979 = vmatprep.subr.bf16.mxu0 0
        %980 = vmatpush1.bf16.xpose.msra.mxu0 0
        %981 = vmatprep.subr.bf16.mxu0 0
        %982 = vmatpush1.bf16.xpose.msra.mxu0 0
        %983 = vmatprep.subr.bf16.mxu0 0
        %984 = vmatpush1.bf16.xpose.msra.mxu0 %v967
        %985 = vmatprep.subr.bf16.mxu0 0
        %986 = vmatpush2.bf16.xpose.msra.mxu0 0
        %987 = vmatprep.subr.bf16.mxu0 0
        %988 = vmatpush2.bf16.xpose.msra.mxu0 0
        %989 = vmatprep.subr.bf16.mxu0 0
        %990 = vmatpush2.bf16.xpose.msra.mxu0 0
        %991 = vmatprep.subr.bf16.mxu0 0
        %992 = vmatpush2.bf16.xpose.msra.mxu0 0
        %993 = vmatprep.subr.bf16.mxu0 0
        %994 = vmatpush2.bf16.xpose.msra.mxu0 0
        %995 = vmatprep.subr.bf16.mxu0 0
        %996 = vmatpush2.bf16.xpose.msra.mxu0 0
        %997 = vmatprep.subr.bf16.mxu0 0
        %998 = vmatpush2.bf16.xpose.msra.mxu0 0
        %999 = vmatprep.subr.bf16.mxu0 0
        %1000 = vmatpush2.bf16.xpose.msra.mxu0 0
        %1001 = vmatprep.mubr.bf16.mxu0 0
        %1002 = vmatmul.mubr.bf16.gmra.mxu0 %v964
        %v1003 = vpop.f32.mrf.mxu0
        %v1004 = vadd.f32 %v528, %v1003
        %v1005 = vpop.f32.mrf.mxu0
        %v1006 = vpop.f32.mrf.mxu0
        %v1007 = vpop.f32.mrf.mxu0
        %1008 = vdwg.mxu0
        %v1009 = vsel %vm532, %v1004, -inf
        %1010 = vmax.xlane.f32.xlu0 %v1009
        %v1011 = vpop.xlane.xlu0 %1010
        %v1012 = vsub.f32 %v1004, %v1011
        %v1013 = vmul.f32 %v1012, 1.442695
        %v1014 = vpow.pop %v1013
        %v1015 = vsel %vm532, %v1014, 0.0
        %1016 = vadd.xlane.f32.xlu0 %v1015
        %v1017 = vpop.xlane.xlu0 %1016
        %v1018 = vrcp.pop %v1017
        %v1019 = vmul.f32 %v1014, %v1018
        %v1020 = vpack.c.bf16 %v1019, %v1019
        %1021 = vrot.lane.b32.xlu0 %v525, 48
        %v1022 = vpop.permute.xlu0 %1021
        %v1024 = vsel %vm532, %v1020, 0
        %v1027 = vsel %vm596, %v1022, 0
        %1029 = vmatprep.subr.bf16.mxu0 0
        %1030 = vmatpush1.bf16.msra.mxu0 0
        %1031 = vmatprep.subr.bf16.mxu0 0
        %1032 = vmatpush1.bf16.msra.mxu0 0
        %1033 = vmatprep.subr.bf16.mxu0 0
        %1034 = vmatpush1.bf16.msra.mxu0 0
        %1035 = vmatprep.subr.bf16.mxu0 0
        %1036 = vmatpush1.bf16.msra.mxu0 0
        %1037 = vmatprep.subr.bf16.mxu0 0
        %1038 = vmatpush1.bf16.msra.mxu0 0
        %1039 = vmatprep.subr.bf16.mxu0 0
        %1040 = vmatpush1.bf16.msra.mxu0 0
        %1041 = vmatprep.subr.bf16.mxu0 0
        %1042 = vmatpush1.bf16.msra.mxu0 0
        %1043 = vmatprep.subr.bf16.mxu0 0
        %1044 = vmatpush1.bf16.msra.mxu0 %v1027
        %1045 = vmatprep.subr.bf16.mxu0 0
        %1046 = vmatpush2.bf16.msra.mxu0 0
        %1047 = vmatprep.subr.bf16.mxu0 0
        %1048 = vmatpush2.bf16.msra.mxu0 0
        %1049 = vmatprep.subr.bf16.mxu0 0
        %1050 = vmatpush2.bf16.msra.mxu0 0
        %1051 = vmatprep.subr.bf16.mxu0 0
        %1052 = vmatpush2.bf16.msra.mxu0 0
        %1053 = vmatprep.subr.bf16.mxu0 0
        %1054 = vmatpush2.bf16.msra.mxu0 0
        %1055 = vmatprep.subr.bf16.mxu0 0
        %1056 = vmatpush2.bf16.msra.mxu0 0
        %1057 = vmatprep.subr.bf16.mxu0 0
        %1058 = vmatpush2.bf16.msra.mxu0 0
        %1059 = vmatprep.subr.bf16.mxu0 0
        %1060 = vmatpush2.bf16.msra.mxu0 0
        %1061 = vmatprep.mubr.bf16.mxu0 0
        %1062 = vmatmul.mubr.bf16.gmra.mxu0 %v1024
        %v1063 = vpop.f32.mrf.mxu0
        %v1064 = vadd.f32 0.0, %v1063
        %v1065 = vpop.f32.mrf.mxu0
        %v1066 = vpop.f32.mrf.mxu0
        %v1067 = vpop.f32.mrf.mxu0
        %1068 = vdwg.mxu0
        %1069 = vrot.lane.b32.xlu0 %v527, 112
        %v1070 = vpop.permute.xlu0 %1069
        %v1072 = vsel %vm532, %v1070, 0
        %1074 = vmatprep.subr.bf16.mxu0 0
        %1075 = vmatpush1.bf16.xpose.msra.mxu0 0
        %1076 = vmatprep.subr.bf16.mxu0 0
        %1077 = vmatpush1.bf16.xpose.msra.mxu0 0
        %1078 = vmatprep.subr.bf16.mxu0 0
        %1079 = vmatpush1.bf16.xpose.msra.mxu0 0
        %1080 = vmatprep.subr.bf16.mxu0 0
        %1081 = vmatpush1.bf16.xpose.msra.mxu0 0
        %1082 = vmatprep.subr.bf16.mxu0 0
        %1083 = vmatpush1.bf16.xpose.msra.mxu0 0
        %1084 = vmatprep.subr.bf16.mxu0 0
        %1085 = vmatpush1.bf16.xpose.msra.mxu0 0
        %1086 = vmatprep.subr.bf16.mxu0 0
        %1087 = vmatpush1.bf16.xpose.msra.mxu0 0
        %1088 = vmatprep.subr.bf16.mxu0 0
        %1089 = vmatpush1.bf16.xpose.msra.mxu0 %v1072
        %1090 = vmatprep.subr.bf16.mxu0 0
        %1091 = vmatpush2.bf16.xpose.msra.mxu0 0
        %1092 = vmatprep.subr.bf16.mxu0 0
        %1093 = vmatpush2.bf16.xpose.msra.mxu0 0
        %1094 = vmatprep.subr.bf16.mxu0 0
        %1095 = vmatpush2.bf16.xpose.msra.mxu0 0
        %1096 = vmatprep.subr.bf16.mxu0 0
        %1097 = vmatpush2.bf16.xpose.msra.mxu0 0
        %1098 = vmatprep.subr.bf16.mxu0 0
        %1099 = vmatpush2.bf16.xpose.msra.mxu0 0
        %1100 = vmatprep.subr.bf16.mxu0 0
        %1101 = vmatpush2.bf16.xpose.msra.mxu0 0
        %1102 = vmatprep.subr.bf16.mxu0 0
        %1103 = vmatpush2.bf16.xpose.msra.mxu0 0
        %1104 = vmatprep.subr.bf16.mxu0 0
        %1105 = vmatpush2.bf16.xpose.msra.mxu0 0
        %1106 = vmatprep.mubr.bf16.mxu0 0
        %1107 = vmatmul.mubr.bf16.gmra.mxu0 %v964
        %v1108 = vpop.f32.mrf.mxu0
        %v1109 = vadd.f32 0.0, %v1108
        %v1110 = vpop.f32.mrf.mxu0
        %v1111 = vpop.f32.mrf.mxu0
        %v1112 = vpop.f32.mrf.mxu0
        %1113 = vdwg.mxu0
        %v1114 = vsel %vm532, %v1109, -inf
        %1115 = vmax.xlane.f32.xlu0 %v1114
        %v1116 = vpop.xlane.xlu0 %1115
        %v1117 = vsub.f32 %v1109, %v1116
        %v1118 = vmul.f32 %v1117, 1.442695
        %v1119 = vpow.pop %v1118
        %v1120 = vsel %vm532, %v1119, 0.0
        %1121 = vadd.xlane.f32.xlu0 %v1120
        %v1122 = vpop.xlane.xlu0 %1121
        %v1123 = vrcp.pop %v1122
        %v1124 = vmul.f32 %v1119, %v1123
        %v1125 = vpack.c.bf16 %v1124, %v1124
        %1126 = vrot.lane.b32.xlu0 %v527, 80
        %v1127 = vpop.permute.xlu0 %1126
        %v1129 = vsel %vm532, %v1125, 0
        %v1132 = vsel %vm596, %v1127, 0
        %1134 = vmatprep.subr.bf16.mxu0 0
        %1135 = vmatpush1.bf16.msra.mxu0 0
        %1136 = vmatprep.subr.bf16.mxu0 0
        %1137 = vmatpush1.bf16.msra.mxu0 0
        %1138 = vmatprep.subr.bf16.mxu0 0
        %1139 = vmatpush1.bf16.msra.mxu0 0
        %1140 = vmatprep.subr.bf16.mxu0 0
        %1141 = vmatpush1.bf16.msra.mxu0 0
        %1142 = vmatprep.subr.bf16.mxu0 0
        %1143 = vmatpush1.bf16.msra.mxu0 0
        %1144 = vmatprep.subr.bf16.mxu0 0
        %1145 = vmatpush1.bf16.msra.mxu0 0
        %1146 = vmatprep.subr.bf16.mxu0 0
        %1147 = vmatpush1.bf16.msra.mxu0 0
        %1148 = vmatprep.subr.bf16.mxu0 0
        %1149 = vmatpush1.bf16.msra.mxu0 %v1132
        %1150 = vmatprep.subr.bf16.mxu0 0
        %1151 = vmatpush2.bf16.msra.mxu0 0
        %1152 = vmatprep.subr.bf16.mxu0 0
        %1153 = vmatpush2.bf16.msra.mxu0 0
        %1154 = vmatprep.subr.bf16.mxu0 0
        %1155 = vmatpush2.bf16.msra.mxu0 0
        %1156 = vmatprep.subr.bf16.mxu0 0
        %1157 = vmatpush2.bf16.msra.mxu0 0
        %1158 = vmatprep.subr.bf16.mxu0 0
        %1159 = vmatpush2.bf16.msra.mxu0 0
        %1160 = vmatprep.subr.bf16.mxu0 0
        %1161 = vmatpush2.bf16.msra.mxu0 0
        %1162 = vmatprep.subr.bf16.mxu0 0
        %1163 = vmatpush2.bf16.msra.mxu0 0
        %1164 = vmatprep.subr.bf16.mxu0 0
        %1165 = vmatpush2.bf16.msra.mxu0 0
        %1166 = vmatprep.mubr.bf16.mxu0 0
        %1167 = vmatmul.mubr.bf16.gmra.mxu0 %v1129
        %v1168 = vpop.f32.mrf.mxu0
        %v1169 = vadd.f32 0.0, %v1168
        %v1170 = vpop.f32.mrf.mxu0
        %v1171 = vpop.f32.mrf.mxu0
        %v1172 = vpop.f32.mrf.mxu0
        %1173 = vdwg.mxu0
        %1174 = vrot.lane.b32.xlu0 %v525, 104
        %v1175 = vpop.permute.xlu0 %1174
        %1176 = vrot.lane.b32.xlu0 %v525, 72
        %v1177 = vpop.permute.xlu0 %1176
        %v1179 = vsel %vm532, %v1175, 0
        %v1182 = vsel %vm532, %v1177, 0
        %1184 = vmatprep.subr.bf16.mxu0 0
        %1185 = vmatpush1.bf16.xpose.msra.mxu0 0
        %1186 = vmatprep.subr.bf16.mxu0 0
        %1187 = vmatpush1.bf16.xpose.msra.mxu0 0
        %1188 = vmatprep.subr.bf16.mxu0 0
        %1189 = vmatpush1.bf16.xpose.msra.mxu0 0
        %1190 = vmatprep.subr.bf16.mxu0 0
        %1191 = vmatpush1.bf16.xpose.msra.mxu0 0
        %1192 = vmatprep.subr.bf16.mxu0 0
        %1193 = vmatpush1.bf16.xpose.msra.mxu0 0
        %1194 = vmatprep.subr.bf16.mxu0 0
        %1195 = vmatpush1.bf16.xpose.msra.mxu0 0
        %1196 = vmatprep.subr.bf16.mxu0 0
        %1197 = vmatpush1.bf16.xpose.msra.mxu0 0
        %1198 = vmatprep.subr.bf16.mxu0 0
        %1199 = vmatpush1.bf16.xpose.msra.mxu0 %v1182
        %1200 = vmatprep.subr.bf16.mxu0 0
        %1201 = vmatpush2.bf16.xpose.msra.mxu0 0
        %1202 = vmatprep.subr.bf16.mxu0 0
        %1203 = vmatpush2.bf16.xpose.msra.mxu0 0
        %1204 = vmatprep.subr.bf16.mxu0 0
        %1205 = vmatpush2.bf16.xpose.msra.mxu0 0
        %1206 = vmatprep.subr.bf16.mxu0 0
        %1207 = vmatpush2.bf16.xpose.msra.mxu0 0
        %1208 = vmatprep.subr.bf16.mxu0 0
        %1209 = vmatpush2.bf16.xpose.msra.mxu0 0
        %1210 = vmatprep.subr.bf16.mxu0 0
        %1211 = vmatpush2.bf16.xpose.msra.mxu0 0
        %1212 = vmatprep.subr.bf16.mxu0 0
        %1213 = vmatpush2.bf16.xpose.msra.mxu0 0
        %1214 = vmatprep.subr.bf16.mxu0 0
        %1215 = vmatpush2.bf16.xpose.msra.mxu0 0
        %1216 = vmatprep.mubr.bf16.mxu0 0
        %1217 = vmatmul.mubr.bf16.gmra.mxu0 %v1179
        %v1218 = vpop.f32.mrf.mxu0
        %v1219 = vadd.f32 %v528, %v1218
        %v1220 = vpop.f32.mrf.mxu0
        %v1221 = vpop.f32.mrf.mxu0
        %v1222 = vpop.f32.mrf.mxu0
        %1223 = vdwg.mxu0
        %v1224 = vsel %vm532, %v1219, -inf
        %1225 = vmax.xlane.f32.xlu0 %v1224
        %v1226 = vpop.xlane.xlu0 %1225
        %v1227 = vsub.f32 %v1219, %v1226
        %v1228 = vmul.f32 %v1227, 1.442695
        %v1229 = vpow.pop %v1228
        %v1230 = vsel %vm532, %v1229, 0.0
        %1231 = vadd.xlane.f32.xlu0 %v1230
        %v1232 = vpop.xlane.xlu0 %1231
        %v1233 = vrcp.pop %v1232
        %v1234 = vmul.f32 %v1229, %v1233
        %v1235 = vpack.c.bf16 %v1234, %v1234
        %1236 = vrot.lane.b32.xlu0 %v525, 40
        %v1237 = vpop.permute.xlu0 %1236
        %v1239 = vsel %vm532, %v1235, 0
        %v1242 = vsel %vm596, %v1237, 0
        %1244 = vmatprep.subr.bf16.mxu0 0
        %1245 = vmatpush1.bf16.msra.mxu0 0
        %1246 = vmatprep.subr.bf16.mxu0 0
        %1247 = vmatpush1.bf16.msra.mxu0 0
        %1248 = vmatprep.subr.bf16.mxu0 0
        %1249 = vmatpush1.bf16.msra.mxu0 0
        %1250 = vmatprep.subr.bf16.mxu0 0
        %1251 = vmatpush1.bf16.msra.mxu0 0
        %1252 = vmatprep.subr.bf16.mxu0 0
        %1253 = vmatpush1.bf16.msra.mxu0 0
        %1254 = vmatprep.subr.bf16.mxu0 0
        %1255 = vmatpush1.bf16.msra.mxu0 0
        %1256 = vmatprep.subr.bf16.mxu0 0
        %1257 = vmatpush1.bf16.msra.mxu0 0
        %1258 = vmatprep.subr.bf16.mxu0 0
        %1259 = vmatpush1.bf16.msra.mxu0 %v1242
        %1260 = vmatprep.subr.bf16.mxu0 0
        %1261 = vmatpush2.bf16.msra.mxu0 0
        %1262 = vmatprep.subr.bf16.mxu0 0
        %1263 = vmatpush2.bf16.msra.mxu0 0
        %1264 = vmatprep.subr.bf16.mxu0 0
        %1265 = vmatpush2.bf16.msra.mxu0 0
        %1266 = vmatprep.subr.bf16.mxu0 0
        %1267 = vmatpush2.bf16.msra.mxu0 0
        %1268 = vmatprep.subr.bf16.mxu0 0
        %1269 = vmatpush2.bf16.msra.mxu0 0
        %1270 = vmatprep.subr.bf16.mxu0 0
        %1271 = vmatpush2.bf16.msra.mxu0 0
        %1272 = vmatprep.subr.bf16.mxu0 0
        %1273 = vmatpush2.bf16.msra.mxu0 0
        %1274 = vmatprep.subr.bf16.mxu0 0
        %1275 = vmatpush2.bf16.msra.mxu0 0
        %1276 = vmatprep.mubr.bf16.mxu0 0
        %1277 = vmatmul.mubr.bf16.gmra.mxu0 %v1239
        %v1278 = vpop.f32.mrf.mxu0
        %v1279 = vadd.f32 0.0, %v1278
        %v1280 = vpop.f32.mrf.mxu0
        %v1281 = vpop.f32.mrf.mxu0
        %v1282 = vpop.f32.mrf.mxu0
        %1283 = vdwg.mxu0
        %1284 = vrot.lane.b32.xlu0 %v527, 104
        %v1285 = vpop.permute.xlu0 %1284
        %v1287 = vsel %vm532, %v1285, 0
        %1289 = vmatprep.subr.bf16.mxu0 0
        %1290 = vmatpush1.bf16.xpose.msra.mxu0 0
        %1291 = vmatprep.subr.bf16.mxu0 0
        %1292 = vmatpush1.bf16.xpose.msra.mxu0 0
        %1293 = vmatprep.subr.bf16.mxu0 0
        %1294 = vmatpush1.bf16.xpose.msra.mxu0 0
        %1295 = vmatprep.subr.bf16.mxu0 0
        %1296 = vmatpush1.bf16.xpose.msra.mxu0 0
        %1297 = vmatprep.subr.bf16.mxu0 0
        %1298 = vmatpush1.bf16.xpose.msra.mxu0 0
        %1299 = vmatprep.subr.bf16.mxu0 0
        %1300 = vmatpush1.bf16.xpose.msra.mxu0 0
        %1301 = vmatprep.subr.bf16.mxu0 0
        %1302 = vmatpush1.bf16.xpose.msra.mxu0 0
        %1303 = vmatprep.subr.bf16.mxu0 0
        %1304 = vmatpush1.bf16.xpose.msra.mxu0 %v1287
        %1305 = vmatprep.subr.bf16.mxu0 0
        %1306 = vmatpush2.bf16.xpose.msra.mxu0 0
        %1307 = vmatprep.subr.bf16.mxu0 0
        %1308 = vmatpush2.bf16.xpose.msra.mxu0 0
        %1309 = vmatprep.subr.bf16.mxu0 0
        %1310 = vmatpush2.bf16.xpose.msra.mxu0 0
        %1311 = vmatprep.subr.bf16.mxu0 0
        %1312 = vmatpush2.bf16.xpose.msra.mxu0 0
        %1313 = vmatprep.subr.bf16.mxu0 0
        %1314 = vmatpush2.bf16.xpose.msra.mxu0 0
        %1315 = vmatprep.subr.bf16.mxu0 0
        %1316 = vmatpush2.bf16.xpose.msra.mxu0 0
        %1317 = vmatprep.subr.bf16.mxu0 0
        %1318 = vmatpush2.bf16.xpose.msra.mxu0 0
        %1319 = vmatprep.subr.bf16.mxu0 0
        %1320 = vmatpush2.bf16.xpose.msra.mxu0 0
        %1321 = vmatprep.mubr.bf16.mxu0 0
        %1322 = vmatmul.mubr.bf16.gmra.mxu0 %v1179
        %v1323 = vpop.f32.mrf.mxu0
        %v1324 = vadd.f32 0.0, %v1323
        %v1325 = vpop.f32.mrf.mxu0
        %v1326 = vpop.f32.mrf.mxu0
        %v1327 = vpop.f32.mrf.mxu0
        %1328 = vdwg.mxu0
        %v1329 = vsel %vm532, %v1324, -inf
        %1330 = vmax.xlane.f32.xlu0 %v1329
        %v1331 = vpop.xlane.xlu0 %1330
        %v1332 = vsub.f32 %v1324, %v1331
        %v1333 = vmul.f32 %v1332, 1.442695
        %v1334 = vpow.pop %v1333
        %v1335 = vsel %vm532, %v1334, 0.0
        %1336 = vadd.xlane.f32.xlu0 %v1335
        %v1337 = vpop.xlane.xlu0 %1336
        %v1338 = vrcp.pop %v1337
        %v1339 = vmul.f32 %v1334, %v1338
        %v1340 = vpack.c.bf16 %v1339, %v1339
        %1341 = vrot.lane.b32.xlu0 %v527, 72
        %v1342 = vpop.permute.xlu0 %1341
        %v1344 = vsel %vm532, %v1340, 0
        %v1347 = vsel %vm596, %v1342, 0
        %1349 = vmatprep.subr.bf16.mxu0 0
        %1350 = vmatpush1.bf16.msra.mxu0 0
        %1351 = vmatprep.subr.bf16.mxu0 0
        %1352 = vmatpush1.bf16.msra.mxu0 0
        %1353 = vmatprep.subr.bf16.mxu0 0
        %1354 = vmatpush1.bf16.msra.mxu0 0
        %1355 = vmatprep.subr.bf16.mxu0 0
        %1356 = vmatpush1.bf16.msra.mxu0 0
        %1357 = vmatprep.subr.bf16.mxu0 0
        %1358 = vmatpush1.bf16.msra.mxu0 0
        %1359 = vmatprep.subr.bf16.mxu0 0
        %1360 = vmatpush1.bf16.msra.mxu0 0
        %1361 = vmatprep.subr.bf16.mxu0 0
        %1362 = vmatpush1.bf16.msra.mxu0 0
        %1363 = vmatprep.subr.bf16.mxu0 0
        %1364 = vmatpush1.bf16.msra.mxu0 %v1347
        %1365 = vmatprep.subr.bf16.mxu0 0
        %1366 = vmatpush2.bf16.msra.mxu0 0
        %1367 = vmatprep.subr.bf16.mxu0 0
        %1368 = vmatpush2.bf16.msra.mxu0 0
        %1369 = vmatprep.subr.bf16.mxu0 0
        %1370 = vmatpush2.bf16.msra.mxu0 0
        %1371 = vmatprep.subr.bf16.mxu0 0
        %1372 = vmatpush2.bf16.msra.mxu0 0
        %1373 = vmatprep.subr.bf16.mxu0 0
        %1374 = vmatpush2.bf16.msra.mxu0 0
        %1375 = vmatprep.subr.bf16.mxu0 0
        %1376 = vmatpush2.bf16.msra.mxu0 0
        %1377 = vmatprep.subr.bf16.mxu0 0
        %1378 = vmatpush2.bf16.msra.mxu0 0
        %1379 = vmatprep.subr.bf16.mxu0 0
        %1380 = vmatpush2.bf16.msra.mxu0 0
        %1381 = vmatprep.mubr.bf16.mxu0 0
        %1382 = vmatmul.mubr.bf16.gmra.mxu0 %v1344
        %v1383 = vpop.f32.mrf.mxu0
        %v1384 = vadd.f32 0.0, %v1383
        %v1385 = vpop.f32.mrf.mxu0
        %v1386 = vpop.f32.mrf.mxu0
        %v1387 = vpop.f32.mrf.mxu0
        %1388 = vdwg.mxu0
        %1390 = vrot.lane.b32.xlu0 %v849, 8
        %v1391 = vpop.permute.xlu0 %1390
        %1394 = vrot.lane.b32.xlu0 %v1064, 16
        %v1395 = vpop.permute.xlu0 %1394
        %1398 = vrot.lane.b32.xlu0 %v1279, 24
        %v1399 = vpop.permute.xlu0 %1398
        %v1401 = vsel %vm532, %v635, %v1391
        %vm1402 = vcmask 130048
        %v1403 = vsel %vm1402, %v1401, %v1395
        %vm1404 = vcmask 195584
        %v1405 = vsel %vm1404, %v1403, %v1399
        %vm1406 = vcmask 261120
        %1407 = vst.msk [vmem:[#allocation2] sm:$0xff] %vm1406, %v1405
        %v1408 = vpack.c.bf16 %v1405, %v1405
        %1410 = vrot.lane.b32.xlu0 %v954, 8
        %v1411 = vpop.permute.xlu0 %1410
        %1414 = vrot.lane.b32.xlu0 %v1169, 16
        %v1415 = vpop.permute.xlu0 %1414
        %1418 = vrot.lane.b32.xlu0 %v1384, 24
        %v1419 = vpop.permute.xlu0 %1418
        %v1421 = vsel %vm532, %v739, %v1411
        %v1422 = vsel %vm1402, %v1421, %v1415
        %v1423 = vsel %vm1404, %v1422, %v1419
        %v1424 = vpack.c.bf16 %v1423, %v1423
        %v1425 = vld [vmem:[%s3] sm:$0xf]
        %v1426 = vld [vmem:[%s4] sm:$0xf]
        %v1428 = vsel %vm532, %v1426, 0
        %v1431 = vsel %vm596, %v1408, 0
        %1433 = vmatprep.subr.bf16.mxu0 0
        %1434 = vmatpush1.bf16.msra.mxu0 0
        %1435 = vmatprep.subr.bf16.mxu0 0
        %1436 = vmatpush1.bf16.msra.mxu0 0
        %1437 = vmatprep.subr.bf16.mxu0 0
        %1438 = vmatpush1.bf16.msra.mxu0 0
        %1439 = vmatprep.subr.bf16.mxu0 0
        %1440 = vmatpush1.bf16.msra.mxu0 0
        %1441 = vmatprep.subr.bf16.mxu0 0
        %1442 = vmatpush1.bf16.msra.mxu0 0
        %1443 = vmatprep.subr.bf16.mxu0 0
        %1444 = vmatpush1.bf16.msra.mxu0 0
        %1445 = vmatprep.subr.bf16.mxu0 0
        %1446 = vmatpush1.bf16.msra.mxu0 0
        %1447 = vmatprep.subr.bf16.mxu0 0
        %1448 = vmatpush1.bf16.msra.mxu0 %v1431
        %1449 = vmatprep.subr.bf16.mxu0 0
        %1450 = vmatpush2.bf16.msra.mxu0 0
        %1451 = vmatprep.subr.bf16.mxu0 0
        %1452 = vmatpush2.bf16.msra.mxu0 0
        %1453 = vmatprep.subr.bf16.mxu0 0
        %1454 = vmatpush2.bf16.msra.mxu0 0
        %1455 = vmatprep.subr.bf16.mxu0 0
        %1456 = vmatpush2.bf16.msra.mxu0 0
        %1457 = vmatprep.subr.bf16.mxu0 0
        %1458 = vmatpush2.bf16.msra.mxu0 0
        %1459 = vmatprep.subr.bf16.mxu0 0
        %1460 = vmatpush2.bf16.msra.mxu0 0
        %1461 = vmatprep.subr.bf16.mxu0 0
        %1462 = vmatpush2.bf16.msra.mxu0 0
        %1463 = vmatprep.subr.bf16.mxu0 0
        %1464 = vmatpush2.bf16.msra.mxu0 0
        %1465 = vmatprep.mubr.bf16.mxu0 0
        %1466 = vmatmul.mubr.bf16.gmra.mxu0 %v1428
        %v1467 = vpop.f32.mrf.mxu0
        %v1468 = vadd.f32 0.0, %v1467
        %v1469 = vpop.f32.mrf.mxu0
        %v1470 = vpop.f32.mrf.mxu0
        %v1471 = vpop.f32.mrf.mxu0
        %1472 = vdwg.mxu0
        %v1474 = vsel %vm532, %v1425, 0
        %v1477 = vsel %vm596, %v1424, 0
        %1479 = vmatprep.subr.bf16.mxu0 0
        %1480 = vmatpush1.bf16.msra.mxu0 0
        %1481 = vmatprep.subr.bf16.mxu0 0
        %1482 = vmatpush1.bf16.msra.mxu0 0
        %1483 = vmatprep.subr.bf16.mxu0 0
        %1484 = vmatpush1.bf16.msra.mxu0 0
        %1485 = vmatprep.subr.bf16.mxu0 0
        %1486 = vmatpush1.bf16.msra.mxu0 0
        %1487 = vmatprep.subr.bf16.mxu0 0
        %1488 = vmatpush1.bf16.msra.mxu0 0
        %1489 = vmatprep.subr.bf16.mxu0 0
        %1490 = vmatpush1.bf16.msra.mxu0 0
        %1491 = vmatprep.subr.bf16.mxu0 0
        %1492 = vmatpush1.bf16.msra.mxu0 0
        %1493 = vmatprep.subr.bf16.mxu0 0
        %1494 = vmatpush1.bf16.msra.mxu0 %v1477
        %1495 = vmatprep.subr.bf16.mxu0 0
        %1496 = vmatpush2.bf16.msra.mxu0 0
        %1497 = vmatprep.subr.bf16.mxu0 0
        %1498 = vmatpush2.bf16.msra.mxu0 0
        %1499 = vmatprep.subr.bf16.mxu0 0
        %1500 = vmatpush2.bf16.msra.mxu0 0
        %1501 = vmatprep.subr.bf16.mxu0 0
        %1502 = vmatpush2.bf16.msra.mxu0 0
        %1503 = vmatprep.subr.bf16.mxu0 0
        %1504 = vmatpush2.bf16.msra.mxu0 0
        %1505 = vmatprep.subr.bf16.mxu0 0
        %1506 = vmatpush2.bf16.msra.mxu0 0
        %1507 = vmatprep.subr.bf16.mxu0 0
        %1508 = vmatpush2.bf16.msra.mxu0 0
        %1509 = vmatprep.subr.bf16.mxu0 0
        %1510 = vmatpush2.bf16.msra.mxu0 0
        %1511 = vmatprep.mubr.bf16.mxu0 0
        %1512 = vmatmul.mubr.bf16.gmra.mxu0 %v1474
        %v1513 = vpop.f32.mrf.mxu0
        %v1514 = vadd.f32 %v1468, %v1513
        %v1515 = vpop.f32.mrf.mxu0
        %v1516 = vpop.f32.mrf.mxu0
        %v1517 = vpop.f32.mrf.mxu0
        %1518 = vdwg.mxu0
        %v1519 = vld [vmem:[%s5] sm:$0xff]
        %1521 = vset.pattern.permute.xlu0 0
        %1522 = vperm.xlu0 %1521, %v1519
        %v1523 = vpop.permute.xlu0 %1522
        %v1525 = vadd.f32 %v1514, %v1523
        %v1526 = vmul.f32 %v1525, %v1525
        %v1527 = vmul.f32 %v1525, %v1526
        %v1528 = vmul.f32 %v1527, 0.044715
        %v1529 = vadd.f32 %v1525, %v1528
        %v1530 = vmul.f32 %v1529, 0.7978846
        %v1531 = vtanh.pop %v1530
        %v1532 = vadd.f32 %v1531, 1.0
        %v1533 = vmul.f32 %v1532, 0.5
        %v1534 = vmul.f32 %v1525, %v1533
        %v1535 = vpack.c.bf16 %v1534, %v1534
        %v1536 = vld [vmem:[%s6] sm:$0xf]
        %v1537 = vld [vmem:[%s6 + $0x4] sm:$0xf]
        %v1538 = vld [vmem:[%s6 + $0x8] sm:$0xf]
        %v1539 = vld [vmem:[%s6 + $0xc] sm:$0xf]
        %v1540 = vld [vmem:[%s7] sm:$0x1]
        %v1542 = vlaneseq
        %v1543 = vshrl.u32 %v1542, 7
        %v1544 = vsub.s32 0, %v1543
        %v1545 = vrot.slane %v1540, %v1544
        %v1551 = vunpack.c.l.b16 %v1536
        %v1552 = vunpack.c.l.b16 %v1537
        %v1553 = vunpack.c.l.b16 %v1538
        %v1554 = vunpack.c.l.b16 %v1539
        %v1555 = vpack.c.b16 %v1552, %v1551
        %v1556 = vpack.c.b16 %v1554, %v1553
        %v1560 = vsel %vm1406, %v1535, 0
        %1562 = vmatprep.subr.bf16.mxu0 0
        %1563 = vmatpush1.bf16.msra.mxu0 0
        %1564 = vmatprep.subr.bf16.mxu0 0
        %1565 = vmatpush1.bf16.msra.mxu0 0
        %1566 = vmatprep.subr.bf16.mxu0 0
        %1567 = vmatpush1.bf16.msra.mxu0 0
        %1568 = vmatprep.subr.bf16.mxu0 0
        %1569 = vmatpush1.bf16.msra.mxu0 0
        %1570 = vmatprep.subr.bf16.mxu0 0
        %1571 = vmatpush1.bf16.msra.mxu0 0
        %1572 = vmatprep.subr.bf16.mxu0 0
        %1573 = vmatpush1.bf16.msra.mxu0 0
        %1574 = vmatprep.subr.bf16.mxu0 0
        %1575 = vmatpush1.bf16.msra.mxu0 %v1556
        %1576 = vmatprep.subr.bf16.mxu0 0
        %1577 = vmatpush1.bf16.msra.mxu0 %v1555
        %1578 = vmatprep.subr.bf16.mxu0 0
        %1579 = vmatpush2.bf16.msra.mxu0 0
        %1580 = vmatprep.subr.bf16.mxu0 0
        %1581 = vmatpush2.bf16.msra.mxu0 0
        %1582 = vmatprep.subr.bf16.mxu0 0
        %1583 = vmatpush2.bf16.msra.mxu0 0
        %1584 = vmatprep.subr.bf16.mxu0 0
        %1585 = vmatpush2.bf16.msra.mxu0 0
        %1586 = vmatprep.subr.bf16.mxu0 0
        %1587 = vmatpush2.bf16.msra.mxu0 0
        %1588 = vmatprep.subr.bf16.mxu0 0
        %1589 = vmatpush2.bf16.msra.mxu0 0
        %1590 = vmatprep.subr.bf16.mxu0 0
        %1591 = vmatpush2.bf16.msra.mxu0 0
        %1592 = vmatprep.subr.bf16.mxu0 0
        %1593 = vmatpush2.bf16.msra.mxu0 0
        %1594 = vmatprep.mubr.bf16.mxu0 0
        %1595 = vmatmul.mubr.bf16.gmra.mxu0 %v1560
        %v1596 = vpop.f32.mrf.mxu0
        %v1597 = vadd.f32 %v1545, %v1596
        %v1598 = vpop.f32.mrf.mxu0
        %v1599 = vpop.f32.mrf.mxu0
        %v1600 = vpop.f32.mrf.mxu0
        %1601 = vdwg.mxu0
        %v1602 = vmul.f32 %v1597, %v1597
        %v1603 = vmul.f32 %v1597, %v1602
        %v1604 = vmul.f32 %v1603, 0.044715
        %v1605 = vadd.f32 %v1597, %v1604
        %v1606 = vmul.f32 %v1605, 0.7978846
        %v1607 = vtanh.pop %v1606
        %v1608 = vadd.f32 %v1607, 1.0
        %v1609 = vmul.f32 %v1608, 0.5
        %v1610 = vmul.f32 %v1597, %v1609
        %v1611 = vld [vmem:[%s8] sm:$0xf]
        %v1612 = vpack.c.bf16 %v1610, %v1610
        %v1613 = vld [vmem:[%s9] sm:$0xff]
        %1615 = vset.pattern.permute.xlu0 0
        %1616 = vperm.xlu0 %1615, %v1613
        %v1617 = vpop.permute.xlu0 %1616
        %v1620 = vsel %vm532, %v1611, 0
        %v1623 = vsel %vm596, %v1612, 0
        %1625 = vmatprep.subr.bf16.mxu0 0
        %1626 = vmatpush1.bf16.msra.mxu0 0
        %1627 = vmatprep.subr.bf16.mxu0 0
        %1628 = vmatpush1.bf16.msra.mxu0 0
        %1629 = vmatprep.subr.bf16.mxu0 0
        %1630 = vmatpush1.bf16.msra.mxu0 0
        %1631 = vmatprep.subr.bf16.mxu0 0
        %1632 = vmatpush1.bf16.msra.mxu0 0
        %1633 = vmatprep.subr.bf16.mxu0 0
        %1634 = vmatpush1.bf16.msra.mxu0 0
        %1635 = vmatprep.subr.bf16.mxu0 0
        %1636 = vmatpush1.bf16.msra.mxu0 0
        %1637 = vmatprep.subr.bf16.mxu0 0
        %1638 = vmatpush1.bf16.msra.mxu0 0
        %1639 = vmatprep.subr.bf16.mxu0 0
        %1640 = vmatpush1.bf16.msra.mxu0 %v1623
        %1641 = vmatprep.subr.bf16.mxu0 0
        %1642 = vmatpush2.bf16.msra.mxu0 0
        %1643 = vmatprep.subr.bf16.mxu0 0
        %1644 = vmatpush2.bf16.msra.mxu0 0
        %1645 = vmatprep.subr.bf16.mxu0 0
        %1646 = vmatpush2.bf16.msra.mxu0 0
        %1647 = vmatprep.subr.bf16.mxu0 0
        %1648 = vmatpush2.bf16.msra.mxu0 0
        %1649 = vmatprep.subr.bf16.mxu0 0
        %1650 = vmatpush2.bf16.msra.mxu0 0
        %1651 = vmatprep.subr.bf16.mxu0 0
        %1652 = vmatpush2.bf16.msra.mxu0 0
        %1653 = vmatprep.subr.bf16.mxu0 0
        %1654 = vmatpush2.bf16.msra.mxu0 0
        %1655 = vmatprep.subr.bf16.mxu0 0
        %1656 = vmatpush2.bf16.msra.mxu0 0
        %1657 = vmatprep.mubr.bf16.mxu0 0
        %1658 = vmatmul.mubr.bf16.gmra.mxu0 %v1620
        %v1659 = vpop.f32.mrf.mxu0
        %v1660 = vadd.f32 %v1617, %v1659
        %v1661 = vpop.f32.mrf.mxu0
        %v1662 = vpop.f32.mrf.mxu0
        %v1663 = vpop.f32.mrf.mxu0
        %1664 = vdwg.mxu0
        %v1665 = vmul.f32 %v1660, %v1660
        %v1666 = vmul.f32 %v1660, %v1665
        %v1667 = vmul.f32 %v1666, 0.044715
        %v1668 = vadd.f32 %v1660, %v1667
        %v1669 = vmul.f32 %v1668, 0.7978846
        %v1670 = vtanh.pop %v1669
        %v1671 = vadd.f32 %v1670, 1.0
        %v1672 = vmul.f32 %v1671, 0.5
        %v1673 = vmul.f32 %v1660, %v1672
        %v1674 = vpack.c.bf16 %v1673, %v1673
        %v1675 = vld [vmem:[%s10] sm:$0xf]
        %v1676 = vld [vmem:[%s10 + $0x4] sm:$0xf]
        %v1677 = vld [vmem:[%s10 + $0x8] sm:$0xf]
        %v1678 = vld [vmem:[%s10 + $0xc] sm:$0xf]
        %v1679 = vld [vmem:[#allocation3] sm:$0x1]
        %v1681 = vlaneseq
        %v1682 = vshrl.u32 %v1681, 7
        %v1683 = vsub.s32 0, %v1682
        %v1684 = vrot.slane %v1679, %v1683
        %v1690 = vunpack.c.l.b16 %v1675
        %v1691 = vunpack.c.l.b16 %v1676
        %v1692 = vunpack.c.l.b16 %v1677
        %v1693 = vunpack.c.l.b16 %v1678
        %v1694 = vpack.c.b16 %v1691, %v1690
        %v1695 = vpack.c.b16 %v1693, %v1692
        %v1699 = vsel %vm1406, %v1674, 0
        %1701 = vmatprep.subr.bf16.mxu0 0
        %1702 = vmatpush1.bf16.msra.mxu0 0
        %1703 = vmatprep.subr.bf16.mxu0 0
        %1704 = vmatpush1.bf16.msra.mxu0 0
        %1705 = vmatprep.subr.bf16.mxu0 0
        %1706 = vmatpush1.bf16.msra.mxu0 0
        %1707 = vmatprep.subr.bf16.mxu0 0
        %1708 = vmatpush1.bf16.msra.mxu0 0
        %1709 = vmatprep.subr.bf16.mxu0 0
        %1710 = vmatpush1.bf16.msra.mxu0 0
        %1711 = vmatprep.subr.bf16.mxu0 0
        %1712 = vmatpush1.bf16.msra.mxu0 0
        %1713 = vmatprep.subr.bf16.mxu0 0
        %1714 = vmatpush1.bf16.msra.mxu0 %v1695
        %1715 = vmatprep.subr.bf16.mxu0 0
        %1716 = vmatpush1.bf16.msra.mxu0 %v1694
        %1717 = vmatprep.subr.bf16.mxu0 0
        %1718 = vmatpush2.bf16.msra.mxu0 0
        %1719 = vmatprep.subr.bf16.mxu0 0
        %1720 = vmatpush2.bf16.msra.mxu0 0
        %1721 = vmatprep.subr.bf16.mxu0 0
        %1722 = vmatpush2.bf16.msra.mxu0 0
        %1723 = vmatprep.subr.bf16.mxu0 0
        %1724 = vmatpush2.bf16.msra.mxu0 0
        %1725 = vmatprep.subr.bf16.mxu0 0
        %1726 = vmatpush2.bf16.msra.mxu0 0
        %1727 = vmatprep.subr.bf16.mxu0 0
        %1728 = vmatpush2.bf16.msra.mxu0 0
        %1729 = vmatprep.subr.bf16.mxu0 0
        %1730 = vmatpush2.bf16.msra.mxu0 0
        %1731 = vmatprep.subr.bf16.mxu0 0
        %1732 = vmatpush2.bf16.msra.mxu0 0
        %1733 = vmatprep.mubr.bf16.mxu0 0
        %1734 = vmatmul.mubr.bf16.gmra.mxu0 %v1699
        %v1735 = vpop.f32.mrf.mxu0
        %v1736 = vadd.f32 %v1684, %v1735
        %v1737 = vpop.f32.mrf.mxu0
        %v1738 = vpop.f32.mrf.mxu0
        %v1739 = vpop.f32.mrf.mxu0
        %1740 = vdwg.mxu0
        %v1741 = vld [vmem:[#allocation2] sm:$0xff]
        %v1742 = vadd.f32 %v1741, %v1736
        %v1743 = vpack.c.bf16 %v1742, %v1742
        %v1744 = vld [vmem:[%s12] sm:$0xf]
        %v1745 = vld [vmem:[%s12 + $0x4] sm:$0xf]
        %v1746 = vld [vmem:[%s12 + $0x8] sm:$0xf]
        %v1747 = vld [vmem:[%s12 + $0xc] sm:$0xf]
        %v1748 = vld [vmem:[#allocation6] sm:$0x1]
        %v1750 = vlaneseq
        %v1751 = vshrl.u32 %v1750, 7
        %v1752 = vsub.s32 0, %v1751
        %v1753 = vrot.slane %v1748, %v1752
        %v1759 = vunpack.c.l.b16 %v1744
        %v1760 = vunpack.c.l.b16 %v1745
        %v1761 = vunpack.c.l.b16 %v1746
        %v1762 = vunpack.c.l.b16 %v1747
        %v1763 = vpack.c.b16 %v1760, %v1759
        %v1764 = vpack.c.b16 %v1762, %v1761
        %v1768 = vsel %vm1406, %v1743, 0
        %1770 = vmatprep.subr.bf16.mxu0 0
        %1771 = vmatpush1.bf16.msra.mxu0 0
        %1772 = vmatprep.subr.bf16.mxu0 0
        %1773 = vmatpush1.bf16.msra.mxu0 0
        %1774 = vmatprep.subr.bf16.mxu0 0
        %1775 = vmatpush1.bf16.msra.mxu0 0
        %1776 = vmatprep.subr.bf16.mxu0 0
        %1777 = vmatpush1.bf16.msra.mxu0 0
        %1778 = vmatprep.subr.bf16.mxu0 0
        %1779 = vmatpush1.bf16.msra.mxu0 0
        %1780 = vmatprep.subr.bf16.mxu0 0
        %1781 = vmatpush1.bf16.msra.mxu0 0
        %1782 = vmatprep.subr.bf16.mxu0 0
        %1783 = vmatpush1.bf16.msra.mxu0 %v1764
        %1784 = vmatprep.subr.bf16.mxu0 0
        %1785 = vmatpush1.bf16.msra.mxu0 %v1763
        %1786 = vmatprep.subr.bf16.mxu0 0
        %1787 = vmatpush2.bf16.msra.mxu0 0
        %1788 = vmatprep.subr.bf16.mxu0 0
        %1789 = vmatpush2.bf16.msra.mxu0 0
        %1790 = vmatprep.subr.bf16.mxu0 0
        %1791 = vmatpush2.bf16.msra.mxu0 0
        %1792 = vmatprep.subr.bf16.mxu0 0
        %1793 = vmatpush2.bf16.msra.mxu0 0
        %1794 = vmatprep.subr.bf16.mxu0 0
        %1795 = vmatpush2.bf16.msra.mxu0 0
        %1796 = vmatprep.subr.bf16.mxu0 0
        %1797 = vmatpush2.bf16.msra.mxu0 0
        %1798 = vmatprep.subr.bf16.mxu0 0
        %1799 = vmatpush2.bf16.msra.mxu0 0
        %1800 = vmatprep.subr.bf16.mxu0 0
        %1801 = vmatpush2.bf16.msra.mxu0 0
        %1802 = vmatprep.mubr.bf16.mxu0 0
        %1803 = vmatmul.mubr.bf16.gmra.mxu0 %v1768
        %v1804 = vpop.f32.mrf.mxu0
        %v1805 = vadd.f32 %v1753, %v1804
        %v1806 = vpop.f32.mrf.mxu0
        %v1807 = vpop.f32.mrf.mxu0
        %v1808 = vpop.f32.mrf.mxu0
        %1809 = vdwg.mxu0
        %1810 = vst.msk [vmem:[%s510] sm:$0xff] %vm1406, %v1805
        %s1811 = sand.u32 %s347, 1
        %s1812 = scalar_lea.sflag [#allocation5], %s1811
        %s1813 = sand.u32 %s347, 1
        %s1814 = smul.addr %s1813, 8
        %s1815 = scalar_lea.vmem [#allocation8], %s1814
        // Predicated region
        $region85: #{te_aug_adapter_clip_attention.5} parent=75 // pred_check
          %p1816 = pneg %p357
        $region86: #{te_aug_adapter_clip_attention.5} parent=75 // pred_check_branch
          %1818 = sbr.rel (%p1816) target = $region88
        $region87: #{te_aug_adapter_clip_attention.5} parent=75 // pred_region
          %s1820 = ssub.s32 128, 128
          %1821 = vsyncadd %s1812, %s1820
          %s1822 = smul.addr %s30, 128
          %s1823 = scalar_lea.hbm %s14, %s1822
          %s1825 = sshll.u32 %s1815, 4
          %s1826 = int_to_ptr.vmem [resolvable:$true] %s1825
          %1828 = dma.vmem_to_hbm [thread:$0]  %s1826, 128, %s1823, %s1812
        $region88: #{te_aug_adapter_clip_attention.5} parent=75 // pred_fallthru
          _
      $region76: #{te_aug_adapter_clip_attention.5} parent=5 // pred_fallthru
        _
      %p1829 = scmp.le.s32.totalorder 2, %s25
      // Predicated region
      $region89: #{te_aug_adapter_clip_attention.5} parent=5 // pred_check
        %p1830 = pneg %p1829
      $region90: #{te_aug_adapter_clip_attention.5} parent=5 // pred_check_branch
        %1832 = sbr.rel (%p1830) target = $region92
      $region91: #{te_aug_adapter_clip_attention.5} parent=5 // pred_region
        %s1833 = ssub.s32 %s25, 2
        // Predicated region
        $region93: #{te_aug_adapter_clip_attention.5} parent=91 // pred_check
          %p1834 = pneg %p363
        $region94: #{te_aug_adapter_clip_attention.5} parent=91 // pred_check_branch
          %1836 = sbr.rel (%p1834) target = $region96
        $region95: #{te_aug_adapter_clip_attention.5} parent=91 // pred_region
          %s1837 = sand.u32 %s348, 1
          %s1838 = scalar_lea.sflag [#allocation5], %s1837
          %s1839 = sand.u32 %s348, 1
          %s1840 = smul.addr %s1839, 8
          %s1841 = scalar_lea.vmem [#allocation8], %s1840
          %1842 = dma.done %s1838, 128
        $region96: #{te_aug_adapter_clip_attention.5} parent=91 // pred_fallthru
          _
      $region92: #{te_aug_adapter_clip_attention.5} parent=5 // pred_fallthru
        _
    $region6: #{te_aug_adapter_clip_attention.5} parent=1 // loop_footer
      %s29 = sadd.s32 1, %s25
    $region7: #{te_aug_adapter_clip_attention.5} parent=1 // loop_footer_branch
      %24 = sbr.rel target = $region3
    $region8: #{te_aug_adapter_clip_attention.5} parent=1 // loop_exit
      _
    %1843 = vsyncpa [#allocation4], 1
    %s1844 = scalar_lea.sflag [#allocation4], 1
    %1845 = vsyncpa %s1844, 1
    %1846 = vsyncpa [#allocation7], 1
    %1847 = vsyncpa [#allocation5], 1
    %s1848 = scalar_lea.sflag [#allocation5], 1
    %1849 = vsyncpa %s1848, 1

</llo_original>
